<compile_context>
chip_gen: v7x
topology: tpu7x:2x2x1
jax: 0.10.0
libtpu: 0.0.40
codegen_flags: <defaults>
</compile_context>

<pallas_src>
import functools
import jax
import jax.numpy as jnp
from jax.experimental import pallas as pl
from jax.experimental.pallas import tpu as pltpu

# ----- model dimensions (small, consistent with the module's forward) -------
B, S, T = 2, 8, 8            # batch, src length, tgt length
E, H, A, V = 16, 32, 16, 32  # embed dim, GRU hidden, attention hidden, vocab
PAD_IDX = 0
NEG_INF = -1e9
V_PAD = 128                  # lane-padded vocab width for the output store
H3 = 3 * H

# ----- static row offsets inside the packed weight slab (see _pack_weight_slab)
R_HH_E = 0            # rows 0:32   lanes 0:96  = W_hh_e packed [r|z|n]; 96:112 = Wk
R_CTX_D = H           # rows 32:64  lanes 0:96  = W_ctx_d packed (context block of W_ih_d)
R_HDEC = 2 * H        # rows 64:96  lanes 0:96  = W_hh_d packed; 96:112 = Wq
R_OUT = 3 * H         # rows 96:128 lanes 0:128 = W_out zero-padded to V_PAD
R_IH_E = 4 * H        # rows 128:144 lanes 0:96 = W_ih_e packed
R_EMB_D = 4 * H + E   # rows 144:160 lanes 0:96 = embedding block of W_ih_d
R_B_ENC = 4 * H + 2 * E      # row 160: lanes 0:96 = b_ih_e + [b_hh_r,b_hh_z,0]; 96:128 = b_hh_e_n
R_B_DEC = R_B_ENC + 1        # row 161: same for the decoder
R_B_OUT = R_B_ENC + 2        # row 162: b_out zero-padded to V_PAD
R_V = R_B_ENC + 3            # row 163: lanes 0:16 = attention v
SLAB_ROWS = 168              # padded to a multiple of 8 sublanes


def seq2seq_kernel(emb_ref, maskb_ref, w_ref, out_ref):
    f32 = jnp.float32

    # ---- batched time-invariant input-gate matmuls (one per sequence) ------
    # b_ih (all gates) and b_hh (r,z gates) are pre-folded into the bias rows.
    enc_emb = emb_ref[:, 0:E]                                   # (S*B, E)
    dec_emb = emb_ref[:, E:2 * E]                               # (T*B, E)
    w_ih_e = w_ref[R_IH_E:R_IH_E + E, 0:H3]                     # (E, 3H)
    w_emb_d = w_ref[R_EMB_D:R_EMB_D + E, 0:H3]                  # (E, 3H)
    b_enc = w_ref[R_B_ENC:R_B_ENC + 1, 0:H3]                    # (1, 3H)
    b_dec = w_ref[R_B_DEC:R_B_DEC + 1, 0:H3]                    # (1, 3H)
    enc_gi = jnp.dot(enc_emb, w_ih_e, preferred_element_type=f32) + b_enc   # (S*B, 3H)
    dec_gi = jnp.dot(dec_emb, w_emb_d, preferred_element_type=f32) + b_dec  # (T*B, 3H)

    # ---- encoder GRU: ONE packed (B,H)@(H,3H) matmul per step --------------
    w_hh_e = w_ref[R_HH_E:R_HH_E + H, 0:H3]                     # (H, 3H)
    b_hh_e_n = w_ref[R_B_ENC:R_B_ENC + 1, H3:H3 + H]            # (1, H)
    h = jnp.zeros((B, H), f32)
    enc_rows = [[] for _ in range(B)]                           # per-batch (1,H) hiddens
    for t in range(S):                                          # fully unrolled
        gi = enc_gi[t * B:(t + 1) * B, :]                       # (B, 3H)
        gh = jnp.dot(h, w_hh_e, preferred_element_type=f32)     # (B, 3H) packed [r|z|n]
        r = jax.nn.sigmoid(gi[:, 0:H] + gh[:, 0:H])
        z = jax.nn.sigmoid(gi[:, H:2 * H] + gh[:, H:2 * H])
        n = jnp.tanh(gi[:, 2 * H:] + r * (gh[:, 2 * H:] + b_hh_e_n))
        h = (1.0 - z) * n + z * h
        for b in range(B):
            enc_rows[b].append(h[b:b + 1, :])

    # ---- attention precompute (query independent, hoisted, lane dense) -----
    wk = w_ref[R_HH_E:R_HH_E + H, H3:H3 + A]                    # (H, A)
    v_att = w_ref[R_V:R_V + 1, 0:A]                             # (1, A)
    enc_out = [jnp.concatenate(enc_rows[b], axis=0) for b in range(B)]      # B x (S, H)
    keys = [jnp.dot(enc_out[b], wk, preferred_element_type=f32)
            for b in range(B)]                                  # B x (S, A)
    mbias = [maskb_ref[:, b:b + 1] for b in range(B)]           # B x (S, 1), NEG_INF*mask

    # ---- attention decoder GRU (init state = final encoder hidden) ---------
    w_hdec = w_ref[R_HDEC:R_HDEC + H, 0:H3 + A]                 # (H, 3H+A) = [W_hh_d | Wq]
    w_ctx_d = w_ref[R_CTX_D:R_CTX_D + H, 0:H3]                  # (H, 3H)
    b_hh_d_n = w_ref[R_B_DEC:R_B_DEC + 1, H3:H3 + H]            # (1, H)
    dec_hs = []
    for t in range(T):                                          # fully unrolled
        # one packed matmul gives all h-dependent terms: [gh_r|gh_z|gh_n|q]
        hp = jnp.dot(h, w_hdec, preferred_element_type=f32)     # (B, 3H+A)
        q = hp[:, H3:H3 + A]                                    # (B, A)

        # additive attention, per batch element (dense (S,A)/(S,H) vregs)
        ctx_rows = []
        for b in range(B):
            feat = jnp.tanh(keys[b] + q[b:b + 1, :])            # (S, A)
            sc = jnp.sum(feat * v_att, axis=-1, keepdims=True) + mbias[b]   # (S, 1)
            m = jnp.max(sc, axis=0, keepdims=True)
            e = jnp.exp(sc - m)
            alpha = e / jnp.sum(e, axis=0, keepdims=True)       # (S, 1), exact divide
            ctx_rows.append(jnp.sum(alpha * enc_out[b], axis=0, keepdims=True))  # (1, H)
        context = jnp.concatenate(ctx_rows, axis=0)             # (B, H)

        # packed GRU step: context matmul + precomputed embedding gates
        gc = jnp.dot(context, w_ctx_d, preferred_element_type=f32)   # (B, 3H)
        gi = dec_gi[t * B:(t + 1) * B, :]                       # (B, 3H)
        r = jax.nn.sigmoid(gi[:, 0:H] + gc[:, 0:H] + hp[:, 0:H])
        z = jax.nn.sigmoid(gi[:, H:2 * H] + gc[:, H:2 * H] + hp[:, H:2 * H])
        n = jnp.tanh(gi[:, 2 * H:] + gc[:, 2 * H:]
                     + r * (hp[:, 2 * H:H3] + b_hh_d_n))
        h = (1.0 - z) * n + z * h
        dec_hs.append(h)

    # ---- deferred, lane-padded vocab projection: one matmul, one store -----
    w_out = w_ref[R_OUT:R_OUT + H, :]                           # (H, 128)
    b_out = w_ref[R_B_OUT:R_B_OUT + 1, :]                       # (1, 128)
    dec_all = jnp.concatenate(dec_hs, axis=0)                   # (T*B, H)
    out_ref[...] = jnp.dot(dec_all, w_out, preferred_element_type=f32) + b_out


def _pack_weight_slab(params):
    """Pack every weight/bias into one lane-dense (168, 128) f32 slab."""
    f32 = jnp.float32
    zp = lambda r, c: jnp.zeros((r, c), f32)
    w_ih_d = params["w_ih_d"]            # rows [:E] multiply the embedding, [E:] the context

    blk_hh_e = jnp.concatenate([params["w_hh_e"], params["wk"], zp(H, 128 - H3 - A)], axis=1)
    blk_ctx_d = jnp.concatenate([w_ih_d[E:], zp(H, 128 - H3)], axis=1)
    blk_hdec = jnp.concatenate([params["w_hh_d"], params["wq"], zp(H, 128 - H3 - A)], axis=1)
    blk_out = jnp.concatenate([params["w_out"], zp(H, V_PAD - V)], axis=1)
    blk_ih_e = jnp.concatenate([params["w_ih_e"], zp(E, 128 - H3)], axis=1)
    blk_emb_d = jnp.concatenate([w_ih_d[:E], zp(E, 128 - H3)], axis=1)

    # fold b_ih (all gates) + b_hh (r,z gates) into the precompute bias;
    # b_hh of the n gate stays separate (it sits inside the r*(.) term).
    b_enc = params["b_ih_e"] + jnp.concatenate([params["b_hh_e"][:, :2 * H], zp(1, H)], axis=1)
    b_dec = params["b_ih_d"] + jnp.concatenate([params["b_hh_d"][:, :2 * H], zp(1, H)], axis=1)
    row_benc = jnp.concatenate([b_enc, params["b_hh_e"][:, 2 * H:]], axis=1)     # (1,128)
    row_bdec = jnp.concatenate([b_dec, params["b_hh_d"][:, 2 * H:]], axis=1)     # (1,128)
    row_bout = jnp.concatenate([params["b_out"], zp(1, V_PAD - V)], axis=1)      # (1,128)
    row_v = jnp.concatenate([params["v"], zp(1, 128 - A)], axis=1)               # (1,128)

    return jnp.concatenate(
        [blk_hh_e, blk_ctx_d, blk_hdec, blk_out, blk_ih_e, blk_emb_d,
         row_benc, row_bdec, row_bout, row_v, zp(SLAB_ROWS - (R_V + 1), 128)],
        axis=0)                                                                  # (168, 128)


def seq2seq_forward(enc_X, dec_X, params):
    """enc_X, dec_X: int32 token ids, shapes (B, S) / (B, T). Returns (B, T, V)."""
    f32 = jnp.float32
    # Embedding gather + flatten to time-major 2-D done wrapper-side (free XLA glue).
    enc_emb = params["enc_embed"][enc_X].astype(f32)                   # (B, S, E)
    dec_emb = params["dec_embed"][dec_X].astype(f32)                   # (B, T, E)
    enc_flat = jnp.transpose(enc_emb, (1, 0, 2)).reshape(S * B, E)
    dec_flat = jnp.transpose(dec_emb, (1, 0, 2)).reshape(T * B, E)
    emb_slab = jnp.concatenate([enc_flat, dec_flat], axis=1)           # (S*B, 2E)  (S == T)
    mask_bias = NEG_INF * jnp.transpose(enc_X == PAD_IDX).astype(f32)  # (S, B)
    w_slab = _pack_weight_slab(params)                                 # (168, 128)

    out = pl.pallas_call(
        seq2seq_kernel,
        out_shape=jax.ShapeDtypeStruct((T * B, V_PAD), f32),
        in_specs=[pl.BlockSpec(memory_space=pltpu.MemorySpace.VMEM) for _ in range(3)],
        out_specs=pl.BlockSpec(memory_space=pltpu.MemorySpace.VMEM),
    )(emb_slab, mask_bias, w_slab)

    return jnp.transpose(out[:, :V].reshape(T, B, V), (1, 0, 2))       # (B, T, V)


def seq2seq_reference(enc_X, dec_X, params):
    """Pure-JAX reference with the straightforward (unfused) math."""
    f32 = jnp.float32
    enc_emb = params["enc_embed"][enc_X].astype(f32)                   # (B, S, E)
    dec_emb = params["dec_embed"][dec_X].astype(f32)
    mask = (enc_X == PAD_IDX).astype(f32)                              # (B, S)

    def gru_step(h, x, w_ih, w_hh, b_ih, b_hh):
        gi = x @ w_ih + b_ih
        gh = h @ w_hh + b_hh
        r = jax.nn.sigmoid(gi[:, :H] + gh[:, :H])
        z = jax.nn.sigmoid(gi[:, H:2 * H] + gh[:, H:2 * H])
        n = jnp.tanh(gi[:, 2 * H:] + r * gh[:, 2 * H:])
        return (1.0 - z) * n + z * h

    h = jnp.zeros((B, H), f32)
    enc_outs = []
    for t in range(S):
        h = gru_step(h, enc_emb[:, t], params["w_ih_e"], params["w_hh_e"],
                     params["b_ih_e"], params["b_hh_e"])
        enc_outs.append(h)
    enc_outs = jnp.stack(enc_outs, axis=1)                             # (B, S, H)
    keys = enc_outs @ params["wk"]                                     # (B, S, A)

    logits = []
    for t in range(T):
        q = h @ params["wq"]                                           # (B, A)
        feat = jnp.tanh(keys + q[:, None, :])                          # (B, S, A)
        scores = jnp.sum(feat * params["v"], axis=-1) + NEG_INF * mask # (B, S)
        alpha = jax.nn.softmax(scores, axis=-1)
        context = jnp.einsum("bs,bsh->bh", alpha, enc_outs)            # (B, H)
        x = jnp.concatenate([dec_emb[:, t], context], axis=-1)         # (B, E+H)
        h = gru_step(h, x, params["w_ih_d"], params["w_hh_d"],
                     params["b_ih_d"], params["b_hh_d"])
        logits.append(h @ params["w_out"] + params["b_out"])
    return jnp.stack(logits, axis=1)                                   # (B, T, V)


def init_params(key):
    ks = jax.random.split(key, 15)

    def u(k, shape, scale=0.1):
        return jax.random.uniform(k, shape, jnp.float32, -1.0, 1.0) * scale

    return dict(
        enc_embed=u(ks[0], (V, E), 1.0),
        dec_embed=u(ks[1], (V, E), 1.0),
        # encoder GRU (input dim E); gate order r, z, n along the 3H axis
        w_ih_e=u(ks[2], (E, 3 * H)), w_hh_e=u(ks[3], (H, 3 * H)),
        b_ih_e=u(ks[4], (1, 3 * H)), b_hh_e=u(ks[5], (1, 3 * H)),
        # additive attention
        wq=u(ks[6], (H, A)), wk=u(ks[7], (H, A)), v=u(ks[8], (1, A)),
        # decoder GRU (input dim E + H: [embedding ; attention context])
        w_ih_d=u(ks[9], (E + H, 3 * H)), w_hh_d=u(ks[10], (H, 3 * H)),
        b_ih_d=u(ks[11], (1, 3 * H)), b_hh_d=u(ks[12], (1, 3 * H)),
        # output projection to vocab
        w_out=u(ks[13], (H, V)), b_out=u(ks[14], (1, V)),
    )


if __name__ == "__main__":
    key = jax.random.PRNGKey(0)
    pkey, ekey, dkey = jax.random.split(key, 3)
    params = init_params(pkey)

    enc_X = jax.random.randint(ekey, (B, S), 1, V, dtype=jnp.int32)
    dec_X = jax.random.randint(dkey, (B, T), 1, V, dtype=jnp.int32)
    # Real padding in the source batch so the attention mask is exercised.
    enc_X = enc_X.at[1, S - 2:].set(PAD_IDX)

    fwd = jax.jit(functools.partial(seq2seq_forward, params=params))
    out = fwd(enc_X, dec_X)
    jax.block_until_ready(out)

    ref = jax.jit(functools.partial(seq2seq_reference, params=params))(enc_X, dec_X)
    jax.block_until_ready(ref)

    assert out.shape == (B, T, V) and out.dtype == jnp.float32
    assert bool(jnp.all(jnp.isfinite(out)))
    max_err = float(jnp.max(jnp.abs(out - ref)))
    assert bool(jnp.allclose(out, ref, atol=1e-3, rtol=1e-3)), max_err
    print("KERNEL_OK")
</pallas_src>

<mosaic_0001>
module attributes {stable_mosaic.version = 11 : i64} {
  func.func @seq2seq_kernel(%arg0: memref<16x32xf32, #tpu.memory_space<vmem>>, %arg1: memref<8x2xf32, #tpu.memory_space<vmem>>, %arg2: memref<168x128xf32, #tpu.memory_space<vmem>>, %arg3: memref<16x128xf32, #tpu.memory_space<vmem>>) attributes {dimension_semantics = [], scalar_prefetch = 0 : i64, scratch_operands = 0 : i64, tpu.core_type = #tpu.core_type<tc>} {
    %c0 = arith.constant 0 : index
    %c0_0 = arith.constant 0 : index
    %0 = vector.load %arg0[%c0, %c0_0] : memref<16x32xf32, #tpu.memory_space<vmem>>, vector<16x16xf32>
    %c0_1 = arith.constant 0 : index
    %c16 = arith.constant 16 : index
    %1 = vector.load %arg0[%c0_1, %c16] : memref<16x32xf32, #tpu.memory_space<vmem>>, vector<16x16xf32>
    %c128 = arith.constant 128 : index
    %c0_2 = arith.constant 0 : index
    %2 = vector.load %arg2[%c128, %c0_2] : memref<168x128xf32, #tpu.memory_space<vmem>>, vector<16x96xf32>
    %c144 = arith.constant 144 : index
    %c0_3 = arith.constant 0 : index
    %3 = vector.load %arg2[%c144, %c0_3] : memref<168x128xf32, #tpu.memory_space<vmem>>, vector<16x96xf32>
    %c160 = arith.constant 160 : index
    %c0_4 = arith.constant 0 : index
    %4 = vector.load %arg2[%c160, %c0_4] : memref<168x128xf32, #tpu.memory_space<vmem>>, vector<1x96xf32>
    %c161 = arith.constant 161 : index
    %c0_5 = arith.constant 0 : index
    %5 = vector.load %arg2[%c161, %c0_5] : memref<168x128xf32, #tpu.memory_space<vmem>>, vector<1x96xf32>
    %cst = arith.constant dense<0.000000e+00> : vector<16x96xf32>
    %6 = tpu.matmul %0, %2, %cst {dimension_numbers = #tpu.dot_dimension_numbers<[1], [0], [0], [1], [0, 0, 1, 1], [], []>} : vector<16x16xf32>, vector<16x96xf32>, vector<16x96xf32> -> vector<16x96xf32>
    %7 = vector.broadcast %4 : vector<1x96xf32> to vector<16x96xf32>
    %8 = arith.addf %6, %7 : vector<16x96xf32>
    %cst_6 = arith.constant dense<0.000000e+00> : vector<16x96xf32>
    %9 = tpu.matmul %1, %3, %cst_6 {dimension_numbers = #tpu.dot_dimension_numbers<[1], [0], [0], [1], [0, 0, 1, 1], [], []>} : vector<16x16xf32>, vector<16x96xf32>, vector<16x96xf32> -> vector<16x96xf32>
    %10 = vector.broadcast %5 : vector<1x96xf32> to vector<16x96xf32>
    %11 = arith.addf %9, %10 : vector<16x96xf32>
    %c0_7 = arith.constant 0 : index
    %c0_8 = arith.constant 0 : index
    %12 = vector.load %arg2[%c0_7, %c0_8] : memref<168x128xf32, #tpu.memory_space<vmem>>, vector<32x96xf32>
    %c160_9 = arith.constant 160 : index
    %c96 = arith.constant 96 : index
    %13 = vector.load %arg2[%c160_9, %c96] : memref<168x128xf32, #tpu.memory_space<vmem>>, vector<1x32xf32>
    %cst_10 = arith.constant 0.000000e+00 : f32
    %14 = vector.broadcast %cst_10 : f32 to vector<2x32xf32>
    %15 = vector.extract_strided_slice %8 {offsets = [0, 0], sizes = [2, 96], strides = [1, 1]} : vector<16x96xf32> to vector<2x96xf32>
    %cst_11 = arith.constant dense<0.000000e+00> : vector<2x96xf32>
    %16 = tpu.matmul %14, %12, %cst_11 {dimension_numbers = #tpu.dot_dimension_numbers<[1], [0], [0], [1], [0, 0, 1, 1], [], []>} : vector<2x32xf32>, vector<32x96xf32>, vector<2x96xf32> -> vector<2x96xf32>
    %17 = vector.extract_strided_slice %15 {offsets = [0, 0], sizes = [2, 32], strides = [1, 1]} : vector<2x96xf32> to vector<2x32xf32>
    %18 = vector.extract_strided_slice %16 {offsets = [0, 0], sizes = [2, 32], strides = [1, 1]} : vector<2x96xf32> to vector<2x32xf32>
    %19 = arith.addf %17, %18 : vector<2x32xf32>
    %20 = arith.negf %19 : vector<2x32xf32>
    %21 = math.exp %20 : vector<2x32xf32>
    %cst_12 = arith.constant 1.000000e+00 : f32
    %22 = vector.broadcast %cst_12 : f32 to vector<2x32xf32>
    %23 = arith.addf %22, %21 : vector<2x32xf32>
    %24 = arith.divf %22, %23 : vector<2x32xf32>
    %25 = vector.extract_strided_slice %15 {offsets = [0, 32], sizes = [2, 32], strides = [1, 1]} : vector<2x96xf32> to vector<2x32xf32>
    %26 = vector.extract_strided_slice %16 {offsets = [0, 32], sizes = [2, 32], strides = [1, 1]} : vector<2x96xf32> to vector<2x32xf32>
    %27 = arith.addf %25, %26 : vector<2x32xf32>
    %28 = arith.negf %27 : vector<2x32xf32>
    %29 = math.exp %28 : vector<2x32xf32>
    %cst_13 = arith.constant 1.000000e+00 : f32
    %30 = vector.broadcast %cst_13 : f32 to vector<2x32xf32>
    %31 = arith.addf %30, %29 : vector<2x32xf32>
    %32 = arith.divf %30, %31 : vector<2x32xf32>
    %33 = vector.extract_strided_slice %15 {offsets = [0, 64], sizes = [2, 32], strides = [1, 1]} : vector<2x96xf32> to vector<2x32xf32>
    %34 = vector.extract_strided_slice %16 {offsets = [0, 64], sizes = [2, 32], strides = [1, 1]} : vector<2x96xf32> to vector<2x32xf32>
    %35 = vector.broadcast %13 : vector<1x32xf32> to vector<2x32xf32>
    %36 = arith.addf %34, %35 : vector<2x32xf32>
    %37 = arith.mulf %24, %36 : vector<2x32xf32>
    %38 = arith.addf %33, %37 : vector<2x32xf32>
    %39 = math.tanh %38 : vector<2x32xf32>
    %cst_14 = arith.constant 1.000000e+00 : f32
    %40 = vector.broadcast %cst_14 : f32 to vector<2x32xf32>
    %41 = arith.subf %40, %32 : vector<2x32xf32>
    %42 = arith.mulf %41, %39 : vector<2x32xf32>
    %43 = arith.mulf %32, %14 : vector<2x32xf32>
    %44 = arith.addf %42, %43 : vector<2x32xf32>
    %45 = vector.extract_strided_slice %44 {offsets = [0, 0], sizes = [1, 32], strides = [1, 1]} : vector<2x32xf32> to vector<1x32xf32>
    %46 = vector.extract_strided_slice %44 {offsets = [1, 0], sizes = [1, 32], strides = [1, 1]} : vector<2x32xf32> to vector<1x32xf32>
    %47 = vector.extract_strided_slice %8 {offsets = [2, 0], sizes = [2, 96], strides = [1, 1]} : vector<16x96xf32> to vector<2x96xf32>
    %cst_15 = arith.constant dense<0.000000e+00> : vector<2x96xf32>
    %48 = tpu.matmul %44, %12, %cst_15 {dimension_numbers = #tpu.dot_dimension_numbers<[1], [0], [0], [1], [0, 0, 1, 1], [], []>} : vector<2x32xf32>, vector<32x96xf32>, vector<2x96xf32> -> vector<2x96xf32>
    %49 = vector.extract_strided_slice %47 {offsets = [0, 0], sizes = [2, 32], strides = [1, 1]} : vector<2x96xf32> to vector<2x32xf32>
    %50 = vector.extract_strided_slice %48 {offsets = [0, 0], sizes = [2, 32], strides = [1, 1]} : vector<2x96xf32> to vector<2x32xf32>
    %51 = arith.addf %49, %50 : vector<2x32xf32>
    %52 = arith.negf %51 : vector<2x32xf32>
    %53 = math.exp %52 : vector<2x32xf32>
    %cst_16 = arith.constant 1.000000e+00 : f32
    %54 = vector.broadcast %cst_16 : f32 to vector<2x32xf32>
    %55 = arith.addf %54, %53 : vector<2x32xf32>
    %56 = arith.divf %54, %55 : vector<2x32xf32>
    %57 = vector.extract_strided_slice %47 {offsets = [0, 32], sizes = [2, 32], strides = [1, 1]} : vector<2x96xf32> to vector<2x32xf32>
    %58 = vector.extract_strided_slice %48 {offsets = [0, 32], sizes = [2, 32], strides = [1, 1]} : vector<2x96xf32> to vector<2x32xf32>
    %59 = arith.addf %57, %58 : vector<2x32xf32>
    %60 = arith.negf %59 : vector<2x32xf32>
    %61 = math.exp %60 : vector<2x32xf32>
    %cst_17 = arith.constant 1.000000e+00 : f32
    %62 = vector.broadcast %cst_17 : f32 to vector<2x32xf32>
    %63 = arith.addf %62, %61 : vector<2x32xf32>
    %64 = arith.divf %62, %63 : vector<2x32xf32>
    %65 = vector.extract_strided_slice %47 {offsets = [0, 64], sizes = [2, 32], strides = [1, 1]} : vector<2x96xf32> to vector<2x32xf32>
    %66 = vector.extract_strided_slice %48 {offsets = [0, 64], sizes = [2, 32], strides = [1, 1]} : vector<2x96xf32> to vector<2x32xf32>
    %67 = vector.broadcast %13 : vector<1x32xf32> to vector<2x32xf32>
    %68 = arith.addf %66, %67 : vector<2x32xf32>
    %69 = arith.mulf %56, %68 : vector<2x32xf32>
    %70 = arith.addf %65, %69 : vector<2x32xf32>
    %71 = math.tanh %70 : vector<2x32xf32>
    %cst_18 = arith.constant 1.000000e+00 : f32
    %72 = vector.broadcast %cst_18 : f32 to vector<2x32xf32>
    %73 = arith.subf %72, %64 : vector<2x32xf32>
    %74 = arith.mulf %73, %71 : vector<2x32xf32>
    %75 = arith.mulf %64, %44 : vector<2x32xf32>
    %76 = arith.addf %74, %75 : vector<2x32xf32>
    %77 = vector.extract_strided_slice %76 {offsets = [0, 0], sizes = [1, 32], strides = [1, 1]} : vector<2x32xf32> to vector<1x32xf32>
    %78 = vector.extract_strided_slice %76 {offsets = [1, 0], sizes = [1, 32], strides = [1, 1]} : vector<2x32xf32> to vector<1x32xf32>
    %79 = vector.extract_strided_slice %8 {offsets = [4, 0], sizes = [2, 96], strides = [1, 1]} : vector<16x96xf32> to vector<2x96xf32>
    %cst_19 = arith.constant dense<0.000000e+00> : vector<2x96xf32>
    %80 = tpu.matmul %76, %12, %cst_19 {dimension_numbers = #tpu.dot_dimension_numbers<[1], [0], [0], [1], [0, 0, 1, 1], [], []>} : vector<2x32xf32>, vector<32x96xf32>, vector<2x96xf32> -> vector<2x96xf32>
    %81 = vector.extract_strided_slice %79 {offsets = [0, 0], sizes = [2, 32], strides = [1, 1]} : vector<2x96xf32> to vector<2x32xf32>
    %82 = vector.extract_strided_slice %80 {offsets = [0, 0], sizes = [2, 32], strides = [1, 1]} : vector<2x96xf32> to vector<2x32xf32>
    %83 = arith.addf %81, %82 : vector<2x32xf32>
    %84 = arith.negf %83 : vector<2x32xf32>
    %85 = math.exp %84 : vector<2x32xf32>
    %cst_20 = arith.constant 1.000000e+00 : f32
    %86 = vector.broadcast %cst_20 : f32 to vector<2x32xf32>
    %87 = arith.addf %86, %85 : vector<2x32xf32>
    %88 = arith.divf %86, %87 : vector<2x32xf32>
    %89 = vector.extract_strided_slice %79 {offsets = [0, 32], sizes = [2, 32], strides = [1, 1]} : vector<2x96xf32> to vector<2x32xf32>
    %90 = vector.extract_strided_slice %80 {offsets = [0, 32], sizes = [2, 32], strides = [1, 1]} : vector<2x96xf32> to vector<2x32xf32>
    %91 = arith.addf %89, %90 : vector<2x32xf32>
    %92 = arith.negf %91 : vector<2x32xf32>
    %93 = math.exp %92 : vector<2x32xf32>
    %cst_21 = arith.constant 1.000000e+00 : f32
    %94 = vector.broadcast %cst_21 : f32 to vector<2x32xf32>
    %95 = arith.addf %94, %93 : vector<2x32xf32>
    %96 = arith.divf %94, %95 : vector<2x32xf32>
    %97 = vector.extract_strided_slice %79 {offsets = [0, 64], sizes = [2, 32], strides = [1, 1]} : vector<2x96xf32> to vector<2x32xf32>
    %98 = vector.extract_strided_slice %80 {offsets = [0, 64], sizes = [2, 32], strides = [1, 1]} : vector<2x96xf32> to vector<2x32xf32>
    %99 = vector.broadcast %13 : vector<1x32xf32> to vector<2x32xf32>
    %100 = arith.addf %98, %99 : vector<2x32xf32>
    %101 = arith.mulf %88, %100 : vector<2x32xf32>
    %102 = arith.addf %97, %101 : vector<2x32xf32>
    %103 = math.tanh %102 : vector<2x32xf32>
    %cst_22 = arith.constant 1.000000e+00 : f32
    %104 = vector.broadcast %cst_22 : f32 to vector<2x32xf32>
    %105 = arith.subf %104, %96 : vector<2x32xf32>
    %106 = arith.mulf %105, %103 : vector<2x32xf32>
    %107 = arith.mulf %96, %76 : vector<2x32xf32>
    %108 = arith.addf %106, %107 : vector<2x32xf32>
    %109 = vector.extract_strided_slice %108 {offsets = [0, 0], sizes = [1, 32], strides = [1, 1]} : vector<2x32xf32> to vector<1x32xf32>
    %110 = vector.extract_strided_slice %108 {offsets = [1, 0], sizes = [1, 32], strides = [1, 1]} : vector<2x32xf32> to vector<1x32xf32>
    %111 = vector.extract_strided_slice %8 {offsets = [6, 0], sizes = [2, 96], strides = [1, 1]} : vector<16x96xf32> to vector<2x96xf32>
    %cst_23 = arith.constant dense<0.000000e+00> : vector<2x96xf32>
    %112 = tpu.matmul %108, %12, %cst_23 {dimension_numbers = #tpu.dot_dimension_numbers<[1], [0], [0], [1], [0, 0, 1, 1], [], []>} : vector<2x32xf32>, vector<32x96xf32>, vector<2x96xf32> -> vector<2x96xf32>
    %113 = vector.extract_strided_slice %111 {offsets = [0, 0], sizes = [2, 32], strides = [1, 1]} : vector<2x96xf32> to vector<2x32xf32>
    %114 = vector.extract_strided_slice %112 {offsets = [0, 0], sizes = [2, 32], strides = [1, 1]} : vector<2x96xf32> to vector<2x32xf32>
    %115 = arith.addf %113, %114 : vector<2x32xf32>
    %116 = arith.negf %115 : vector<2x32xf32>
    %117 = math.exp %116 : vector<2x32xf32>
    %cst_24 = arith.constant 1.000000e+00 : f32
    %118 = vector.broadcast %cst_24 : f32 to vector<2x32xf32>
    %119 = arith.addf %118, %117 : vector<2x32xf32>
    %120 = arith.divf %118, %119 : vector<2x32xf32>
    %121 = vector.extract_strided_slice %111 {offsets = [0, 32], sizes = [2, 32], strides = [1, 1]} : vector<2x96xf32> to vector<2x32xf32>
    %122 = vector.extract_strided_slice %112 {offsets = [0, 32], sizes = [2, 32], strides = [1, 1]} : vector<2x96xf32> to vector<2x32xf32>
    %123 = arith.addf %121, %122 : vector<2x32xf32>
    %124 = arith.negf %123 : vector<2x32xf32>
    %125 = math.exp %124 : vector<2x32xf32>
    %cst_25 = arith.constant 1.000000e+00 : f32
    %126 = vector.broadcast %cst_25 : f32 to vector<2x32xf32>
    %127 = arith.addf %126, %125 : vector<2x32xf32>
    %128 = arith.divf %126, %127 : vector<2x32xf32>
    %129 = vector.extract_strided_slice %111 {offsets = [0, 64], sizes = [2, 32], strides = [1, 1]} : vector<2x96xf32> to vector<2x32xf32>
    %130 = vector.extract_strided_slice %112 {offsets = [0, 64], sizes = [2, 32], strides = [1, 1]} : vector<2x96xf32> to vector<2x32xf32>
    %131 = vector.broadcast %13 : vector<1x32xf32> to vector<2x32xf32>
    %132 = arith.addf %130, %131 : vector<2x32xf32>
    %133 = arith.mulf %120, %132 : vector<2x32xf32>
    %134 = arith.addf %129, %133 : vector<2x32xf32>
    %135 = math.tanh %134 : vector<2x32xf32>
    %cst_26 = arith.constant 1.000000e+00 : f32
    %136 = vector.broadcast %cst_26 : f32 to vector<2x32xf32>
    %137 = arith.subf %136, %128 : vector<2x32xf32>
    %138 = arith.mulf %137, %135 : vector<2x32xf32>
    %139 = arith.mulf %128, %108 : vector<2x32xf32>
    %140 = arith.addf %138, %139 : vector<2x32xf32>
    %141 = vector.extract_strided_slice %140 {offsets = [0, 0], sizes = [1, 32], strides = [1, 1]} : vector<2x32xf32> to vector<1x32xf32>
    %142 = vector.extract_strided_slice %140 {offsets = [1, 0], sizes = [1, 32], strides = [1, 1]} : vector<2x32xf32> to vector<1x32xf32>
    %143 = vector.extract_strided_slice %8 {offsets = [8, 0], sizes = [2, 96], strides = [1, 1]} : vector<16x96xf32> to vector<2x96xf32>
    %cst_27 = arith.constant dense<0.000000e+00> : vector<2x96xf32>
    %144 = tpu.matmul %140, %12, %cst_27 {dimension_numbers = #tpu.dot_dimension_numbers<[1], [0], [0], [1], [0, 0, 1, 1], [], []>} : vector<2x32xf32>, vector<32x96xf32>, vector<2x96xf32> -> vector<2x96xf32>
    %145 = vector.extract_strided_slice %143 {offsets = [0, 0], sizes = [2, 32], strides = [1, 1]} : vector<2x96xf32> to vector<2x32xf32>
    %146 = vector.extract_strided_slice %144 {offsets = [0, 0], sizes = [2, 32], strides = [1, 1]} : vector<2x96xf32> to vector<2x32xf32>
    %147 = arith.addf %145, %146 : vector<2x32xf32>
    %148 = arith.negf %147 : vector<2x32xf32>
    %149 = math.exp %148 : vector<2x32xf32>
    %cst_28 = arith.constant 1.000000e+00 : f32
    %150 = vector.broadcast %cst_28 : f32 to vector<2x32xf32>
    %151 = arith.addf %150, %149 : vector<2x32xf32>
    %152 = arith.divf %150, %151 : vector<2x32xf32>
    %153 = vector.extract_strided_slice %143 {offsets = [0, 32], sizes = [2, 32], strides = [1, 1]} : vector<2x96xf32> to vector<2x32xf32>
    %154 = vector.extract_strided_slice %144 {offsets = [0, 32], sizes = [2, 32], strides = [1, 1]} : vector<2x96xf32> to vector<2x32xf32>
    %155 = arith.addf %153, %154 : vector<2x32xf32>
    %156 = arith.negf %155 : vector<2x32xf32>
    %157 = math.exp %156 : vector<2x32xf32>
    %cst_29 = arith.constant 1.000000e+00 : f32
    %158 = vector.broadcast %cst_29 : f32 to vector<2x32xf32>
    %159 = arith.addf %158, %157 : vector<2x32xf32>
    %160 = arith.divf %158, %159 : vector<2x32xf32>
    %161 = vector.extract_strided_slice %143 {offsets = [0, 64], sizes = [2, 32], strides = [1, 1]} : vector<2x96xf32> to vector<2x32xf32>
    %162 = vector.extract_strided_slice %144 {offsets = [0, 64], sizes = [2, 32], strides = [1, 1]} : vector<2x96xf32> to vector<2x32xf32>
    %163 = vector.broadcast %13 : vector<1x32xf32> to vector<2x32xf32>
    %164 = arith.addf %162, %163 : vector<2x32xf32>
    %165 = arith.mulf %152, %164 : vector<2x32xf32>
    %166 = arith.addf %161, %165 : vector<2x32xf32>
    %167 = math.tanh %166 : vector<2x32xf32>
    %cst_30 = arith.constant 1.000000e+00 : f32
    %168 = vector.broadcast %cst_30 : f32 to vector<2x32xf32>
    %169 = arith.subf %168, %160 : vector<2x32xf32>
    %170 = arith.mulf %169, %167 : vector<2x32xf32>
    %171 = arith.mulf %160, %140 : vector<2x32xf32>
    %172 = arith.addf %170, %171 : vector<2x32xf32>
    %173 = vector.extract_strided_slice %172 {offsets = [0, 0], sizes = [1, 32], strides = [1, 1]} : vector<2x32xf32> to vector<1x32xf32>
    %174 = vector.extract_strided_slice %172 {offsets = [1, 0], sizes = [1, 32], strides = [1, 1]} : vector<2x32xf32> to vector<1x32xf32>
    %175 = vector.extract_strided_slice %8 {offsets = [10, 0], sizes = [2, 96], strides = [1, 1]} : vector<16x96xf32> to vector<2x96xf32>
    %cst_31 = arith.constant dense<0.000000e+00> : vector<2x96xf32>
    %176 = tpu.matmul %172, %12, %cst_31 {dimension_numbers = #tpu.dot_dimension_numbers<[1], [0], [0], [1], [0, 0, 1, 1], [], []>} : vector<2x32xf32>, vector<32x96xf32>, vector<2x96xf32> -> vector<2x96xf32>
    %177 = vector.extract_strided_slice %175 {offsets = [0, 0], sizes = [2, 32], strides = [1, 1]} : vector<2x96xf32> to vector<2x32xf32>
    %178 = vector.extract_strided_slice %176 {offsets = [0, 0], sizes = [2, 32], strides = [1, 1]} : vector<2x96xf32> to vector<2x32xf32>
    %179 = arith.addf %177, %178 : vector<2x32xf32>
    %180 = arith.negf %179 : vector<2x32xf32>
    %181 = math.exp %180 : vector<2x32xf32>
    %cst_32 = arith.constant 1.000000e+00 : f32
    %182 = vector.broadcast %cst_32 : f32 to vector<2x32xf32>
    %183 = arith.addf %182, %181 : vector<2x32xf32>
    %184 = arith.divf %182, %183 : vector<2x32xf32>
    %185 = vector.extract_strided_slice %175 {offsets = [0, 32], sizes = [2, 32], strides = [1, 1]} : vector<2x96xf32> to vector<2x32xf32>
    %186 = vector.extract_strided_slice %176 {offsets = [0, 32], sizes = [2, 32], strides = [1, 1]} : vector<2x96xf32> to vector<2x32xf32>
    %187 = arith.addf %185, %186 : vector<2x32xf32>
    %188 = arith.negf %187 : vector<2x32xf32>
    %189 = math.exp %188 : vector<2x32xf32>
    %cst_33 = arith.constant 1.000000e+00 : f32
    %190 = vector.broadcast %cst_33 : f32 to vector<2x32xf32>
    %191 = arith.addf %190, %189 : vector<2x32xf32>
    %192 = arith.divf %190, %191 : vector<2x32xf32>
    %193 = vector.extract_strided_slice %175 {offsets = [0, 64], sizes = [2, 32], strides = [1, 1]} : vector<2x96xf32> to vector<2x32xf32>
    %194 = vector.extract_strided_slice %176 {offsets = [0, 64], sizes = [2, 32], strides = [1, 1]} : vector<2x96xf32> to vector<2x32xf32>
    %195 = vector.broadcast %13 : vector<1x32xf32> to vector<2x32xf32>
    %196 = arith.addf %194, %195 : vector<2x32xf32>
    %197 = arith.mulf %184, %196 : vector<2x32xf32>
    %198 = arith.addf %193, %197 : vector<2x32xf32>
    %199 = math.tanh %198 : vector<2x32xf32>
    %cst_34 = arith.constant 1.000000e+00 : f32
    %200 = vector.broadcast %cst_34 : f32 to vector<2x32xf32>
    %201 = arith.subf %200, %192 : vector<2x32xf32>
    %202 = arith.mulf %201, %199 : vector<2x32xf32>
    %203 = arith.mulf %192, %172 : vector<2x32xf32>
    %204 = arith.addf %202, %203 : vector<2x32xf32>
    %205 = vector.extract_strided_slice %204 {offsets = [0, 0], sizes = [1, 32], strides = [1, 1]} : vector<2x32xf32> to vector<1x32xf32>
    %206 = vector.extract_strided_slice %204 {offsets = [1, 0], sizes = [1, 32], strides = [1, 1]} : vector<2x32xf32> to vector<1x32xf32>
    %207 = vector.extract_strided_slice %8 {offsets = [12, 0], sizes = [2, 96], strides = [1, 1]} : vector<16x96xf32> to vector<2x96xf32>
    %cst_35 = arith.constant dense<0.000000e+00> : vector<2x96xf32>
    %208 = tpu.matmul %204, %12, %cst_35 {dimension_numbers = #tpu.dot_dimension_numbers<[1], [0], [0], [1], [0, 0, 1, 1], [], []>} : vector<2x32xf32>, vector<32x96xf32>, vector<2x96xf32> -> vector<2x96xf32>
    %209 = vector.extract_strided_slice %207 {offsets = [0, 0], sizes = [2, 32], strides = [1, 1]} : vector<2x96xf32> to vector<2x32xf32>
    %210 = vector.extract_strided_slice %208 {offsets = [0, 0], sizes = [2, 32], strides = [1, 1]} : vector<2x96xf32> to vector<2x32xf32>
    %211 = arith.addf %209, %210 : vector<2x32xf32>
    %212 = arith.negf %211 : vector<2x32xf32>
    %213 = math.exp %212 : vector<2x32xf32>
    %cst_36 = arith.constant 1.000000e+00 : f32
    %214 = vector.broadcast %cst_36 : f32 to vector<2x32xf32>
    %215 = arith.addf %214, %213 : vector<2x32xf32>
    %216 = arith.divf %214, %215 : vector<2x32xf32>
    %217 = vector.extract_strided_slice %207 {offsets = [0, 32], sizes = [2, 32], strides = [1, 1]} : vector<2x96xf32> to vector<2x32xf32>
    %218 = vector.extract_strided_slice %208 {offsets = [0, 32], sizes = [2, 32], strides = [1, 1]} : vector<2x96xf32> to vector<2x32xf32>
    %219 = arith.addf %217, %218 : vector<2x32xf32>
    %220 = arith.negf %219 : vector<2x32xf32>
    %221 = math.exp %220 : vector<2x32xf32>
    %cst_37 = arith.constant 1.000000e+00 : f32
    %222 = vector.broadcast %cst_37 : f32 to vector<2x32xf32>
    %223 = arith.addf %222, %221 : vector<2x32xf32>
    %224 = arith.divf %222, %223 : vector<2x32xf32>
    %225 = vector.extract_strided_slice %207 {offsets = [0, 64], sizes = [2, 32], strides = [1, 1]} : vector<2x96xf32> to vector<2x32xf32>
    %226 = vector.extract_strided_slice %208 {offsets = [0, 64], sizes = [2, 32], strides = [1, 1]} : vector<2x96xf32> to vector<2x32xf32>
    %227 = vector.broadcast %13 : vector<1x32xf32> to vector<2x32xf32>
    %228 = arith.addf %226, %227 : vector<2x32xf32>
    %229 = arith.mulf %216, %228 : vector<2x32xf32>
    %230 = arith.addf %225, %229 : vector<2x32xf32>
    %231 = math.tanh %230 : vector<2x32xf32>
    %cst_38 = arith.constant 1.000000e+00 : f32
    %232 = vector.broadcast %cst_38 : f32 to vector<2x32xf32>
    %233 = arith.subf %232, %224 : vector<2x32xf32>
    %234 = arith.mulf %233, %231 : vector<2x32xf32>
    %235 = arith.mulf %224, %204 : vector<2x32xf32>
    %236 = arith.addf %234, %235 : vector<2x32xf32>
    %237 = vector.extract_strided_slice %236 {offsets = [0, 0], sizes = [1, 32], strides = [1, 1]} : vector<2x32xf32> to vector<1x32xf32>
    %238 = vector.extract_strided_slice %236 {offsets = [1, 0], sizes = [1, 32], strides = [1, 1]} : vector<2x32xf32> to vector<1x32xf32>
    %239 = vector.extract_strided_slice %8 {offsets = [14, 0], sizes = [2, 96], strides = [1, 1]} : vector<16x96xf32> to vector<2x96xf32>
    %cst_39 = arith.constant dense<0.000000e+00> : vector<2x96xf32>
    %240 = tpu.matmul %236, %12, %cst_39 {dimension_numbers = #tpu.dot_dimension_numbers<[1], [0], [0], [1], [0, 0, 1, 1], [], []>} : vector<2x32xf32>, vector<32x96xf32>, vector<2x96xf32> -> vector<2x96xf32>
    %241 = vector.extract_strided_slice %239 {offsets = [0, 0], sizes = [2, 32], strides = [1, 1]} : vector<2x96xf32> to vector<2x32xf32>
    %242 = vector.extract_strided_slice %240 {offsets = [0, 0], sizes = [2, 32], strides = [1, 1]} : vector<2x96xf32> to vector<2x32xf32>
    %243 = arith.addf %241, %242 : vector<2x32xf32>
    %244 = arith.negf %243 : vector<2x32xf32>
    %245 = math.exp %244 : vector<2x32xf32>
    %cst_40 = arith.constant 1.000000e+00 : f32
    %246 = vector.broadcast %cst_40 : f32 to vector<2x32xf32>
    %247 = arith.addf %246, %245 : vector<2x32xf32>
    %248 = arith.divf %246, %247 : vector<2x32xf32>
    %249 = vector.extract_strided_slice %239 {offsets = [0, 32], sizes = [2, 32], strides = [1, 1]} : vector<2x96xf32> to vector<2x32xf32>
    %250 = vector.extract_strided_slice %240 {offsets = [0, 32], sizes = [2, 32], strides = [1, 1]} : vector<2x96xf32> to vector<2x32xf32>
    %251 = arith.addf %249, %250 : vector<2x32xf32>
    %252 = arith.negf %251 : vector<2x32xf32>
    %253 = math.exp %252 : vector<2x32xf32>
    %cst_41 = arith.constant 1.000000e+00 : f32
    %254 = vector.broadcast %cst_41 : f32 to vector<2x32xf32>
    %255 = arith.addf %254, %253 : vector<2x32xf32>
    %256 = arith.divf %254, %255 : vector<2x32xf32>
    %257 = vector.extract_strided_slice %239 {offsets = [0, 64], sizes = [2, 32], strides = [1, 1]} : vector<2x96xf32> to vector<2x32xf32>
    %258 = vector.extract_strided_slice %240 {offsets = [0, 64], sizes = [2, 32], strides = [1, 1]} : vector<2x96xf32> to vector<2x32xf32>
    %259 = vector.broadcast %13 : vector<1x32xf32> to vector<2x32xf32>
    %260 = arith.addf %258, %259 : vector<2x32xf32>
    %261 = arith.mulf %248, %260 : vector<2x32xf32>
    %262 = arith.addf %257, %261 : vector<2x32xf32>
    %263 = math.tanh %262 : vector<2x32xf32>
    %cst_42 = arith.constant 1.000000e+00 : f32
    %264 = vector.broadcast %cst_42 : f32 to vector<2x32xf32>
    %265 = arith.subf %264, %256 : vector<2x32xf32>
    %266 = arith.mulf %265, %263 : vector<2x32xf32>
    %267 = arith.mulf %256, %236 : vector<2x32xf32>
    %268 = arith.addf %266, %267 : vector<2x32xf32>
    %269 = vector.extract_strided_slice %268 {offsets = [0, 0], sizes = [1, 32], strides = [1, 1]} : vector<2x32xf32> to vector<1x32xf32>
    %270 = vector.extract_strided_slice %268 {offsets = [1, 0], sizes = [1, 32], strides = [1, 1]} : vector<2x32xf32> to vector<1x32xf32>
    %c0_43 = arith.constant 0 : index
    %c96_44 = arith.constant 96 : index
    %271 = vector.load %arg2[%c0_43, %c96_44] : memref<168x128xf32, #tpu.memory_space<vmem>>, vector<32x16xf32>
    %c163 = arith.constant 163 : index
    %c0_45 = arith.constant 0 : index
    %272 = vector.load %arg2[%c163, %c0_45] : memref<168x128xf32, #tpu.memory_space<vmem>>, vector<1x16xf32>
    %273 = tpu.concatenate %45, %77, %109, %141, %173, %205, %237, %269 in 0 : vector<1x32xf32>, vector<1x32xf32>, vector<1x32xf32>, vector<1x32xf32>, vector<1x32xf32>, vector<1x32xf32>, vector<1x32xf32>, vector<1x32xf32> -> vector<8x32xf32>
    %274 = tpu.concatenate %46, %78, %110, %142, %174, %206, %238, %270 in 0 : vector<1x32xf32>, vector<1x32xf32>, vector<1x32xf32>, vector<1x32xf32>, vector<1x32xf32>, vector<1x32xf32>, vector<1x32xf32>, vector<1x32xf32> -> vector<8x32xf32>
    %cst_46 = arith.constant dense<0.000000e+00> : vector<8x16xf32>
    %275 = tpu.matmul %273, %271, %cst_46 {dimension_numbers = #tpu.dot_dimension_numbers<[1], [0], [0], [1], [0, 0, 1, 1], [], []>} : vector<8x32xf32>, vector<32x16xf32>, vector<8x16xf32> -> vector<8x16xf32>
    %cst_47 = arith.constant dense<0.000000e+00> : vector<8x16xf32>
    %276 = tpu.matmul %274, %271, %cst_47 {dimension_numbers = #tpu.dot_dimension_numbers<[1], [0], [0], [1], [0, 0, 1, 1], [], []>} : vector<8x32xf32>, vector<32x16xf32>, vector<8x16xf32> -> vector<8x16xf32>
    %c0_48 = arith.constant 0 : index
    %c0_49 = arith.constant 0 : index
    %277 = vector.load %arg1[%c0_48, %c0_49] : memref<8x2xf32, #tpu.memory_space<vmem>>, vector<8x1xf32>
    %c0_50 = arith.constant 0 : index
    %c1 = arith.constant 1 : index
    %278 = vector.load %arg1[%c0_50, %c1] : memref<8x2xf32, #tpu.memory_space<vmem>>, vector<8x1xf32>
    %c64 = arith.constant 64 : index
    %c0_51 = arith.constant 0 : index
    %279 = vector.load %arg2[%c64, %c0_51] : memref<168x128xf32, #tpu.memory_space<vmem>>, vector<32x112xf32>
    %c32 = arith.constant 32 : index
    %c0_52 = arith.constant 0 : index
    %280 = vector.load %arg2[%c32, %c0_52] : memref<168x128xf32, #tpu.memory_space<vmem>>, vector<32x96xf32>
    %c161_53 = arith.constant 161 : index
    %c96_54 = arith.constant 96 : index
    %281 = vector.load %arg2[%c161_53, %c96_54] : memref<168x128xf32, #tpu.memory_space<vmem>>, vector<1x32xf32>
    %cst_55 = arith.constant dense<0.000000e+00> : vector<2x112xf32>
    %282 = tpu.matmul %268, %279, %cst_55 {dimension_numbers = #tpu.dot_dimension_numbers<[1], [0], [0], [1], [0, 0, 1, 1], [], []>} : vector<2x32xf32>, vector<32x112xf32>, vector<2x112xf32> -> vector<2x112xf32>
    %283 = vector.extract_strided_slice %282 {offsets = [0, 96], sizes = [2, 16], strides = [1, 1]} : vector<2x112xf32> to vector<2x16xf32>
    %284 = vector.extract_strided_slice %283 {offsets = [0, 0], sizes = [1, 16], strides = [1, 1]} : vector<2x16xf32> to vector<1x16xf32>
    %285 = vector.broadcast %284 : vector<1x16xf32> to vector<8x16xf32>
    %286 = arith.addf %275, %285 : vector<8x16xf32>
    %287 = math.tanh %286 : vector<8x16xf32>
    %288 = vector.broadcast %272 : vector<1x16xf32> to vector<8x16xf32>
    %289 = arith.mulf %287, %288 : vector<8x16xf32>
    %cst_56 = arith.constant dense<0.000000e+00> : vector<8xf32>
    %290 = vector.multi_reduction <add>, %289, %cst_56 [1] : vector<8x16xf32> to vector<8xf32>
    %291 = vector.shape_cast %290 : vector<8xf32> to vector<8x1xf32>
    %292 = arith.addf %291, %277 : vector<8x1xf32>
    %cst_57 = arith.constant dense<0xFF800000> : vector<1xf32>
    %293 = vector.multi_reduction <maximumf>, %292, %cst_57 [0] : vector<8x1xf32> to vector<1xf32>
    %294 = vector.shape_cast %293 : vector<1xf32> to vector<1x1xf32>
    %295 = vector.broadcast %294 : vector<1x1xf32> to vector<8x1xf32>
    %296 = arith.subf %292, %295 : vector<8x1xf32>
    %297 = math.exp %296 : vector<8x1xf32>
    %cst_58 = arith.constant dense<0.000000e+00> : vector<1xf32>
    %298 = vector.multi_reduction <add>, %297, %cst_58 [0] : vector<8x1xf32> to vector<1xf32>
    %299 = vector.shape_cast %298 : vector<1xf32> to vector<1x1xf32>
    %300 = vector.broadcast %299 : vector<1x1xf32> to vector<8x1xf32>
    %301 = arith.divf %297, %300 : vector<8x1xf32>
    %302 = vector.broadcast %301 : vector<8x1xf32> to vector<8x32xf32>
    %303 = arith.mulf %302, %273 : vector<8x32xf32>
    %cst_59 = arith.constant dense<0.000000e+00> : vector<32xf32>
    %304 = vector.multi_reduction <add>, %303, %cst_59 [0] : vector<8x32xf32> to vector<32xf32>
    %305 = vector.shape_cast %304 : vector<32xf32> to vector<1x32xf32>
    %306 = vector.extract_strided_slice %283 {offsets = [1, 0], sizes = [1, 16], strides = [1, 1]} : vector<2x16xf32> to vector<1x16xf32>
    %307 = vector.broadcast %306 : vector<1x16xf32> to vector<8x16xf32>
    %308 = arith.addf %276, %307 : vector<8x16xf32>
    %309 = math.tanh %308 : vector<8x16xf32>
    %310 = vector.broadcast %272 : vector<1x16xf32> to vector<8x16xf32>
    %311 = arith.mulf %309, %310 : vector<8x16xf32>
    %cst_60 = arith.constant dense<0.000000e+00> : vector<8xf32>
    %312 = vector.multi_reduction <add>, %311, %cst_60 [1] : vector<8x16xf32> to vector<8xf32>
    %313 = vector.shape_cast %312 : vector<8xf32> to vector<8x1xf32>
    %314 = arith.addf %313, %278 : vector<8x1xf32>
    %cst_61 = arith.constant dense<0xFF800000> : vector<1xf32>
    %315 = vector.multi_reduction <maximumf>, %314, %cst_61 [0] : vector<8x1xf32> to vector<1xf32>
    %316 = vector.shape_cast %315 : vector<1xf32> to vector<1x1xf32>
    %317 = vector.broadcast %316 : vector<1x1xf32> to vector<8x1xf32>
    %318 = arith.subf %314, %317 : vector<8x1xf32>
    %319 = math.exp %318 : vector<8x1xf32>
    %cst_62 = arith.constant dense<0.000000e+00> : vector<1xf32>
    %320 = vector.multi_reduction <add>, %319, %cst_62 [0] : vector<8x1xf32> to vector<1xf32>
    %321 = vector.shape_cast %320 : vector<1xf32> to vector<1x1xf32>
    %322 = vector.broadcast %321 : vector<1x1xf32> to vector<8x1xf32>
    %323 = arith.divf %319, %322 : vector<8x1xf32>
    %324 = vector.broadcast %323 : vector<8x1xf32> to vector<8x32xf32>
    %325 = arith.mulf %324, %274 : vector<8x32xf32>
    %cst_63 = arith.constant dense<0.000000e+00> : vector<32xf32>
    %326 = vector.multi_reduction <add>, %325, %cst_63 [0] : vector<8x32xf32> to vector<32xf32>
    %327 = vector.shape_cast %326 : vector<32xf32> to vector<1x32xf32>
    %328 = tpu.concatenate %305, %327 in 0 : vector<1x32xf32>, vector<1x32xf32> -> vector<2x32xf32>
    %cst_64 = arith.constant dense<0.000000e+00> : vector<2x96xf32>
    %329 = tpu.matmul %328, %280, %cst_64 {dimension_numbers = #tpu.dot_dimension_numbers<[1], [0], [0], [1], [0, 0, 1, 1], [], []>} : vector<2x32xf32>, vector<32x96xf32>, vector<2x96xf32> -> vector<2x96xf32>
    %330 = vector.extract_strided_slice %11 {offsets = [0, 0], sizes = [2, 96], strides = [1, 1]} : vector<16x96xf32> to vector<2x96xf32>
    %331 = vector.extract_strided_slice %330 {offsets = [0, 0], sizes = [2, 32], strides = [1, 1]} : vector<2x96xf32> to vector<2x32xf32>
    %332 = vector.extract_strided_slice %329 {offsets = [0, 0], sizes = [2, 32], strides = [1, 1]} : vector<2x96xf32> to vector<2x32xf32>
    %333 = arith.addf %331, %332 : vector<2x32xf32>
    %334 = vector.extract_strided_slice %282 {offsets = [0, 0], sizes = [2, 32], strides = [1, 1]} : vector<2x112xf32> to vector<2x32xf32>
    %335 = arith.addf %333, %334 : vector<2x32xf32>
    %336 = arith.negf %335 : vector<2x32xf32>
    %337 = math.exp %336 : vector<2x32xf32>
    %cst_65 = arith.constant 1.000000e+00 : f32
    %338 = vector.broadcast %cst_65 : f32 to vector<2x32xf32>
    %339 = arith.addf %338, %337 : vector<2x32xf32>
    %340 = arith.divf %338, %339 : vector<2x32xf32>
    %341 = vector.extract_strided_slice %330 {offsets = [0, 32], sizes = [2, 32], strides = [1, 1]} : vector<2x96xf32> to vector<2x32xf32>
    %342 = vector.extract_strided_slice %329 {offsets = [0, 32], sizes = [2, 32], strides = [1, 1]} : vector<2x96xf32> to vector<2x32xf32>
    %343 = arith.addf %341, %342 : vector<2x32xf32>
    %344 = vector.extract_strided_slice %282 {offsets = [0, 32], sizes = [2, 32], strides = [1, 1]} : vector<2x112xf32> to vector<2x32xf32>
    %345 = arith.addf %343, %344 : vector<2x32xf32>
    %346 = arith.negf %345 : vector<2x32xf32>
    %347 = math.exp %346 : vector<2x32xf32>
    %cst_66 = arith.constant 1.000000e+00 : f32
    %348 = vector.broadcast %cst_66 : f32 to vector<2x32xf32>
    %349 = arith.addf %348, %347 : vector<2x32xf32>
    %350 = arith.divf %348, %349 : vector<2x32xf32>
    %351 = vector.extract_strided_slice %330 {offsets = [0, 64], sizes = [2, 32], strides = [1, 1]} : vector<2x96xf32> to vector<2x32xf32>
    %352 = vector.extract_strided_slice %329 {offsets = [0, 64], sizes = [2, 32], strides = [1, 1]} : vector<2x96xf32> to vector<2x32xf32>
    %353 = arith.addf %351, %352 : vector<2x32xf32>
    %354 = vector.extract_strided_slice %282 {offsets = [0, 64], sizes = [2, 32], strides = [1, 1]} : vector<2x112xf32> to vector<2x32xf32>
    %355 = vector.broadcast %281 : vector<1x32xf32> to vector<2x32xf32>
    %356 = arith.addf %354, %355 : vector<2x32xf32>
    %357 = arith.mulf %340, %356 : vector<2x32xf32>
    %358 = arith.addf %353, %357 : vector<2x32xf32>
    %359 = math.tanh %358 : vector<2x32xf32>
    %cst_67 = arith.constant 1.000000e+00 : f32
    %360 = vector.broadcast %cst_67 : f32 to vector<2x32xf32>
    %361 = arith.subf %360, %350 : vector<2x32xf32>
    %362 = arith.mulf %361, %359 : vector<2x32xf32>
    %363 = arith.mulf %350, %268 : vector<2x32xf32>
    %364 = arith.addf %362, %363 : vector<2x32xf32>
    %cst_68 = arith.constant dense<0.000000e+00> : vector<2x112xf32>
    %365 = tpu.matmul %364, %279, %cst_68 {dimension_numbers = #tpu.dot_dimension_numbers<[1], [0], [0], [1], [0, 0, 1, 1], [], []>} : vector<2x32xf32>, vector<32x112xf32>, vector<2x112xf32> -> vector<2x112xf32>
    %366 = vector.extract_strided_slice %365 {offsets = [0, 96], sizes = [2, 16], strides = [1, 1]} : vector<2x112xf32> to vector<2x16xf32>
    %367 = vector.extract_strided_slice %366 {offsets = [0, 0], sizes = [1, 16], strides = [1, 1]} : vector<2x16xf32> to vector<1x16xf32>
    %368 = vector.broadcast %367 : vector<1x16xf32> to vector<8x16xf32>
    %369 = arith.addf %275, %368 : vector<8x16xf32>
    %370 = math.tanh %369 : vector<8x16xf32>
    %371 = vector.broadcast %272 : vector<1x16xf32> to vector<8x16xf32>
    %372 = arith.mulf %370, %371 : vector<8x16xf32>
    %cst_69 = arith.constant dense<0.000000e+00> : vector<8xf32>
    %373 = vector.multi_reduction <add>, %372, %cst_69 [1] : vector<8x16xf32> to vector<8xf32>
    %374 = vector.shape_cast %373 : vector<8xf32> to vector<8x1xf32>
    %375 = arith.addf %374, %277 : vector<8x1xf32>
    %cst_70 = arith.constant dense<0xFF800000> : vector<1xf32>
    %376 = vector.multi_reduction <maximumf>, %375, %cst_70 [0] : vector<8x1xf32> to vector<1xf32>
    %377 = vector.shape_cast %376 : vector<1xf32> to vector<1x1xf32>
    %378 = vector.broadcast %377 : vector<1x1xf32> to vector<8x1xf32>
    %379 = arith.subf %375, %378 : vector<8x1xf32>
    %380 = math.exp %379 : vector<8x1xf32>
    %cst_71 = arith.constant dense<0.000000e+00> : vector<1xf32>
    %381 = vector.multi_reduction <add>, %380, %cst_71 [0] : vector<8x1xf32> to vector<1xf32>
    %382 = vector.shape_cast %381 : vector<1xf32> to vector<1x1xf32>
    %383 = vector.broadcast %382 : vector<1x1xf32> to vector<8x1xf32>
    %384 = arith.divf %380, %383 : vector<8x1xf32>
    %385 = vector.broadcast %384 : vector<8x1xf32> to vector<8x32xf32>
    %386 = arith.mulf %385, %273 : vector<8x32xf32>
    %cst_72 = arith.constant dense<0.000000e+00> : vector<32xf32>
    %387 = vector.multi_reduction <add>, %386, %cst_72 [0] : vector<8x32xf32> to vector<32xf32>
    %388 = vector.shape_cast %387 : vector<32xf32> to vector<1x32xf32>
    %389 = vector.extract_strided_slice %366 {offsets = [1, 0], sizes = [1, 16], strides = [1, 1]} : vector<2x16xf32> to vector<1x16xf32>
    %390 = vector.broadcast %389 : vector<1x16xf32> to vector<8x16xf32>
    %391 = arith.addf %276, %390 : vector<8x16xf32>
    %392 = math.tanh %391 : vector<8x16xf32>
    %393 = vector.broadcast %272 : vector<1x16xf32> to vector<8x16xf32>
    %394 = arith.mulf %392, %393 : vector<8x16xf32>
    %cst_73 = arith.constant dense<0.000000e+00> : vector<8xf32>
    %395 = vector.multi_reduction <add>, %394, %cst_73 [1] : vector<8x16xf32> to vector<8xf32>
    %396 = vector.shape_cast %395 : vector<8xf32> to vector<8x1xf32>
    %397 = arith.addf %396, %278 : vector<8x1xf32>
    %cst_74 = arith.constant dense<0xFF800000> : vector<1xf32>
    %398 = vector.multi_reduction <maximumf>, %397, %cst_74 [0] : vector<8x1xf32> to vector<1xf32>
    %399 = vector.shape_cast %398 : vector<1xf32> to vector<1x1xf32>
    %400 = vector.broadcast %399 : vector<1x1xf32> to vector<8x1xf32>
    %401 = arith.subf %397, %400 : vector<8x1xf32>
    %402 = math.exp %401 : vector<8x1xf32>
    %cst_75 = arith.constant dense<0.000000e+00> : vector<1xf32>
    %403 = vector.multi_reduction <add>, %402, %cst_75 [0] : vector<8x1xf32> to vector<1xf32>
    %404 = vector.shape_cast %403 : vector<1xf32> to vector<1x1xf32>
    %405 = vector.broadcast %404 : vector<1x1xf32> to vector<8x1xf32>
    %406 = arith.divf %402, %405 : vector<8x1xf32>
    %407 = vector.broadcast %406 : vector<8x1xf32> to vector<8x32xf32>
    %408 = arith.mulf %407, %274 : vector<8x32xf32>
    %cst_76 = arith.constant dense<0.000000e+00> : vector<32xf32>
    %409 = vector.multi_reduction <add>, %408, %cst_76 [0] : vector<8x32xf32> to vector<32xf32>
    %410 = vector.shape_cast %409 : vector<32xf32> to vector<1x32xf32>
    %411 = tpu.concatenate %388, %410 in 0 : vector<1x32xf32>, vector<1x32xf32> -> vector<2x32xf32>
    %cst_77 = arith.constant dense<0.000000e+00> : vector<2x96xf32>
    %412 = tpu.matmul %411, %280, %cst_77 {dimension_numbers = #tpu.dot_dimension_numbers<[1], [0], [0], [1], [0, 0, 1, 1], [], []>} : vector<2x32xf32>, vector<32x96xf32>, vector<2x96xf32> -> vector<2x96xf32>
    %413 = vector.extract_strided_slice %11 {offsets = [2, 0], sizes = [2, 96], strides = [1, 1]} : vector<16x96xf32> to vector<2x96xf32>
    %414 = vector.extract_strided_slice %413 {offsets = [0, 0], sizes = [2, 32], strides = [1, 1]} : vector<2x96xf32> to vector<2x32xf32>
    %415 = vector.extract_strided_slice %412 {offsets = [0, 0], sizes = [2, 32], strides = [1, 1]} : vector<2x96xf32> to vector<2x32xf32>
    %416 = arith.addf %414, %415 : vector<2x32xf32>
    %417 = vector.extract_strided_slice %365 {offsets = [0, 0], sizes = [2, 32], strides = [1, 1]} : vector<2x112xf32> to vector<2x32xf32>
    %418 = arith.addf %416, %417 : vector<2x32xf32>
    %419 = arith.negf %418 : vector<2x32xf32>
    %420 = math.exp %419 : vector<2x32xf32>
    %cst_78 = arith.constant 1.000000e+00 : f32
    %421 = vector.broadcast %cst_78 : f32 to vector<2x32xf32>
    %422 = arith.addf %421, %420 : vector<2x32xf32>
    %423 = arith.divf %421, %422 : vector<2x32xf32>
    %424 = vector.extract_strided_slice %413 {offsets = [0, 32], sizes = [2, 32], strides = [1, 1]} : vector<2x96xf32> to vector<2x32xf32>
    %425 = vector.extract_strided_slice %412 {offsets = [0, 32], sizes = [2, 32], strides = [1, 1]} : vector<2x96xf32> to vector<2x32xf32>
    %426 = arith.addf %424, %425 : vector<2x32xf32>
    %427 = vector.extract_strided_slice %365 {offsets = [0, 32], sizes = [2, 32], strides = [1, 1]} : vector<2x112xf32> to vector<2x32xf32>
    %428 = arith.addf %426, %427 : vector<2x32xf32>
    %429 = arith.negf %428 : vector<2x32xf32>
    %430 = math.exp %429 : vector<2x32xf32>
    %cst_79 = arith.constant 1.000000e+00 : f32
    %431 = vector.broadcast %cst_79 : f32 to vector<2x32xf32>
    %432 = arith.addf %431, %430 : vector<2x32xf32>
    %433 = arith.divf %431, %432 : vector<2x32xf32>
    %434 = vector.extract_strided_slice %413 {offsets = [0, 64], sizes = [2, 32], strides = [1, 1]} : vector<2x96xf32> to vector<2x32xf32>
    %435 = vector.extract_strided_slice %412 {offsets = [0, 64], sizes = [2, 32], strides = [1, 1]} : vector<2x96xf32> to vector<2x32xf32>
    %436 = arith.addf %434, %435 : vector<2x32xf32>
    %437 = vector.extract_strided_slice %365 {offsets = [0, 64], sizes = [2, 32], strides = [1, 1]} : vector<2x112xf32> to vector<2x32xf32>
    %438 = vector.broadcast %281 : vector<1x32xf32> to vector<2x32xf32>
    %439 = arith.addf %437, %438 : vector<2x32xf32>
    %440 = arith.mulf %423, %439 : vector<2x32xf32>
    %441 = arith.addf %436, %440 : vector<2x32xf32>
    %442 = math.tanh %441 : vector<2x32xf32>
    %cst_80 = arith.constant 1.000000e+00 : f32
    %443 = vector.broadcast %cst_80 : f32 to vector<2x32xf32>
    %444 = arith.subf %443, %433 : vector<2x32xf32>
    %445 = arith.mulf %444, %442 : vector<2x32xf32>
    %446 = arith.mulf %433, %364 : vector<2x32xf32>
    %447 = arith.addf %445, %446 : vector<2x32xf32>
    %cst_81 = arith.constant dense<0.000000e+00> : vector<2x112xf32>
    %448 = tpu.matmul %447, %279, %cst_81 {dimension_numbers = #tpu.dot_dimension_numbers<[1], [0], [0], [1], [0, 0, 1, 1], [], []>} : vector<2x32xf32>, vector<32x112xf32>, vector<2x112xf32> -> vector<2x112xf32>
    %449 = vector.extract_strided_slice %448 {offsets = [0, 96], sizes = [2, 16], strides = [1, 1]} : vector<2x112xf32> to vector<2x16xf32>
    %450 = vector.extract_strided_slice %449 {offsets = [0, 0], sizes = [1, 16], strides = [1, 1]} : vector<2x16xf32> to vector<1x16xf32>
    %451 = vector.broadcast %450 : vector<1x16xf32> to vector<8x16xf32>
    %452 = arith.addf %275, %451 : vector<8x16xf32>
    %453 = math.tanh %452 : vector<8x16xf32>
    %454 = vector.broadcast %272 : vector<1x16xf32> to vector<8x16xf32>
    %455 = arith.mulf %453, %454 : vector<8x16xf32>
    %cst_82 = arith.constant dense<0.000000e+00> : vector<8xf32>
    %456 = vector.multi_reduction <add>, %455, %cst_82 [1] : vector<8x16xf32> to vector<8xf32>
    %457 = vector.shape_cast %456 : vector<8xf32> to vector<8x1xf32>
    %458 = arith.addf %457, %277 : vector<8x1xf32>
    %cst_83 = arith.constant dense<0xFF800000> : vector<1xf32>
    %459 = vector.multi_reduction <maximumf>, %458, %cst_83 [0] : vector<8x1xf32> to vector<1xf32>
    %460 = vector.shape_cast %459 : vector<1xf32> to vector<1x1xf32>
    %461 = vector.broadcast %460 : vector<1x1xf32> to vector<8x1xf32>
    %462 = arith.subf %458, %461 : vector<8x1xf32>
    %463 = math.exp %462 : vector<8x1xf32>
    %cst_84 = arith.constant dense<0.000000e+00> : vector<1xf32>
    %464 = vector.multi_reduction <add>, %463, %cst_84 [0] : vector<8x1xf32> to vector<1xf32>
    %465 = vector.shape_cast %464 : vector<1xf32> to vector<1x1xf32>
    %466 = vector.broadcast %465 : vector<1x1xf32> to vector<8x1xf32>
    %467 = arith.divf %463, %466 : vector<8x1xf32>
    %468 = vector.broadcast %467 : vector<8x1xf32> to vector<8x32xf32>
    %469 = arith.mulf %468, %273 : vector<8x32xf32>
    %cst_85 = arith.constant dense<0.000000e+00> : vector<32xf32>
    %470 = vector.multi_reduction <add>, %469, %cst_85 [0] : vector<8x32xf32> to vector<32xf32>
    %471 = vector.shape_cast %470 : vector<32xf32> to vector<1x32xf32>
    %472 = vector.extract_strided_slice %449 {offsets = [1, 0], sizes = [1, 16], strides = [1, 1]} : vector<2x16xf32> to vector<1x16xf32>
    %473 = vector.broadcast %472 : vector<1x16xf32> to vector<8x16xf32>
    %474 = arith.addf %276, %473 : vector<8x16xf32>
    %475 = math.tanh %474 : vector<8x16xf32>
    %476 = vector.broadcast %272 : vector<1x16xf32> to vector<8x16xf32>
    %477 = arith.mulf %475, %476 : vector<8x16xf32>
    %cst_86 = arith.constant dense<0.000000e+00> : vector<8xf32>
    %478 = vector.multi_reduction <add>, %477, %cst_86 [1] : vector<8x16xf32> to vector<8xf32>
    %479 = vector.shape_cast %478 : vector<8xf32> to vector<8x1xf32>
    %480 = arith.addf %479, %278 : vector<8x1xf32>
    %cst_87 = arith.constant dense<0xFF800000> : vector<1xf32>
    %481 = vector.multi_reduction <maximumf>, %480, %cst_87 [0] : vector<8x1xf32> to vector<1xf32>
    %482 = vector.shape_cast %481 : vector<1xf32> to vector<1x1xf32>
    %483 = vector.broadcast %482 : vector<1x1xf32> to vector<8x1xf32>
    %484 = arith.subf %480, %483 : vector<8x1xf32>
    %485 = math.exp %484 : vector<8x1xf32>
    %cst_88 = arith.constant dense<0.000000e+00> : vector<1xf32>
    %486 = vector.multi_reduction <add>, %485, %cst_88 [0] : vector<8x1xf32> to vector<1xf32>
    %487 = vector.shape_cast %486 : vector<1xf32> to vector<1x1xf32>
    %488 = vector.broadcast %487 : vector<1x1xf32> to vector<8x1xf32>
    %489 = arith.divf %485, %488 : vector<8x1xf32>
    %490 = vector.broadcast %489 : vector<8x1xf32> to vector<8x32xf32>
    %491 = arith.mulf %490, %274 : vector<8x32xf32>
    %cst_89 = arith.constant dense<0.000000e+00> : vector<32xf32>
    %492 = vector.multi_reduction <add>, %491, %cst_89 [0] : vector<8x32xf32> to vector<32xf32>
    %493 = vector.shape_cast %492 : vector<32xf32> to vector<1x32xf32>
    %494 = tpu.concatenate %471, %493 in 0 : vector<1x32xf32>, vector<1x32xf32> -> vector<2x32xf32>
    %cst_90 = arith.constant dense<0.000000e+00> : vector<2x96xf32>
    %495 = tpu.matmul %494, %280, %cst_90 {dimension_numbers = #tpu.dot_dimension_numbers<[1], [0], [0], [1], [0, 0, 1, 1], [], []>} : vector<2x32xf32>, vector<32x96xf32>, vector<2x96xf32> -> vector<2x96xf32>
    %496 = vector.extract_strided_slice %11 {offsets = [4, 0], sizes = [2, 96], strides = [1, 1]} : vector<16x96xf32> to vector<2x96xf32>
    %497 = vector.extract_strided_slice %496 {offsets = [0, 0], sizes = [2, 32], strides = [1, 1]} : vector<2x96xf32> to vector<2x32xf32>
    %498 = vector.extract_strided_slice %495 {offsets = [0, 0], sizes = [2, 32], strides = [1, 1]} : vector<2x96xf32> to vector<2x32xf32>
    %499 = arith.addf %497, %498 : vector<2x32xf32>
    %500 = vector.extract_strided_slice %448 {offsets = [0, 0], sizes = [2, 32], strides = [1, 1]} : vector<2x112xf32> to vector<2x32xf32>
    %501 = arith.addf %499, %500 : vector<2x32xf32>
    %502 = arith.negf %501 : vector<2x32xf32>
    %503 = math.exp %502 : vector<2x32xf32>
    %cst_91 = arith.constant 1.000000e+00 : f32
    %504 = vector.broadcast %cst_91 : f32 to vector<2x32xf32>
    %505 = arith.addf %504, %503 : vector<2x32xf32>
    %506 = arith.divf %504, %505 : vector<2x32xf32>
    %507 = vector.extract_strided_slice %496 {offsets = [0, 32], sizes = [2, 32], strides = [1, 1]} : vector<2x96xf32> to vector<2x32xf32>
    %508 = vector.extract_strided_slice %495 {offsets = [0, 32], sizes = [2, 32], strides = [1, 1]} : vector<2x96xf32> to vector<2x32xf32>
    %509 = arith.addf %507, %508 : vector<2x32xf32>
    %510 = vector.extract_strided_slice %448 {offsets = [0, 32], sizes = [2, 32], strides = [1, 1]} : vector<2x112xf32> to vector<2x32xf32>
    %511 = arith.addf %509, %510 : vector<2x32xf32>
    %512 = arith.negf %511 : vector<2x32xf32>
    %513 = math.exp %512 : vector<2x32xf32>
    %cst_92 = arith.constant 1.000000e+00 : f32
    %514 = vector.broadcast %cst_92 : f32 to vector<2x32xf32>
    %515 = arith.addf %514, %513 : vector<2x32xf32>
    %516 = arith.divf %514, %515 : vector<2x32xf32>
    %517 = vector.extract_strided_slice %496 {offsets = [0, 64], sizes = [2, 32], strides = [1, 1]} : vector<2x96xf32> to vector<2x32xf32>
    %518 = vector.extract_strided_slice %495 {offsets = [0, 64], sizes = [2, 32], strides = [1, 1]} : vector<2x96xf32> to vector<2x32xf32>
    %519 = arith.addf %517, %518 : vector<2x32xf32>
    %520 = vector.extract_strided_slice %448 {offsets = [0, 64], sizes = [2, 32], strides = [1, 1]} : vector<2x112xf32> to vector<2x32xf32>
    %521 = vector.broadcast %281 : vector<1x32xf32> to vector<2x32xf32>
    %522 = arith.addf %520, %521 : vector<2x32xf32>
    %523 = arith.mulf %506, %522 : vector<2x32xf32>
    %524 = arith.addf %519, %523 : vector<2x32xf32>
    %525 = math.tanh %524 : vector<2x32xf32>
    %cst_93 = arith.constant 1.000000e+00 : f32
    %526 = vector.broadcast %cst_93 : f32 to vector<2x32xf32>
    %527 = arith.subf %526, %516 : vector<2x32xf32>
    %528 = arith.mulf %527, %525 : vector<2x32xf32>
    %529 = arith.mulf %516, %447 : vector<2x32xf32>
    %530 = arith.addf %528, %529 : vector<2x32xf32>
    %cst_94 = arith.constant dense<0.000000e+00> : vector<2x112xf32>
    %531 = tpu.matmul %530, %279, %cst_94 {dimension_numbers = #tpu.dot_dimension_numbers<[1], [0], [0], [1], [0, 0, 1, 1], [], []>} : vector<2x32xf32>, vector<32x112xf32>, vector<2x112xf32> -> vector<2x112xf32>
    %532 = vector.extract_strided_slice %531 {offsets = [0, 96], sizes = [2, 16], strides = [1, 1]} : vector<2x112xf32> to vector<2x16xf32>
    %533 = vector.extract_strided_slice %532 {offsets = [0, 0], sizes = [1, 16], strides = [1, 1]} : vector<2x16xf32> to vector<1x16xf32>
    %534 = vector.broadcast %533 : vector<1x16xf32> to vector<8x16xf32>
    %535 = arith.addf %275, %534 : vector<8x16xf32>
    %536 = math.tanh %535 : vector<8x16xf32>
    %537 = vector.broadcast %272 : vector<1x16xf32> to vector<8x16xf32>
    %538 = arith.mulf %536, %537 : vector<8x16xf32>
    %cst_95 = arith.constant dense<0.000000e+00> : vector<8xf32>
    %539 = vector.multi_reduction <add>, %538, %cst_95 [1] : vector<8x16xf32> to vector<8xf32>
    %540 = vector.shape_cast %539 : vector<8xf32> to vector<8x1xf32>
    %541 = arith.addf %540, %277 : vector<8x1xf32>
    %cst_96 = arith.constant dense<0xFF800000> : vector<1xf32>
    %542 = vector.multi_reduction <maximumf>, %541, %cst_96 [0] : vector<8x1xf32> to vector<1xf32>
    %543 = vector.shape_cast %542 : vector<1xf32> to vector<1x1xf32>
    %544 = vector.broadcast %543 : vector<1x1xf32> to vector<8x1xf32>
    %545 = arith.subf %541, %544 : vector<8x1xf32>
    %546 = math.exp %545 : vector<8x1xf32>
    %cst_97 = arith.constant dense<0.000000e+00> : vector<1xf32>
    %547 = vector.multi_reduction <add>, %546, %cst_97 [0] : vector<8x1xf32> to vector<1xf32>
    %548 = vector.shape_cast %547 : vector<1xf32> to vector<1x1xf32>
    %549 = vector.broadcast %548 : vector<1x1xf32> to vector<8x1xf32>
    %550 = arith.divf %546, %549 : vector<8x1xf32>
    %551 = vector.broadcast %550 : vector<8x1xf32> to vector<8x32xf32>
    %552 = arith.mulf %551, %273 : vector<8x32xf32>
    %cst_98 = arith.constant dense<0.000000e+00> : vector<32xf32>
    %553 = vector.multi_reduction <add>, %552, %cst_98 [0] : vector<8x32xf32> to vector<32xf32>
    %554 = vector.shape_cast %553 : vector<32xf32> to vector<1x32xf32>
    %555 = vector.extract_strided_slice %532 {offsets = [1, 0], sizes = [1, 16], strides = [1, 1]} : vector<2x16xf32> to vector<1x16xf32>
    %556 = vector.broadcast %555 : vector<1x16xf32> to vector<8x16xf32>
    %557 = arith.addf %276, %556 : vector<8x16xf32>
    %558 = math.tanh %557 : vector<8x16xf32>
    %559 = vector.broadcast %272 : vector<1x16xf32> to vector<8x16xf32>
    %560 = arith.mulf %558, %559 : vector<8x16xf32>
    %cst_99 = arith.constant dense<0.000000e+00> : vector<8xf32>
    %561 = vector.multi_reduction <add>, %560, %cst_99 [1] : vector<8x16xf32> to vector<8xf32>
    %562 = vector.shape_cast %561 : vector<8xf32> to vector<8x1xf32>
    %563 = arith.addf %562, %278 : vector<8x1xf32>
    %cst_100 = arith.constant dense<0xFF800000> : vector<1xf32>
    %564 = vector.multi_reduction <maximumf>, %563, %cst_100 [0] : vector<8x1xf32> to vector<1xf32>
    %565 = vector.shape_cast %564 : vector<1xf32> to vector<1x1xf32>
    %566 = vector.broadcast %565 : vector<1x1xf32> to vector<8x1xf32>
    %567 = arith.subf %563, %566 : vector<8x1xf32>
    %568 = math.exp %567 : vector<8x1xf32>
    %cst_101 = arith.constant dense<0.000000e+00> : vector<1xf32>
    %569 = vector.multi_reduction <add>, %568, %cst_101 [0] : vector<8x1xf32> to vector<1xf32>
    %570 = vector.shape_cast %569 : vector<1xf32> to vector<1x1xf32>
    %571 = vector.broadcast %570 : vector<1x1xf32> to vector<8x1xf32>
    %572 = arith.divf %568, %571 : vector<8x1xf32>
    %573 = vector.broadcast %572 : vector<8x1xf32> to vector<8x32xf32>
    %574 = arith.mulf %573, %274 : vector<8x32xf32>
    %cst_102 = arith.constant dense<0.000000e+00> : vector<32xf32>
    %575 = vector.multi_reduction <add>, %574, %cst_102 [0] : vector<8x32xf32> to vector<32xf32>
    %576 = vector.shape_cast %575 : vector<32xf32> to vector<1x32xf32>
    %577 = tpu.concatenate %554, %576 in 0 : vector<1x32xf32>, vector<1x32xf32> -> vector<2x32xf32>
    %cst_103 = arith.constant dense<0.000000e+00> : vector<2x96xf32>
    %578 = tpu.matmul %577, %280, %cst_103 {dimension_numbers = #tpu.dot_dimension_numbers<[1], [0], [0], [1], [0, 0, 1, 1], [], []>} : vector<2x32xf32>, vector<32x96xf32>, vector<2x96xf32> -> vector<2x96xf32>
    %579 = vector.extract_strided_slice %11 {offsets = [6, 0], sizes = [2, 96], strides = [1, 1]} : vector<16x96xf32> to vector<2x96xf32>
    %580 = vector.extract_strided_slice %579 {offsets = [0, 0], sizes = [2, 32], strides = [1, 1]} : vector<2x96xf32> to vector<2x32xf32>
    %581 = vector.extract_strided_slice %578 {offsets = [0, 0], sizes = [2, 32], strides = [1, 1]} : vector<2x96xf32> to vector<2x32xf32>
    %582 = arith.addf %580, %581 : vector<2x32xf32>
    %583 = vector.extract_strided_slice %531 {offsets = [0, 0], sizes = [2, 32], strides = [1, 1]} : vector<2x112xf32> to vector<2x32xf32>
    %584 = arith.addf %582, %583 : vector<2x32xf32>
    %585 = arith.negf %584 : vector<2x32xf32>
    %586 = math.exp %585 : vector<2x32xf32>
    %cst_104 = arith.constant 1.000000e+00 : f32
    %587 = vector.broadcast %cst_104 : f32 to vector<2x32xf32>
    %588 = arith.addf %587, %586 : vector<2x32xf32>
    %589 = arith.divf %587, %588 : vector<2x32xf32>
    %590 = vector.extract_strided_slice %579 {offsets = [0, 32], sizes = [2, 32], strides = [1, 1]} : vector<2x96xf32> to vector<2x32xf32>
    %591 = vector.extract_strided_slice %578 {offsets = [0, 32], sizes = [2, 32], strides = [1, 1]} : vector<2x96xf32> to vector<2x32xf32>
    %592 = arith.addf %590, %591 : vector<2x32xf32>
    %593 = vector.extract_strided_slice %531 {offsets = [0, 32], sizes = [2, 32], strides = [1, 1]} : vector<2x112xf32> to vector<2x32xf32>
    %594 = arith.addf %592, %593 : vector<2x32xf32>
    %595 = arith.negf %594 : vector<2x32xf32>
    %596 = math.exp %595 : vector<2x32xf32>
    %cst_105 = arith.constant 1.000000e+00 : f32
    %597 = vector.broadcast %cst_105 : f32 to vector<2x32xf32>
    %598 = arith.addf %597, %596 : vector<2x32xf32>
    %599 = arith.divf %597, %598 : vector<2x32xf32>
    %600 = vector.extract_strided_slice %579 {offsets = [0, 64], sizes = [2, 32], strides = [1, 1]} : vector<2x96xf32> to vector<2x32xf32>
    %601 = vector.extract_strided_slice %578 {offsets = [0, 64], sizes = [2, 32], strides = [1, 1]} : vector<2x96xf32> to vector<2x32xf32>
    %602 = arith.addf %600, %601 : vector<2x32xf32>
    %603 = vector.extract_strided_slice %531 {offsets = [0, 64], sizes = [2, 32], strides = [1, 1]} : vector<2x112xf32> to vector<2x32xf32>
    %604 = vector.broadcast %281 : vector<1x32xf32> to vector<2x32xf32>
    %605 = arith.addf %603, %604 : vector<2x32xf32>
    %606 = arith.mulf %589, %605 : vector<2x32xf32>
    %607 = arith.addf %602, %606 : vector<2x32xf32>
    %608 = math.tanh %607 : vector<2x32xf32>
    %cst_106 = arith.constant 1.000000e+00 : f32
    %609 = vector.broadcast %cst_106 : f32 to vector<2x32xf32>
    %610 = arith.subf %609, %599 : vector<2x32xf32>
    %611 = arith.mulf %610, %608 : vector<2x32xf32>
    %612 = arith.mulf %599, %530 : vector<2x32xf32>
    %613 = arith.addf %611, %612 : vector<2x32xf32>
    %cst_107 = arith.constant dense<0.000000e+00> : vector<2x112xf32>
    %614 = tpu.matmul %613, %279, %cst_107 {dimension_numbers = #tpu.dot_dimension_numbers<[1], [0], [0], [1], [0, 0, 1, 1], [], []>} : vector<2x32xf32>, vector<32x112xf32>, vector<2x112xf32> -> vector<2x112xf32>
    %615 = vector.extract_strided_slice %614 {offsets = [0, 96], sizes = [2, 16], strides = [1, 1]} : vector<2x112xf32> to vector<2x16xf32>
    %616 = vector.extract_strided_slice %615 {offsets = [0, 0], sizes = [1, 16], strides = [1, 1]} : vector<2x16xf32> to vector<1x16xf32>
    %617 = vector.broadcast %616 : vector<1x16xf32> to vector<8x16xf32>
    %618 = arith.addf %275, %617 : vector<8x16xf32>
    %619 = math.tanh %618 : vector<8x16xf32>
    %620 = vector.broadcast %272 : vector<1x16xf32> to vector<8x16xf32>
    %621 = arith.mulf %619, %620 : vector<8x16xf32>
    %cst_108 = arith.constant dense<0.000000e+00> : vector<8xf32>
    %622 = vector.multi_reduction <add>, %621, %cst_108 [1] : vector<8x16xf32> to vector<8xf32>
    %623 = vector.shape_cast %622 : vector<8xf32> to vector<8x1xf32>
    %624 = arith.addf %623, %277 : vector<8x1xf32>
    %cst_109 = arith.constant dense<0xFF800000> : vector<1xf32>
    %625 = vector.multi_reduction <maximumf>, %624, %cst_109 [0] : vector<8x1xf32> to vector<1xf32>
    %626 = vector.shape_cast %625 : vector<1xf32> to vector<1x1xf32>
    %627 = vector.broadcast %626 : vector<1x1xf32> to vector<8x1xf32>
    %628 = arith.subf %624, %627 : vector<8x1xf32>
    %629 = math.exp %628 : vector<8x1xf32>
    %cst_110 = arith.constant dense<0.000000e+00> : vector<1xf32>
    %630 = vector.multi_reduction <add>, %629, %cst_110 [0] : vector<8x1xf32> to vector<1xf32>
    %631 = vector.shape_cast %630 : vector<1xf32> to vector<1x1xf32>
    %632 = vector.broadcast %631 : vector<1x1xf32> to vector<8x1xf32>
    %633 = arith.divf %629, %632 : vector<8x1xf32>
    %634 = vector.broadcast %633 : vector<8x1xf32> to vector<8x32xf32>
    %635 = arith.mulf %634, %273 : vector<8x32xf32>
    %cst_111 = arith.constant dense<0.000000e+00> : vector<32xf32>
    %636 = vector.multi_reduction <add>, %635, %cst_111 [0] : vector<8x32xf32> to vector<32xf32>
    %637 = vector.shape_cast %636 : vector<32xf32> to vector<1x32xf32>
    %638 = vector.extract_strided_slice %615 {offsets = [1, 0], sizes = [1, 16], strides = [1, 1]} : vector<2x16xf32> to vector<1x16xf32>
    %639 = vector.broadcast %638 : vector<1x16xf32> to vector<8x16xf32>
    %640 = arith.addf %276, %639 : vector<8x16xf32>
    %641 = math.tanh %640 : vector<8x16xf32>
    %642 = vector.broadcast %272 : vector<1x16xf32> to vector<8x16xf32>
    %643 = arith.mulf %641, %642 : vector<8x16xf32>
    %cst_112 = arith.constant dense<0.000000e+00> : vector<8xf32>
    %644 = vector.multi_reduction <add>, %643, %cst_112 [1] : vector<8x16xf32> to vector<8xf32>
    %645 = vector.shape_cast %644 : vector<8xf32> to vector<8x1xf32>
    %646 = arith.addf %645, %278 : vector<8x1xf32>
    %cst_113 = arith.constant dense<0xFF800000> : vector<1xf32>
    %647 = vector.multi_reduction <maximumf>, %646, %cst_113 [0] : vector<8x1xf32> to vector<1xf32>
    %648 = vector.shape_cast %647 : vector<1xf32> to vector<1x1xf32>
    %649 = vector.broadcast %648 : vector<1x1xf32> to vector<8x1xf32>
    %650 = arith.subf %646, %649 : vector<8x1xf32>
    %651 = math.exp %650 : vector<8x1xf32>
    %cst_114 = arith.constant dense<0.000000e+00> : vector<1xf32>
    %652 = vector.multi_reduction <add>, %651, %cst_114 [0] : vector<8x1xf32> to vector<1xf32>
    %653 = vector.shape_cast %652 : vector<1xf32> to vector<1x1xf32>
    %654 = vector.broadcast %653 : vector<1x1xf32> to vector<8x1xf32>
    %655 = arith.divf %651, %654 : vector<8x1xf32>
    %656 = vector.broadcast %655 : vector<8x1xf32> to vector<8x32xf32>
    %657 = arith.mulf %656, %274 : vector<8x32xf32>
    %cst_115 = arith.constant dense<0.000000e+00> : vector<32xf32>
    %658 = vector.multi_reduction <add>, %657, %cst_115 [0] : vector<8x32xf32> to vector<32xf32>
    %659 = vector.shape_cast %658 : vector<32xf32> to vector<1x32xf32>
    %660 = tpu.concatenate %637, %659 in 0 : vector<1x32xf32>, vector<1x32xf32> -> vector<2x32xf32>
    %cst_116 = arith.constant dense<0.000000e+00> : vector<2x96xf32>
    %661 = tpu.matmul %660, %280, %cst_116 {dimension_numbers = #tpu.dot_dimension_numbers<[1], [0], [0], [1], [0, 0, 1, 1], [], []>} : vector<2x32xf32>, vector<32x96xf32>, vector<2x96xf32> -> vector<2x96xf32>
    %662 = vector.extract_strided_slice %11 {offsets = [8, 0], sizes = [2, 96], strides = [1, 1]} : vector<16x96xf32> to vector<2x96xf32>
    %663 = vector.extract_strided_slice %662 {offsets = [0, 0], sizes = [2, 32], strides = [1, 1]} : vector<2x96xf32> to vector<2x32xf32>
    %664 = vector.extract_strided_slice %661 {offsets = [0, 0], sizes = [2, 32], strides = [1, 1]} : vector<2x96xf32> to vector<2x32xf32>
    %665 = arith.addf %663, %664 : vector<2x32xf32>
    %666 = vector.extract_strided_slice %614 {offsets = [0, 0], sizes = [2, 32], strides = [1, 1]} : vector<2x112xf32> to vector<2x32xf32>
    %667 = arith.addf %665, %666 : vector<2x32xf32>
    %668 = arith.negf %667 : vector<2x32xf32>
    %669 = math.exp %668 : vector<2x32xf32>
    %cst_117 = arith.constant 1.000000e+00 : f32
    %670 = vector.broadcast %cst_117 : f32 to vector<2x32xf32>
    %671 = arith.addf %670, %669 : vector<2x32xf32>
    %672 = arith.divf %670, %671 : vector<2x32xf32>
    %673 = vector.extract_strided_slice %662 {offsets = [0, 32], sizes = [2, 32], strides = [1, 1]} : vector<2x96xf32> to vector<2x32xf32>
    %674 = vector.extract_strided_slice %661 {offsets = [0, 32], sizes = [2, 32], strides = [1, 1]} : vector<2x96xf32> to vector<2x32xf32>
    %675 = arith.addf %673, %674 : vector<2x32xf32>
    %676 = vector.extract_strided_slice %614 {offsets = [0, 32], sizes = [2, 32], strides = [1, 1]} : vector<2x112xf32> to vector<2x32xf32>
    %677 = arith.addf %675, %676 : vector<2x32xf32>
    %678 = arith.negf %677 : vector<2x32xf32>
    %679 = math.exp %678 : vector<2x32xf32>
    %cst_118 = arith.constant 1.000000e+00 : f32
    %680 = vector.broadcast %cst_118 : f32 to vector<2x32xf32>
    %681 = arith.addf %680, %679 : vector<2x32xf32>
    %682 = arith.divf %680, %681 : vector<2x32xf32>
    %683 = vector.extract_strided_slice %662 {offsets = [0, 64], sizes = [2, 32], strides = [1, 1]} : vector<2x96xf32> to vector<2x32xf32>
    %684 = vector.extract_strided_slice %661 {offsets = [0, 64], sizes = [2, 32], strides = [1, 1]} : vector<2x96xf32> to vector<2x32xf32>
    %685 = arith.addf %683, %684 : vector<2x32xf32>
    %686 = vector.extract_strided_slice %614 {offsets = [0, 64], sizes = [2, 32], strides = [1, 1]} : vector<2x112xf32> to vector<2x32xf32>
    %687 = vector.broadcast %281 : vector<1x32xf32> to vector<2x32xf32>
    %688 = arith.addf %686, %687 : vector<2x32xf32>
    %689 = arith.mulf %672, %688 : vector<2x32xf32>
    %690 = arith.addf %685, %689 : vector<2x32xf32>
    %691 = math.tanh %690 : vector<2x32xf32>
    %cst_119 = arith.constant 1.000000e+00 : f32
    %692 = vector.broadcast %cst_119 : f32 to vector<2x32xf32>
    %693 = arith.subf %692, %682 : vector<2x32xf32>
    %694 = arith.mulf %693, %691 : vector<2x32xf32>
    %695 = arith.mulf %682, %613 : vector<2x32xf32>
    %696 = arith.addf %694, %695 : vector<2x32xf32>
    %cst_120 = arith.constant dense<0.000000e+00> : vector<2x112xf32>
    %697 = tpu.matmul %696, %279, %cst_120 {dimension_numbers = #tpu.dot_dimension_numbers<[1], [0], [0], [1], [0, 0, 1, 1], [], []>} : vector<2x32xf32>, vector<32x112xf32>, vector<2x112xf32> -> vector<2x112xf32>
    %698 = vector.extract_strided_slice %697 {offsets = [0, 96], sizes = [2, 16], strides = [1, 1]} : vector<2x112xf32> to vector<2x16xf32>
    %699 = vector.extract_strided_slice %698 {offsets = [0, 0], sizes = [1, 16], strides = [1, 1]} : vector<2x16xf32> to vector<1x16xf32>
    %700 = vector.broadcast %699 : vector<1x16xf32> to vector<8x16xf32>
    %701 = arith.addf %275, %700 : vector<8x16xf32>
    %702 = math.tanh %701 : vector<8x16xf32>
    %703 = vector.broadcast %272 : vector<1x16xf32> to vector<8x16xf32>
    %704 = arith.mulf %702, %703 : vector<8x16xf32>
    %cst_121 = arith.constant dense<0.000000e+00> : vector<8xf32>
    %705 = vector.multi_reduction <add>, %704, %cst_121 [1] : vector<8x16xf32> to vector<8xf32>
    %706 = vector.shape_cast %705 : vector<8xf32> to vector<8x1xf32>
    %707 = arith.addf %706, %277 : vector<8x1xf32>
    %cst_122 = arith.constant dense<0xFF800000> : vector<1xf32>
    %708 = vector.multi_reduction <maximumf>, %707, %cst_122 [0] : vector<8x1xf32> to vector<1xf32>
    %709 = vector.shape_cast %708 : vector<1xf32> to vector<1x1xf32>
    %710 = vector.broadcast %709 : vector<1x1xf32> to vector<8x1xf32>
    %711 = arith.subf %707, %710 : vector<8x1xf32>
    %712 = math.exp %711 : vector<8x1xf32>
    %cst_123 = arith.constant dense<0.000000e+00> : vector<1xf32>
    %713 = vector.multi_reduction <add>, %712, %cst_123 [0] : vector<8x1xf32> to vector<1xf32>
    %714 = vector.shape_cast %713 : vector<1xf32> to vector<1x1xf32>
    %715 = vector.broadcast %714 : vector<1x1xf32> to vector<8x1xf32>
    %716 = arith.divf %712, %715 : vector<8x1xf32>
    %717 = vector.broadcast %716 : vector<8x1xf32> to vector<8x32xf32>
    %718 = arith.mulf %717, %273 : vector<8x32xf32>
    %cst_124 = arith.constant dense<0.000000e+00> : vector<32xf32>
    %719 = vector.multi_reduction <add>, %718, %cst_124 [0] : vector<8x32xf32> to vector<32xf32>
    %720 = vector.shape_cast %719 : vector<32xf32> to vector<1x32xf32>
    %721 = vector.extract_strided_slice %698 {offsets = [1, 0], sizes = [1, 16], strides = [1, 1]} : vector<2x16xf32> to vector<1x16xf32>
    %722 = vector.broadcast %721 : vector<1x16xf32> to vector<8x16xf32>
    %723 = arith.addf %276, %722 : vector<8x16xf32>
    %724 = math.tanh %723 : vector<8x16xf32>
    %725 = vector.broadcast %272 : vector<1x16xf32> to vector<8x16xf32>
    %726 = arith.mulf %724, %725 : vector<8x16xf32>
    %cst_125 = arith.constant dense<0.000000e+00> : vector<8xf32>
    %727 = vector.multi_reduction <add>, %726, %cst_125 [1] : vector<8x16xf32> to vector<8xf32>
    %728 = vector.shape_cast %727 : vector<8xf32> to vector<8x1xf32>
    %729 = arith.addf %728, %278 : vector<8x1xf32>
    %cst_126 = arith.constant dense<0xFF800000> : vector<1xf32>
    %730 = vector.multi_reduction <maximumf>, %729, %cst_126 [0] : vector<8x1xf32> to vector<1xf32>
    %731 = vector.shape_cast %730 : vector<1xf32> to vector<1x1xf32>
    %732 = vector.broadcast %731 : vector<1x1xf32> to vector<8x1xf32>
    %733 = arith.subf %729, %732 : vector<8x1xf32>
    %734 = math.exp %733 : vector<8x1xf32>
    %cst_127 = arith.constant dense<0.000000e+00> : vector<1xf32>
    %735 = vector.multi_reduction <add>, %734, %cst_127 [0] : vector<8x1xf32> to vector<1xf32>
    %736 = vector.shape_cast %735 : vector<1xf32> to vector<1x1xf32>
    %737 = vector.broadcast %736 : vector<1x1xf32> to vector<8x1xf32>
    %738 = arith.divf %734, %737 : vector<8x1xf32>
    %739 = vector.broadcast %738 : vector<8x1xf32> to vector<8x32xf32>
    %740 = arith.mulf %739, %274 : vector<8x32xf32>
    %cst_128 = arith.constant dense<0.000000e+00> : vector<32xf32>
    %741 = vector.multi_reduction <add>, %740, %cst_128 [0] : vector<8x32xf32> to vector<32xf32>
    %742 = vector.shape_cast %741 : vector<32xf32> to vector<1x32xf32>
    %743 = tpu.concatenate %720, %742 in 0 : vector<1x32xf32>, vector<1x32xf32> -> vector<2x32xf32>
    %cst_129 = arith.constant dense<0.000000e+00> : vector<2x96xf32>
    %744 = tpu.matmul %743, %280, %cst_129 {dimension_numbers = #tpu.dot_dimension_numbers<[1], [0], [0], [1], [0, 0, 1, 1], [], []>} : vector<2x32xf32>, vector<32x96xf32>, vector<2x96xf32> -> vector<2x96xf32>
    %745 = vector.extract_strided_slice %11 {offsets = [10, 0], sizes = [2, 96], strides = [1, 1]} : vector<16x96xf32> to vector<2x96xf32>
    %746 = vector.extract_strided_slice %745 {offsets = [0, 0], sizes = [2, 32], strides = [1, 1]} : vector<2x96xf32> to vector<2x32xf32>
    %747 = vector.extract_strided_slice %744 {offsets = [0, 0], sizes = [2, 32], strides = [1, 1]} : vector<2x96xf32> to vector<2x32xf32>
    %748 = arith.addf %746, %747 : vector<2x32xf32>
    %749 = vector.extract_strided_slice %697 {offsets = [0, 0], sizes = [2, 32], strides = [1, 1]} : vector<2x112xf32> to vector<2x32xf32>
    %750 = arith.addf %748, %749 : vector<2x32xf32>
    %751 = arith.negf %750 : vector<2x32xf32>
    %752 = math.exp %751 : vector<2x32xf32>
    %cst_130 = arith.constant 1.000000e+00 : f32
    %753 = vector.broadcast %cst_130 : f32 to vector<2x32xf32>
    %754 = arith.addf %753, %752 : vector<2x32xf32>
    %755 = arith.divf %753, %754 : vector<2x32xf32>
    %756 = vector.extract_strided_slice %745 {offsets = [0, 32], sizes = [2, 32], strides = [1, 1]} : vector<2x96xf32> to vector<2x32xf32>
    %757 = vector.extract_strided_slice %744 {offsets = [0, 32], sizes = [2, 32], strides = [1, 1]} : vector<2x96xf32> to vector<2x32xf32>
    %758 = arith.addf %756, %757 : vector<2x32xf32>
    %759 = vector.extract_strided_slice %697 {offsets = [0, 32], sizes = [2, 32], strides = [1, 1]} : vector<2x112xf32> to vector<2x32xf32>
    %760 = arith.addf %758, %759 : vector<2x32xf32>
    %761 = arith.negf %760 : vector<2x32xf32>
    %762 = math.exp %761 : vector<2x32xf32>
    %cst_131 = arith.constant 1.000000e+00 : f32
    %763 = vector.broadcast %cst_131 : f32 to vector<2x32xf32>
    %764 = arith.addf %763, %762 : vector<2x32xf32>
    %765 = arith.divf %763, %764 : vector<2x32xf32>
    %766 = vector.extract_strided_slice %745 {offsets = [0, 64], sizes = [2, 32], strides = [1, 1]} : vector<2x96xf32> to vector<2x32xf32>
    %767 = vector.extract_strided_slice %744 {offsets = [0, 64], sizes = [2, 32], strides = [1, 1]} : vector<2x96xf32> to vector<2x32xf32>
    %768 = arith.addf %766, %767 : vector<2x32xf32>
    %769 = vector.extract_strided_slice %697 {offsets = [0, 64], sizes = [2, 32], strides = [1, 1]} : vector<2x112xf32> to vector<2x32xf32>
    %770 = vector.broadcast %281 : vector<1x32xf32> to vector<2x32xf32>
    %771 = arith.addf %769, %770 : vector<2x32xf32>
    %772 = arith.mulf %755, %771 : vector<2x32xf32>
    %773 = arith.addf %768, %772 : vector<2x32xf32>
    %774 = math.tanh %773 : vector<2x32xf32>
    %cst_132 = arith.constant 1.000000e+00 : f32
    %775 = vector.broadcast %cst_132 : f32 to vector<2x32xf32>
    %776 = arith.subf %775, %765 : vector<2x32xf32>
    %777 = arith.mulf %776, %774 : vector<2x32xf32>
    %778 = arith.mulf %765, %696 : vector<2x32xf32>
    %779 = arith.addf %777, %778 : vector<2x32xf32>
    %cst_133 = arith.constant dense<0.000000e+00> : vector<2x112xf32>
    %780 = tpu.matmul %779, %279, %cst_133 {dimension_numbers = #tpu.dot_dimension_numbers<[1], [0], [0], [1], [0, 0, 1, 1], [], []>} : vector<2x32xf32>, vector<32x112xf32>, vector<2x112xf32> -> vector<2x112xf32>
    %781 = vector.extract_strided_slice %780 {offsets = [0, 96], sizes = [2, 16], strides = [1, 1]} : vector<2x112xf32> to vector<2x16xf32>
    %782 = vector.extract_strided_slice %781 {offsets = [0, 0], sizes = [1, 16], strides = [1, 1]} : vector<2x16xf32> to vector<1x16xf32>
    %783 = vector.broadcast %782 : vector<1x16xf32> to vector<8x16xf32>
    %784 = arith.addf %275, %783 : vector<8x16xf32>
    %785 = math.tanh %784 : vector<8x16xf32>
    %786 = vector.broadcast %272 : vector<1x16xf32> to vector<8x16xf32>
    %787 = arith.mulf %785, %786 : vector<8x16xf32>
    %cst_134 = arith.constant dense<0.000000e+00> : vector<8xf32>
    %788 = vector.multi_reduction <add>, %787, %cst_134 [1] : vector<8x16xf32> to vector<8xf32>
    %789 = vector.shape_cast %788 : vector<8xf32> to vector<8x1xf32>
    %790 = arith.addf %789, %277 : vector<8x1xf32>
    %cst_135 = arith.constant dense<0xFF800000> : vector<1xf32>
    %791 = vector.multi_reduction <maximumf>, %790, %cst_135 [0] : vector<8x1xf32> to vector<1xf32>
    %792 = vector.shape_cast %791 : vector<1xf32> to vector<1x1xf32>
    %793 = vector.broadcast %792 : vector<1x1xf32> to vector<8x1xf32>
    %794 = arith.subf %790, %793 : vector<8x1xf32>
    %795 = math.exp %794 : vector<8x1xf32>
    %cst_136 = arith.constant dense<0.000000e+00> : vector<1xf32>
    %796 = vector.multi_reduction <add>, %795, %cst_136 [0] : vector<8x1xf32> to vector<1xf32>
    %797 = vector.shape_cast %796 : vector<1xf32> to vector<1x1xf32>
    %798 = vector.broadcast %797 : vector<1x1xf32> to vector<8x1xf32>
    %799 = arith.divf %795, %798 : vector<8x1xf32>
    %800 = vector.broadcast %799 : vector<8x1xf32> to vector<8x32xf32>
    %801 = arith.mulf %800, %273 : vector<8x32xf32>
    %cst_137 = arith.constant dense<0.000000e+00> : vector<32xf32>
    %802 = vector.multi_reduction <add>, %801, %cst_137 [0] : vector<8x32xf32> to vector<32xf32>
    %803 = vector.shape_cast %802 : vector<32xf32> to vector<1x32xf32>
    %804 = vector.extract_strided_slice %781 {offsets = [1, 0], sizes = [1, 16], strides = [1, 1]} : vector<2x16xf32> to vector<1x16xf32>
    %805 = vector.broadcast %804 : vector<1x16xf32> to vector<8x16xf32>
    %806 = arith.addf %276, %805 : vector<8x16xf32>
    %807 = math.tanh %806 : vector<8x16xf32>
    %808 = vector.broadcast %272 : vector<1x16xf32> to vector<8x16xf32>
    %809 = arith.mulf %807, %808 : vector<8x16xf32>
    %cst_138 = arith.constant dense<0.000000e+00> : vector<8xf32>
    %810 = vector.multi_reduction <add>, %809, %cst_138 [1] : vector<8x16xf32> to vector<8xf32>
    %811 = vector.shape_cast %810 : vector<8xf32> to vector<8x1xf32>
    %812 = arith.addf %811, %278 : vector<8x1xf32>
    %cst_139 = arith.constant dense<0xFF800000> : vector<1xf32>
    %813 = vector.multi_reduction <maximumf>, %812, %cst_139 [0] : vector<8x1xf32> to vector<1xf32>
    %814 = vector.shape_cast %813 : vector<1xf32> to vector<1x1xf32>
    %815 = vector.broadcast %814 : vector<1x1xf32> to vector<8x1xf32>
    %816 = arith.subf %812, %815 : vector<8x1xf32>
    %817 = math.exp %816 : vector<8x1xf32>
    %cst_140 = arith.constant dense<0.000000e+00> : vector<1xf32>
    %818 = vector.multi_reduction <add>, %817, %cst_140 [0] : vector<8x1xf32> to vector<1xf32>
    %819 = vector.shape_cast %818 : vector<1xf32> to vector<1x1xf32>
    %820 = vector.broadcast %819 : vector<1x1xf32> to vector<8x1xf32>
    %821 = arith.divf %817, %820 : vector<8x1xf32>
    %822 = vector.broadcast %821 : vector<8x1xf32> to vector<8x32xf32>
    %823 = arith.mulf %822, %274 : vector<8x32xf32>
    %cst_141 = arith.constant dense<0.000000e+00> : vector<32xf32>
    %824 = vector.multi_reduction <add>, %823, %cst_141 [0] : vector<8x32xf32> to vector<32xf32>
    %825 = vector.shape_cast %824 : vector<32xf32> to vector<1x32xf32>
    %826 = tpu.concatenate %803, %825 in 0 : vector<1x32xf32>, vector<1x32xf32> -> vector<2x32xf32>
    %cst_142 = arith.constant dense<0.000000e+00> : vector<2x96xf32>
    %827 = tpu.matmul %826, %280, %cst_142 {dimension_numbers = #tpu.dot_dimension_numbers<[1], [0], [0], [1], [0, 0, 1, 1], [], []>} : vector<2x32xf32>, vector<32x96xf32>, vector<2x96xf32> -> vector<2x96xf32>
    %828 = vector.extract_strided_slice %11 {offsets = [12, 0], sizes = [2, 96], strides = [1, 1]} : vector<16x96xf32> to vector<2x96xf32>
    %829 = vector.extract_strided_slice %828 {offsets = [0, 0], sizes = [2, 32], strides = [1, 1]} : vector<2x96xf32> to vector<2x32xf32>
    %830 = vector.extract_strided_slice %827 {offsets = [0, 0], sizes = [2, 32], strides = [1, 1]} : vector<2x96xf32> to vector<2x32xf32>
    %831 = arith.addf %829, %830 : vector<2x32xf32>
    %832 = vector.extract_strided_slice %780 {offsets = [0, 0], sizes = [2, 32], strides = [1, 1]} : vector<2x112xf32> to vector<2x32xf32>
    %833 = arith.addf %831, %832 : vector<2x32xf32>
    %834 = arith.negf %833 : vector<2x32xf32>
    %835 = math.exp %834 : vector<2x32xf32>
    %cst_143 = arith.constant 1.000000e+00 : f32
    %836 = vector.broadcast %cst_143 : f32 to vector<2x32xf32>
    %837 = arith.addf %836, %835 : vector<2x32xf32>
    %838 = arith.divf %836, %837 : vector<2x32xf32>
    %839 = vector.extract_strided_slice %828 {offsets = [0, 32], sizes = [2, 32], strides = [1, 1]} : vector<2x96xf32> to vector<2x32xf32>
    %840 = vector.extract_strided_slice %827 {offsets = [0, 32], sizes = [2, 32], strides = [1, 1]} : vector<2x96xf32> to vector<2x32xf32>
    %841 = arith.addf %839, %840 : vector<2x32xf32>
    %842 = vector.extract_strided_slice %780 {offsets = [0, 32], sizes = [2, 32], strides = [1, 1]} : vector<2x112xf32> to vector<2x32xf32>
    %843 = arith.addf %841, %842 : vector<2x32xf32>
    %844 = arith.negf %843 : vector<2x32xf32>
    %845 = math.exp %844 : vector<2x32xf32>
    %cst_144 = arith.constant 1.000000e+00 : f32
    %846 = vector.broadcast %cst_144 : f32 to vector<2x32xf32>
    %847 = arith.addf %846, %845 : vector<2x32xf32>
    %848 = arith.divf %846, %847 : vector<2x32xf32>
    %849 = vector.extract_strided_slice %828 {offsets = [0, 64], sizes = [2, 32], strides = [1, 1]} : vector<2x96xf32> to vector<2x32xf32>
    %850 = vector.extract_strided_slice %827 {offsets = [0, 64], sizes = [2, 32], strides = [1, 1]} : vector<2x96xf32> to vector<2x32xf32>
    %851 = arith.addf %849, %850 : vector<2x32xf32>
    %852 = vector.extract_strided_slice %780 {offsets = [0, 64], sizes = [2, 32], strides = [1, 1]} : vector<2x112xf32> to vector<2x32xf32>
    %853 = vector.broadcast %281 : vector<1x32xf32> to vector<2x32xf32>
    %854 = arith.addf %852, %853 : vector<2x32xf32>
    %855 = arith.mulf %838, %854 : vector<2x32xf32>
    %856 = arith.addf %851, %855 : vector<2x32xf32>
    %857 = math.tanh %856 : vector<2x32xf32>
    %cst_145 = arith.constant 1.000000e+00 : f32
    %858 = vector.broadcast %cst_145 : f32 to vector<2x32xf32>
    %859 = arith.subf %858, %848 : vector<2x32xf32>
    %860 = arith.mulf %859, %857 : vector<2x32xf32>
    %861 = arith.mulf %848, %779 : vector<2x32xf32>
    %862 = arith.addf %860, %861 : vector<2x32xf32>
    %cst_146 = arith.constant dense<0.000000e+00> : vector<2x112xf32>
    %863 = tpu.matmul %862, %279, %cst_146 {dimension_numbers = #tpu.dot_dimension_numbers<[1], [0], [0], [1], [0, 0, 1, 1], [], []>} : vector<2x32xf32>, vector<32x112xf32>, vector<2x112xf32> -> vector<2x112xf32>
    %864 = vector.extract_strided_slice %863 {offsets = [0, 96], sizes = [2, 16], strides = [1, 1]} : vector<2x112xf32> to vector<2x16xf32>
    %865 = vector.extract_strided_slice %864 {offsets = [0, 0], sizes = [1, 16], strides = [1, 1]} : vector<2x16xf32> to vector<1x16xf32>
    %866 = vector.broadcast %865 : vector<1x16xf32> to vector<8x16xf32>
    %867 = arith.addf %275, %866 : vector<8x16xf32>
    %868 = math.tanh %867 : vector<8x16xf32>
    %869 = vector.broadcast %272 : vector<1x16xf32> to vector<8x16xf32>
    %870 = arith.mulf %868, %869 : vector<8x16xf32>
    %cst_147 = arith.constant dense<0.000000e+00> : vector<8xf32>
    %871 = vector.multi_reduction <add>, %870, %cst_147 [1] : vector<8x16xf32> to vector<8xf32>
    %872 = vector.shape_cast %871 : vector<8xf32> to vector<8x1xf32>
    %873 = arith.addf %872, %277 : vector<8x1xf32>
    %cst_148 = arith.constant dense<0xFF800000> : vector<1xf32>
    %874 = vector.multi_reduction <maximumf>, %873, %cst_148 [0] : vector<8x1xf32> to vector<1xf32>
    %875 = vector.shape_cast %874 : vector<1xf32> to vector<1x1xf32>
    %876 = vector.broadcast %875 : vector<1x1xf32> to vector<8x1xf32>
    %877 = arith.subf %873, %876 : vector<8x1xf32>
    %878 = math.exp %877 : vector<8x1xf32>
    %cst_149 = arith.constant dense<0.000000e+00> : vector<1xf32>
    %879 = vector.multi_reduction <add>, %878, %cst_149 [0] : vector<8x1xf32> to vector<1xf32>
    %880 = vector.shape_cast %879 : vector<1xf32> to vector<1x1xf32>
    %881 = vector.broadcast %880 : vector<1x1xf32> to vector<8x1xf32>
    %882 = arith.divf %878, %881 : vector<8x1xf32>
    %883 = vector.broadcast %882 : vector<8x1xf32> to vector<8x32xf32>
    %884 = arith.mulf %883, %273 : vector<8x32xf32>
    %cst_150 = arith.constant dense<0.000000e+00> : vector<32xf32>
    %885 = vector.multi_reduction <add>, %884, %cst_150 [0] : vector<8x32xf32> to vector<32xf32>
    %886 = vector.shape_cast %885 : vector<32xf32> to vector<1x32xf32>
    %887 = vector.extract_strided_slice %864 {offsets = [1, 0], sizes = [1, 16], strides = [1, 1]} : vector<2x16xf32> to vector<1x16xf32>
    %888 = vector.broadcast %887 : vector<1x16xf32> to vector<8x16xf32>
    %889 = arith.addf %276, %888 : vector<8x16xf32>
    %890 = math.tanh %889 : vector<8x16xf32>
    %891 = vector.broadcast %272 : vector<1x16xf32> to vector<8x16xf32>
    %892 = arith.mulf %890, %891 : vector<8x16xf32>
    %cst_151 = arith.constant dense<0.000000e+00> : vector<8xf32>
    %893 = vector.multi_reduction <add>, %892, %cst_151 [1] : vector<8x16xf32> to vector<8xf32>
    %894 = vector.shape_cast %893 : vector<8xf32> to vector<8x1xf32>
    %895 = arith.addf %894, %278 : vector<8x1xf32>
    %cst_152 = arith.constant dense<0xFF800000> : vector<1xf32>
    %896 = vector.multi_reduction <maximumf>, %895, %cst_152 [0] : vector<8x1xf32> to vector<1xf32>
    %897 = vector.shape_cast %896 : vector<1xf32> to vector<1x1xf32>
    %898 = vector.broadcast %897 : vector<1x1xf32> to vector<8x1xf32>
    %899 = arith.subf %895, %898 : vector<8x1xf32>
    %900 = math.exp %899 : vector<8x1xf32>
    %cst_153 = arith.constant dense<0.000000e+00> : vector<1xf32>
    %901 = vector.multi_reduction <add>, %900, %cst_153 [0] : vector<8x1xf32> to vector<1xf32>
    %902 = vector.shape_cast %901 : vector<1xf32> to vector<1x1xf32>
    %903 = vector.broadcast %902 : vector<1x1xf32> to vector<8x1xf32>
    %904 = arith.divf %900, %903 : vector<8x1xf32>
    %905 = vector.broadcast %904 : vector<8x1xf32> to vector<8x32xf32>
    %906 = arith.mulf %905, %274 : vector<8x32xf32>
    %cst_154 = arith.constant dense<0.000000e+00> : vector<32xf32>
    %907 = vector.multi_reduction <add>, %906, %cst_154 [0] : vector<8x32xf32> to vector<32xf32>
    %908 = vector.shape_cast %907 : vector<32xf32> to vector<1x32xf32>
    %909 = tpu.concatenate %886, %908 in 0 : vector<1x32xf32>, vector<1x32xf32> -> vector<2x32xf32>
    %cst_155 = arith.constant dense<0.000000e+00> : vector<2x96xf32>
    %910 = tpu.matmul %909, %280, %cst_155 {dimension_numbers = #tpu.dot_dimension_numbers<[1], [0], [0], [1], [0, 0, 1, 1], [], []>} : vector<2x32xf32>, vector<32x96xf32>, vector<2x96xf32> -> vector<2x96xf32>
    %911 = vector.extract_strided_slice %11 {offsets = [14, 0], sizes = [2, 96], strides = [1, 1]} : vector<16x96xf32> to vector<2x96xf32>
    %912 = vector.extract_strided_slice %911 {offsets = [0, 0], sizes = [2, 32], strides = [1, 1]} : vector<2x96xf32> to vector<2x32xf32>
    %913 = vector.extract_strided_slice %910 {offsets = [0, 0], sizes = [2, 32], strides = [1, 1]} : vector<2x96xf32> to vector<2x32xf32>
    %914 = arith.addf %912, %913 : vector<2x32xf32>
    %915 = vector.extract_strided_slice %863 {offsets = [0, 0], sizes = [2, 32], strides = [1, 1]} : vector<2x112xf32> to vector<2x32xf32>
    %916 = arith.addf %914, %915 : vector<2x32xf32>
    %917 = arith.negf %916 : vector<2x32xf32>
    %918 = math.exp %917 : vector<2x32xf32>
    %cst_156 = arith.constant 1.000000e+00 : f32
    %919 = vector.broadcast %cst_156 : f32 to vector<2x32xf32>
    %920 = arith.addf %919, %918 : vector<2x32xf32>
    %921 = arith.divf %919, %920 : vector<2x32xf32>
    %922 = vector.extract_strided_slice %911 {offsets = [0, 32], sizes = [2, 32], strides = [1, 1]} : vector<2x96xf32> to vector<2x32xf32>
    %923 = vector.extract_strided_slice %910 {offsets = [0, 32], sizes = [2, 32], strides = [1, 1]} : vector<2x96xf32> to vector<2x32xf32>
    %924 = arith.addf %922, %923 : vector<2x32xf32>
    %925 = vector.extract_strided_slice %863 {offsets = [0, 32], sizes = [2, 32], strides = [1, 1]} : vector<2x112xf32> to vector<2x32xf32>
    %926 = arith.addf %924, %925 : vector<2x32xf32>
    %927 = arith.negf %926 : vector<2x32xf32>
    %928 = math.exp %927 : vector<2x32xf32>
    %cst_157 = arith.constant 1.000000e+00 : f32
    %929 = vector.broadcast %cst_157 : f32 to vector<2x32xf32>
    %930 = arith.addf %929, %928 : vector<2x32xf32>
    %931 = arith.divf %929, %930 : vector<2x32xf32>
    %932 = vector.extract_strided_slice %911 {offsets = [0, 64], sizes = [2, 32], strides = [1, 1]} : vector<2x96xf32> to vector<2x32xf32>
    %933 = vector.extract_strided_slice %910 {offsets = [0, 64], sizes = [2, 32], strides = [1, 1]} : vector<2x96xf32> to vector<2x32xf32>
    %934 = arith.addf %932, %933 : vector<2x32xf32>
    %935 = vector.extract_strided_slice %863 {offsets = [0, 64], sizes = [2, 32], strides = [1, 1]} : vector<2x112xf32> to vector<2x32xf32>
    %936 = vector.broadcast %281 : vector<1x32xf32> to vector<2x32xf32>
    %937 = arith.addf %935, %936 : vector<2x32xf32>
    %938 = arith.mulf %921, %937 : vector<2x32xf32>
    %939 = arith.addf %934, %938 : vector<2x32xf32>
    %940 = math.tanh %939 : vector<2x32xf32>
    %cst_158 = arith.constant 1.000000e+00 : f32
    %941 = vector.broadcast %cst_158 : f32 to vector<2x32xf32>
    %942 = arith.subf %941, %931 : vector<2x32xf32>
    %943 = arith.mulf %942, %940 : vector<2x32xf32>
    %944 = arith.mulf %931, %862 : vector<2x32xf32>
    %945 = arith.addf %943, %944 : vector<2x32xf32>
    %c96_159 = arith.constant 96 : index
    %c0_160 = arith.constant 0 : index
    %946 = vector.load %arg2[%c96_159, %c0_160] : memref<168x128xf32, #tpu.memory_space<vmem>>, vector<32x128xf32>
    %c162 = arith.constant 162 : index
    %c0_161 = arith.constant 0 : index
    %947 = vector.load %arg2[%c162, %c0_161] : memref<168x128xf32, #tpu.memory_space<vmem>>, vector<1x128xf32>
    %948 = tpu.concatenate %364, %447, %530, %613, %696, %779, %862, %945 in 0 : vector<2x32xf32>, vector<2x32xf32>, vector<2x32xf32>, vector<2x32xf32>, vector<2x32xf32>, vector<2x32xf32>, vector<2x32xf32>, vector<2x32xf32> -> vector<16x32xf32>
    %cst_162 = arith.constant dense<0.000000e+00> : vector<16x128xf32>
    %949 = tpu.matmul %948, %946, %cst_162 {dimension_numbers = #tpu.dot_dimension_numbers<[1], [0], [0], [1], [0, 0, 1, 1], [], []>} : vector<16x32xf32>, vector<32x128xf32>, vector<16x128xf32> -> vector<16x128xf32>
    %950 = vector.broadcast %947 : vector<1x128xf32> to vector<16x128xf32>
    %951 = arith.addf %949, %950 : vector<16x128xf32>
    %c0_163 = arith.constant 0 : index
    %c0_164 = arith.constant 0 : index
    %952 = vector.load %arg3[%c0_163, %c0_164] : memref<16x128xf32, #tpu.memory_space<vmem>>, vector<16x128xf32>
    tpu.vector_store %arg3[%c0_163, %c0_164], %951 {strides = array<i32>} : memref<16x128xf32, #tpu.memory_space<vmem>>, vector<16x128xf32>,
    return
  }
}

</mosaic_0001>

<llo_original>
// kernel: seq2seq_forward.1
$region0: #{seq2seq_forward.1}
  #allocation0 [shape = 'u32[]', space=smem, size = 0x4, offset = 0x4, fixed_abs, tag = 'smem constant byte address 0x4 - core index']
  #allocation1 [shape = 'u32[144,128]{1,0:T(1,128)}', space=vmem, size = 0x12000, scoped, tag = 'internal scratch']
  %s0 = inlined_call_operand.vmem [shape: f32[16,32], index: 0, kind: input, shape index: {}]
  %s1 = inlined_call_operand.vmem [shape: f32[8,2], index: 1, kind: input, shape index: {}]
  %s2 = inlined_call_operand.vmem [shape: f32[168,128], index: 2, kind: input, shape index: {}]
  %s3 = inlined_call_operand.vmem [shape: f32[16,128], index: 3, kind: output, shape index: {}]
  %s4 = sld [smem:[#allocation0]]
  $region22: #{seq2seq_forward.1} parent=0
    _
  %s6 = ssub.s32 1, %s4
  %s7 = scalar_select 0, %s6, %s4
  // Predicated region
  $region2: #{seq2seq_forward.1} parent=0 // pred_check
    _
  $region3: #{seq2seq_forward.1} parent=0 // pred_check_branch
    %9 = sbr.rel (0) target = $region5
  $region4: #{seq2seq_forward.1} parent=0 // pred_region
    _
  $region5: #{seq2seq_forward.1} parent=0 // pred_fallthru
    _
  // Predicated region
  $region6: #{seq2seq_forward.1} parent=0 // pred_check
    _
  $region7: #{seq2seq_forward.1} parent=0 // pred_check_branch
    %11 = sbr.rel (0) target = $region9
  $region8: #{seq2seq_forward.1} parent=0 // pred_region
    _
  $region9: #{seq2seq_forward.1} parent=0 // pred_fallthru
    _
  // Predicated region
  $region10: #{seq2seq_forward.1} parent=0 // pred_check
    _
  $region11: #{seq2seq_forward.1} parent=0 // pred_check_branch
    %13 = sbr.rel (0) target = $region13
  $region12: #{seq2seq_forward.1} parent=0 // pred_region
    _
  $region13: #{seq2seq_forward.1} parent=0 // pred_fallthru
    _
  %v14 = vld [vmem:[%s0] sm:$0xff]
  %v15 = vld [vmem:[%s0 + $0x8] sm:$0xff]
  %v16 = vld [vmem:[%s2 + $0x80] sm:$0xff]
  %v17 = vld [vmem:[%s2 + $0x88] sm:$0xff]
  %v18 = vld [vmem:[%s2 + $0x90] sm:$0xff]
  %v19 = vld [vmem:[%s2 + $0x98] sm:$0xff]
  %v20 = vld [vmem:[%s2 + $0xa0] sm:$0x1]
  %v21 = vld [vmem:[%s2 + $0xa1] sm:$0x1]
  %v22 = vlaneseq
  %v23 = vshrl.u32 %v22, 7
  %v24 = vsub.s32 0, %v23
  %v25 = vrot.slane %v20, %v24
  %vm26 = vcmask 130048
  %v28 = vsel %vm26, %v14, 0
  %v31 = vsel %vm26, %v15, 0
  %33 = vmatprep.subr.mxu0 0.0
  %34 = vmatpush1.msra.mxu0 %v16
  %35 = vmatprep.subr.mxu0 0.0
  %36 = vmatpush1.msra.mxu0 %v17
  %37 = vmatprep.subr.mxu0 0.0
  %38 = vmatpush1.msra.mxu0 0.0
  %39 = vmatprep.subr.mxu0 0.0
  %40 = vmatpush1.msra.mxu0 0.0
  %41 = vmatprep.subr.mxu0 0.0
  %42 = vmatpush1.msra.mxu0 0.0
  %43 = vmatprep.subr.mxu0 0.0
  %44 = vmatpush1.msra.mxu0 0.0
  %45 = vmatprep.subr.mxu0 0.0
  %46 = vmatpush1.msra.mxu0 0.0
  %47 = vmatprep.subr.mxu0 0.0
  %48 = vmatpush1.msra.mxu0 0.0
  %49 = vmatprep.subr.mxu0 0.0
  %50 = vmatpush1.msra.mxu0 0.0
  %51 = vmatprep.subr.mxu0 0.0
  %52 = vmatpush1.msra.mxu0 0.0
  %53 = vmatprep.subr.mxu0 0.0
  %54 = vmatpush1.msra.mxu0 0.0
  %55 = vmatprep.subr.mxu0 0.0
  %56 = vmatpush1.msra.mxu0 0.0
  %57 = vmatprep.subr.mxu0 0.0
  %58 = vmatpush1.msra.mxu0 0.0
  %59 = vmatprep.subr.mxu0 0.0
  %60 = vmatpush1.msra.mxu0 0.0
  %61 = vmatprep.subr.mxu0 0.0
  %62 = vmatpush1.msra.mxu0 0.0
  %63 = vmatprep.subr.mxu0 0.0
  %64 = vmatpush1.msra.mxu0 0.0
  %65 = vmatprep.subr.mxu0 0.0
  %66 = vmatpush1.msra.mxu0 0.0
  %67 = vmatprep.subr.mxu0 0.0
  %68 = vmatpush1.msra.mxu0 0.0
  %69 = vmatprep.subr.mxu0 0.0
  %70 = vmatpush1.msra.mxu0 0.0
  %71 = vmatprep.subr.mxu0 0.0
  %72 = vmatpush1.msra.mxu0 0.0
  %73 = vmatprep.subr.mxu0 0.0
  %74 = vmatpush1.msra.mxu0 0.0
  %75 = vmatprep.subr.mxu0 0.0
  %76 = vmatpush1.msra.mxu0 0.0
  %77 = vmatprep.subr.mxu0 0.0
  %78 = vmatpush1.msra.mxu0 0.0
  %79 = vmatprep.subr.mxu0 0.0
  %80 = vmatpush1.msra.mxu0 0.0
  %81 = vmatprep.subr.mxu0 0.0
  %82 = vmatpush1.msra.mxu0 0.0
  %83 = vmatprep.subr.mxu0 0.0
  %84 = vmatpush1.msra.mxu0 0.0
  %85 = vmatprep.subr.mxu0 0.0
  %86 = vmatpush1.msra.mxu0 0.0
  %87 = vmatprep.subr.mxu0 0.0
  %88 = vmatpush1.msra.mxu0 0.0
  %89 = vmatprep.subr.mxu0 0.0
  %90 = vmatpush1.msra.mxu0 0.0
  %91 = vmatprep.subr.mxu0 0.0
  %92 = vmatpush1.msra.mxu0 0.0
  %93 = vmatprep.subr.mxu0 0.0
  %94 = vmatpush1.msra.mxu0 0.0
  %95 = vmatprep.subr.mxu0 0.0
  %96 = vmatpush1.msra.mxu0 0.0
  %97 = vmatprep.mubr.f32.mxu0 0.0
  %98 = vmatmul.mubr.f32.gmra.mrb[0].mxu0 %v28
  %v99 = vpop.f32.mrb[0].mxu0
  %v100 = vadd.f32 %v25, %v99
  %v101 = vpop.f32.mrb[0].mxu0
  %102 = vmatprep.mubr.f32.mxu0 0.0
  %103 = vmatmul.mubr.f32.gmra.mrb[0].mxu0 %v31
  %v104 = vpop.f32.mrb[0].mxu0
  %v105 = vadd.f32 %v25, %v104
  %v106 = vpop.f32.mrb[0].mxu0
  %107 = vdwg.mxu0
  %v108 = vlaneseq
  %v109 = vshrl.u32 %v108, 7
  %v110 = vsub.s32 0, %v109
  %v111 = vrot.slane %v21, %v110
  %112 = vrot.lane.b32.xlu0 %v14, 112
  %v113 = vpop.permute.xlu0 %112
  %114 = vrot.lane.b32.xlu0 %v15, 112
  %v115 = vpop.permute.xlu0 %114
  %v116 = vsel %vm26, %v113, 0
  %v118 = vsel %vm26, %v115, 0
  %120 = vmatprep.subr.mxu0 0.0
  %121 = vmatpush1.msra.mxu0 %v18
  %122 = vmatprep.subr.mxu0 0.0
  %123 = vmatpush1.msra.mxu0 %v19
  %124 = vmatprep.subr.mxu0 0.0
  %125 = vmatpush1.msra.mxu0 0.0
  %126 = vmatprep.subr.mxu0 0.0
  %127 = vmatpush1.msra.mxu0 0.0
  %128 = vmatprep.subr.mxu0 0.0
  %129 = vmatpush1.msra.mxu0 0.0
  %130 = vmatprep.subr.mxu0 0.0
  %131 = vmatpush1.msra.mxu0 0.0
  %132 = vmatprep.subr.mxu0 0.0
  %133 = vmatpush1.msra.mxu0 0.0
  %134 = vmatprep.subr.mxu0 0.0
  %135 = vmatpush1.msra.mxu0 0.0
  %136 = vmatprep.subr.mxu0 0.0
  %137 = vmatpush1.msra.mxu0 0.0
  %138 = vmatprep.subr.mxu0 0.0
  %139 = vmatpush1.msra.mxu0 0.0
  %140 = vmatprep.subr.mxu0 0.0
  %141 = vmatpush1.msra.mxu0 0.0
  %142 = vmatprep.subr.mxu0 0.0
  %143 = vmatpush1.msra.mxu0 0.0
  %144 = vmatprep.subr.mxu0 0.0
  %145 = vmatpush1.msra.mxu0 0.0
  %146 = vmatprep.subr.mxu0 0.0
  %147 = vmatpush1.msra.mxu0 0.0
  %148 = vmatprep.subr.mxu0 0.0
  %149 = vmatpush1.msra.mxu0 0.0
  %150 = vmatprep.subr.mxu0 0.0
  %151 = vmatpush1.msra.mxu0 0.0
  %152 = vmatprep.subr.mxu0 0.0
  %153 = vmatpush1.msra.mxu0 0.0
  %154 = vmatprep.subr.mxu0 0.0
  %155 = vmatpush1.msra.mxu0 0.0
  %156 = vmatprep.subr.mxu0 0.0
  %157 = vmatpush1.msra.mxu0 0.0
  %158 = vmatprep.subr.mxu0 0.0
  %159 = vmatpush1.msra.mxu0 0.0
  %160 = vmatprep.subr.mxu0 0.0
  %161 = vmatpush1.msra.mxu0 0.0
  %162 = vmatprep.subr.mxu0 0.0
  %163 = vmatpush1.msra.mxu0 0.0
  %164 = vmatprep.subr.mxu0 0.0
  %165 = vmatpush1.msra.mxu0 0.0
  %166 = vmatprep.subr.mxu0 0.0
  %167 = vmatpush1.msra.mxu0 0.0
  %168 = vmatprep.subr.mxu0 0.0
  %169 = vmatpush1.msra.mxu0 0.0
  %170 = vmatprep.subr.mxu0 0.0
  %171 = vmatpush1.msra.mxu0 0.0
  %172 = vmatprep.subr.mxu0 0.0
  %173 = vmatpush1.msra.mxu0 0.0
  %174 = vmatprep.subr.mxu0 0.0
  %175 = vmatpush1.msra.mxu0 0.0
  %176 = vmatprep.subr.mxu0 0.0
  %177 = vmatpush1.msra.mxu0 0.0
  %178 = vmatprep.subr.mxu0 0.0
  %179 = vmatpush1.msra.mxu0 0.0
  %180 = vmatprep.subr.mxu0 0.0
  %181 = vmatpush1.msra.mxu0 0.0
  %182 = vmatprep.subr.mxu0 0.0
  %183 = vmatpush1.msra.mxu0 0.0
  %184 = vmatprep.mubr.f32.mxu0 0.0
  %185 = vmatmul.mubr.f32.gmra.mrb[0].mxu0 %v116
  %v186 = vpop.f32.mrb[0].mxu0
  %v187 = vadd.f32 %v111, %v186
  %v188 = vpop.f32.mrb[0].mxu0
  %189 = vmatprep.mubr.f32.mxu0 0.0
  %190 = vmatmul.mubr.f32.gmra.mrb[0].mxu0 %v118
  %v191 = vpop.f32.mrb[0].mxu0
  %v192 = vadd.f32 %v111, %v191
  %v193 = vpop.f32.mrb[0].mxu0
  %194 = vdwg.mxu0
  %v195 = vld [vmem:[%s2] sm:$0xff]
  %v196 = vld [vmem:[%s2 + $0x8] sm:$0xff]
  %v197 = vld [vmem:[%s2 + $0x10] sm:$0xff]
  %v198 = vld [vmem:[%s2 + $0x18] sm:$0xff]
  %vm199 = vcmask 261120
  %v201 = vsel %vm199, 0.0, 0
  %203 = vmatprep.subr.mxu0 0.0
  %204 = vmatpush1.msra.mxu0 %v195
  %205 = vmatprep.subr.mxu0 0.0
  %206 = vmatpush1.msra.mxu0 %v196
  %207 = vmatprep.subr.mxu0 0.0
  %208 = vmatpush1.msra.mxu0 %v197
  %209 = vmatprep.subr.mxu0 0.0
  %210 = vmatpush1.msra.mxu0 %v198
  %211 = vmatprep.subr.mxu0 0.0
  %212 = vmatpush1.msra.mxu0 0.0
  %213 = vmatprep.subr.mxu0 0.0
  %214 = vmatpush1.msra.mxu0 0.0
  %215 = vmatprep.subr.mxu0 0.0
  %216 = vmatpush1.msra.mxu0 0.0
  %217 = vmatprep.subr.mxu0 0.0
  %218 = vmatpush1.msra.mxu0 0.0
  %219 = vmatprep.subr.mxu0 0.0
  %220 = vmatpush1.msra.mxu0 0.0
  %221 = vmatprep.subr.mxu0 0.0
  %222 = vmatpush1.msra.mxu0 0.0
  %223 = vmatprep.subr.mxu0 0.0
  %224 = vmatpush1.msra.mxu0 0.0
  %225 = vmatprep.subr.mxu0 0.0
  %226 = vmatpush1.msra.mxu0 0.0
  %227 = vmatprep.subr.mxu0 0.0
  %228 = vmatpush1.msra.mxu0 0.0
  %229 = vmatprep.subr.mxu0 0.0
  %230 = vmatpush1.msra.mxu0 0.0
  %231 = vmatprep.subr.mxu0 0.0
  %232 = vmatpush1.msra.mxu0 0.0
  %233 = vmatprep.subr.mxu0 0.0
  %234 = vmatpush1.msra.mxu0 0.0
  %235 = vmatprep.subr.mxu0 0.0
  %236 = vmatpush1.msra.mxu0 0.0
  %237 = vmatprep.subr.mxu0 0.0
  %238 = vmatpush1.msra.mxu0 0.0
  %239 = vmatprep.subr.mxu0 0.0
  %240 = vmatpush1.msra.mxu0 0.0
  %241 = vmatprep.subr.mxu0 0.0
  %242 = vmatpush1.msra.mxu0 0.0
  %243 = vmatprep.subr.mxu0 0.0
  %244 = vmatpush1.msra.mxu0 0.0
  %245 = vmatprep.subr.mxu0 0.0
  %246 = vmatpush1.msra.mxu0 0.0
  %247 = vmatprep.subr.mxu0 0.0
  %248 = vmatpush1.msra.mxu0 0.0
  %249 = vmatprep.subr.mxu0 0.0
  %250 = vmatpush1.msra.mxu0 0.0
  %251 = vmatprep.subr.mxu0 0.0
  %252 = vmatpush1.msra.mxu0 0.0
  %253 = vmatprep.subr.mxu0 0.0
  %254 = vmatpush1.msra.mxu0 0.0
  %255 = vmatprep.subr.mxu0 0.0
  %256 = vmatpush1.msra.mxu0 0.0
  %257 = vmatprep.subr.mxu0 0.0
  %258 = vmatpush1.msra.mxu0 0.0
  %259 = vmatprep.subr.mxu0 0.0
  %260 = vmatpush1.msra.mxu0 0.0
  %261 = vmatprep.subr.mxu0 0.0
  %262 = vmatpush1.msra.mxu0 0.0
  %263 = vmatprep.subr.mxu0 0.0
  %264 = vmatpush1.msra.mxu0 0.0
  %265 = vmatprep.subr.mxu0 0.0
  %266 = vmatpush1.msra.mxu0 0.0
  %267 = vmatprep.mubr.f32.mxu0 0.0
  %268 = vmatmul.mubr.f32.gmra.mrb[0].mxu0 %v201
  %v269 = vpop.f32.mrb[0].mxu0
  %v270 = vadd.f32 0.0, %v269
  %v271 = vpop.f32.mrb[0].mxu0
  %272 = vdwg.mxu0
  %v273 = vadd.f32 %v100, %v270
  %v274 = vxor.u32 %v273, 2147483648
  %v275 = vmul.f32 %v274, 1.442695
  %v276 = vpow.pop %v275
  %v277 = vadd.f32 %v276, 1.0
  %v278 = vrcp.pop %v277
  %v279 = vmul.f32 1.0, %v278
  %281 = vrot.lane.b32.xlu0 %v25, 96
  %v282 = vpop.permute.xlu0 %281
  %v284 = vadd.f32 %v270, %v282
  %286 = vrot.lane.b32.xlu0 %v284, 64
  %v287 = vpop.permute.xlu0 %286
  %v289 = vmul.f32 %v279, %v287
  %291 = vrot.lane.b32.xlu0 %v289, 64
  %v292 = vpop.permute.xlu0 %291
  %v294 = vadd.f32 %v100, %v292
  %v295 = vtanh.pop %v294
  %v296 = vsub.f32 1.0, %v279
  %298 = vrot.lane.b32.xlu0 %v295, 96
  %v299 = vpop.permute.xlu0 %298
  %v301 = vmul.f32 %v296, %v299
  %v302 = vmul.f32 %v279, 0.0
  %v303 = vadd.f32 %v301, %v302
  %305 = vrot.lane.b32.xlu0 %v303, 96
  %v306 = vpop.permute.xlu0 %305
  %v307 = vsel %vm199, %v306, 0
  %309 = vmatprep.subr.mxu0 0.0
  %310 = vmatpush1.msra.mxu0 %v195
  %311 = vmatprep.subr.mxu0 0.0
  %312 = vmatpush1.msra.mxu0 %v196
  %313 = vmatprep.subr.mxu0 0.0
  %314 = vmatpush1.msra.mxu0 %v197
  %315 = vmatprep.subr.mxu0 0.0
  %316 = vmatpush1.msra.mxu0 %v198
  %317 = vmatprep.subr.mxu0 0.0
  %318 = vmatpush1.msra.mxu0 0.0
  %319 = vmatprep.subr.mxu0 0.0
  %320 = vmatpush1.msra.mxu0 0.0
  %321 = vmatprep.subr.mxu0 0.0
  %322 = vmatpush1.msra.mxu0 0.0
  %323 = vmatprep.subr.mxu0 0.0
  %324 = vmatpush1.msra.mxu0 0.0
  %325 = vmatprep.subr.mxu0 0.0
  %326 = vmatpush1.msra.mxu0 0.0
  %327 = vmatprep.subr.mxu0 0.0
  %328 = vmatpush1.msra.mxu0 0.0
  %329 = vmatprep.subr.mxu0 0.0
  %330 = vmatpush1.msra.mxu0 0.0
  %331 = vmatprep.subr.mxu0 0.0
  %332 = vmatpush1.msra.mxu0 0.0
  %333 = vmatprep.subr.mxu0 0.0
  %334 = vmatpush1.msra.mxu0 0.0
  %335 = vmatprep.subr.mxu0 0.0
  %336 = vmatpush1.msra.mxu0 0.0
  %337 = vmatprep.subr.mxu0 0.0
  %338 = vmatpush1.msra.mxu0 0.0
  %339 = vmatprep.subr.mxu0 0.0
  %340 = vmatpush1.msra.mxu0 0.0
  %341 = vmatprep.subr.mxu0 0.0
  %342 = vmatpush1.msra.mxu0 0.0
  %343 = vmatprep.subr.mxu0 0.0
  %344 = vmatpush1.msra.mxu0 0.0
  %345 = vmatprep.subr.mxu0 0.0
  %346 = vmatpush1.msra.mxu0 0.0
  %347 = vmatprep.subr.mxu0 0.0
  %348 = vmatpush1.msra.mxu0 0.0
  %349 = vmatprep.subr.mxu0 0.0
  %350 = vmatpush1.msra.mxu0 0.0
  %351 = vmatprep.subr.mxu0 0.0
  %352 = vmatpush1.msra.mxu0 0.0
  %353 = vmatprep.subr.mxu0 0.0
  %354 = vmatpush1.msra.mxu0 0.0
  %355 = vmatprep.subr.mxu0 0.0
  %356 = vmatpush1.msra.mxu0 0.0
  %357 = vmatprep.subr.mxu0 0.0
  %358 = vmatpush1.msra.mxu0 0.0
  %359 = vmatprep.subr.mxu0 0.0
  %360 = vmatpush1.msra.mxu0 0.0
  %361 = vmatprep.subr.mxu0 0.0
  %362 = vmatpush1.msra.mxu0 0.0
  %363 = vmatprep.subr.mxu0 0.0
  %364 = vmatpush1.msra.mxu0 0.0
  %365 = vmatprep.subr.mxu0 0.0
  %366 = vmatpush1.msra.mxu0 0.0
  %367 = vmatprep.subr.mxu0 0.0
  %368 = vmatpush1.msra.mxu0 0.0
  %369 = vmatprep.subr.mxu0 0.0
  %370 = vmatpush1.msra.mxu0 0.0
  %371 = vmatprep.subr.mxu0 0.0
  %372 = vmatpush1.msra.mxu0 0.0
  %373 = vmatprep.mubr.f32.mxu0 0.0
  %374 = vmatmul.mubr.f32.gmra.mrb[0].mxu0 %v307
  %v375 = vpop.f32.mrb[0].mxu0
  %v376 = vadd.f32 0.0, %v375
  %v377 = vpop.f32.mrb[0].mxu0
  %378 = vdwg.mxu0
  %v380 = vrot.slane %v376, 6
  %v382 = vadd.f32 %v100, %v380
  %v383 = vxor.u32 %v382, 2147483648
  %v384 = vmul.f32 %v383, 1.442695
  %v385 = vpow.pop %v384
  %v386 = vadd.f32 %v385, 1.0
  %v387 = vrcp.pop %v386
  %v388 = vmul.f32 1.0, %v387
  %v389 = vadd.f32 %v376, %v282
  %v391 = vrot.slane %v389, 6
  %392 = vrot.lane.b32.xlu0 %v391, 64
  %v393 = vpop.permute.xlu0 %392
  %v395 = vmul.f32 %v388, %v393
  %397 = vrot.lane.b32.xlu0 %v395, 64
  %v398 = vpop.permute.xlu0 %397
  %v400 = vadd.f32 %v100, %v398
  %v401 = vtanh.pop %v400
  %v402 = vsub.f32 1.0, %v388
  %404 = vrot.lane.b32.xlu0 %v401, 96
  %v405 = vpop.permute.xlu0 %404
  %v407 = vmul.f32 %v402, %v405
  %v408 = vrot.slane %v303, 6
  %v410 = vmul.f32 %v388, %v408
  %v411 = vadd.f32 %v407, %v410
  %v413 = vrot.slane %v411, 2
  %414 = vrot.lane.b32.xlu0 %v413, 96
  %v415 = vpop.permute.xlu0 %414
  %v416 = vsel %vm199, %v415, 0
  %418 = vmatprep.subr.mxu0 0.0
  %419 = vmatpush1.msra.mxu0 %v195
  %420 = vmatprep.subr.mxu0 0.0
  %421 = vmatpush1.msra.mxu0 %v196
  %422 = vmatprep.subr.mxu0 0.0
  %423 = vmatpush1.msra.mxu0 %v197
  %424 = vmatprep.subr.mxu0 0.0
  %425 = vmatpush1.msra.mxu0 %v198
  %426 = vmatprep.subr.mxu0 0.0
  %427 = vmatpush1.msra.mxu0 0.0
  %428 = vmatprep.subr.mxu0 0.0
  %429 = vmatpush1.msra.mxu0 0.0
  %430 = vmatprep.subr.mxu0 0.0
  %431 = vmatpush1.msra.mxu0 0.0
  %432 = vmatprep.subr.mxu0 0.0
  %433 = vmatpush1.msra.mxu0 0.0
  %434 = vmatprep.subr.mxu0 0.0
  %435 = vmatpush1.msra.mxu0 0.0
  %436 = vmatprep.subr.mxu0 0.0
  %437 = vmatpush1.msra.mxu0 0.0
  %438 = vmatprep.subr.mxu0 0.0
  %439 = vmatpush1.msra.mxu0 0.0
  %440 = vmatprep.subr.mxu0 0.0
  %441 = vmatpush1.msra.mxu0 0.0
  %442 = vmatprep.subr.mxu0 0.0
  %443 = vmatpush1.msra.mxu0 0.0
  %444 = vmatprep.subr.mxu0 0.0
  %445 = vmatpush1.msra.mxu0 0.0
  %446 = vmatprep.subr.mxu0 0.0
  %447 = vmatpush1.msra.mxu0 0.0
  %448 = vmatprep.subr.mxu0 0.0
  %449 = vmatpush1.msra.mxu0 0.0
  %450 = vmatprep.subr.mxu0 0.0
  %451 = vmatpush1.msra.mxu0 0.0
  %452 = vmatprep.subr.mxu0 0.0
  %453 = vmatpush1.msra.mxu0 0.0
  %454 = vmatprep.subr.mxu0 0.0
  %455 = vmatpush1.msra.mxu0 0.0
  %456 = vmatprep.subr.mxu0 0.0
  %457 = vmatpush1.msra.mxu0 0.0
  %458 = vmatprep.subr.mxu0 0.0
  %459 = vmatpush1.msra.mxu0 0.0
  %460 = vmatprep.subr.mxu0 0.0
  %461 = vmatpush1.msra.mxu0 0.0
  %462 = vmatprep.subr.mxu0 0.0
  %463 = vmatpush1.msra.mxu0 0.0
  %464 = vmatprep.subr.mxu0 0.0
  %465 = vmatpush1.msra.mxu0 0.0
  %466 = vmatprep.subr.mxu0 0.0
  %467 = vmatpush1.msra.mxu0 0.0
  %468 = vmatprep.subr.mxu0 0.0
  %469 = vmatpush1.msra.mxu0 0.0
  %470 = vmatprep.subr.mxu0 0.0
  %471 = vmatpush1.msra.mxu0 0.0
  %472 = vmatprep.subr.mxu0 0.0
  %473 = vmatpush1.msra.mxu0 0.0
  %474 = vmatprep.subr.mxu0 0.0
  %475 = vmatpush1.msra.mxu0 0.0
  %476 = vmatprep.subr.mxu0 0.0
  %477 = vmatpush1.msra.mxu0 0.0
  %478 = vmatprep.subr.mxu0 0.0
  %479 = vmatpush1.msra.mxu0 0.0
  %480 = vmatprep.subr.mxu0 0.0
  %481 = vmatpush1.msra.mxu0 0.0
  %482 = vmatprep.mubr.f32.mxu0 0.0
  %483 = vmatmul.mubr.f32.gmra.mrb[0].mxu0 %v416
  %v484 = vpop.f32.mrb[0].mxu0
  %v485 = vadd.f32 0.0, %v484
  %v486 = vpop.f32.mrb[0].mxu0
  %487 = vdwg.mxu0
  %v489 = vrot.slane %v485, 4
  %v491 = vadd.f32 %v100, %v489
  %v492 = vxor.u32 %v491, 2147483648
  %v493 = vmul.f32 %v492, 1.442695
  %v494 = vpow.pop %v493
  %v495 = vadd.f32 %v494, 1.0
  %v496 = vrcp.pop %v495
  %v497 = vmul.f32 1.0, %v496
  %v498 = vadd.f32 %v485, %v282
  %v500 = vrot.slane %v498, 4
  %501 = vrot.lane.b32.xlu0 %v500, 64
  %v502 = vpop.permute.xlu0 %501
  %v504 = vmul.f32 %v497, %v502
  %506 = vrot.lane.b32.xlu0 %v504, 64
  %v507 = vpop.permute.xlu0 %506
  %v509 = vadd.f32 %v100, %v507
  %v510 = vtanh.pop %v509
  %v511 = vsub.f32 1.0, %v497
  %513 = vrot.lane.b32.xlu0 %v510, 96
  %v514 = vpop.permute.xlu0 %513
  %v516 = vmul.f32 %v511, %v514
  %v517 = vrot.slane %v411, 6
  %v519 = vmul.f32 %v497, %v517
  %v520 = vadd.f32 %v516, %v519
  %v522 = vrot.slane %v520, 4
  %523 = vrot.lane.b32.xlu0 %v522, 96
  %v524 = vpop.permute.xlu0 %523
  %v525 = vsel %vm199, %v524, 0
  %527 = vmatprep.subr.mxu0 0.0
  %528 = vmatpush1.msra.mxu0 %v195
  %529 = vmatprep.subr.mxu0 0.0
  %530 = vmatpush1.msra.mxu0 %v196
  %531 = vmatprep.subr.mxu0 0.0
  %532 = vmatpush1.msra.mxu0 %v197
  %533 = vmatprep.subr.mxu0 0.0
  %534 = vmatpush1.msra.mxu0 %v198
  %535 = vmatprep.subr.mxu0 0.0
  %536 = vmatpush1.msra.mxu0 0.0
  %537 = vmatprep.subr.mxu0 0.0
  %538 = vmatpush1.msra.mxu0 0.0
  %539 = vmatprep.subr.mxu0 0.0
  %540 = vmatpush1.msra.mxu0 0.0
  %541 = vmatprep.subr.mxu0 0.0
  %542 = vmatpush1.msra.mxu0 0.0
  %543 = vmatprep.subr.mxu0 0.0
  %544 = vmatpush1.msra.mxu0 0.0
  %545 = vmatprep.subr.mxu0 0.0
  %546 = vmatpush1.msra.mxu0 0.0
  %547 = vmatprep.subr.mxu0 0.0
  %548 = vmatpush1.msra.mxu0 0.0
  %549 = vmatprep.subr.mxu0 0.0
  %550 = vmatpush1.msra.mxu0 0.0
  %551 = vmatprep.subr.mxu0 0.0
  %552 = vmatpush1.msra.mxu0 0.0
  %553 = vmatprep.subr.mxu0 0.0
  %554 = vmatpush1.msra.mxu0 0.0
  %555 = vmatprep.subr.mxu0 0.0
  %556 = vmatpush1.msra.mxu0 0.0
  %557 = vmatprep.subr.mxu0 0.0
  %558 = vmatpush1.msra.mxu0 0.0
  %559 = vmatprep.subr.mxu0 0.0
  %560 = vmatpush1.msra.mxu0 0.0
  %561 = vmatprep.subr.mxu0 0.0
  %562 = vmatpush1.msra.mxu0 0.0
  %563 = vmatprep.subr.mxu0 0.0
  %564 = vmatpush1.msra.mxu0 0.0
  %565 = vmatprep.subr.mxu0 0.0
  %566 = vmatpush1.msra.mxu0 0.0
  %567 = vmatprep.subr.mxu0 0.0
  %568 = vmatpush1.msra.mxu0 0.0
  %569 = vmatprep.subr.mxu0 0.0
  %570 = vmatpush1.msra.mxu0 0.0
  %571 = vmatprep.subr.mxu0 0.0
  %572 = vmatpush1.msra.mxu0 0.0
  %573 = vmatprep.subr.mxu0 0.0
  %574 = vmatpush1.msra.mxu0 0.0
  %575 = vmatprep.subr.mxu0 0.0
  %576 = vmatpush1.msra.mxu0 0.0
  %577 = vmatprep.subr.mxu0 0.0
  %578 = vmatpush1.msra.mxu0 0.0
  %579 = vmatprep.subr.mxu0 0.0
  %580 = vmatpush1.msra.mxu0 0.0
  %581 = vmatprep.subr.mxu0 0.0
  %582 = vmatpush1.msra.mxu0 0.0
  %583 = vmatprep.subr.mxu0 0.0
  %584 = vmatpush1.msra.mxu0 0.0
  %585 = vmatprep.subr.mxu0 0.0
  %586 = vmatpush1.msra.mxu0 0.0
  %587 = vmatprep.subr.mxu0 0.0
  %588 = vmatpush1.msra.mxu0 0.0
  %589 = vmatprep.subr.mxu0 0.0
  %590 = vmatpush1.msra.mxu0 0.0
  %591 = vmatprep.mubr.f32.mxu0 0.0
  %592 = vmatmul.mubr.f32.gmra.mrb[0].mxu0 %v525
  %v593 = vpop.f32.mrb[0].mxu0
  %v594 = vadd.f32 0.0, %v593
  %v595 = vpop.f32.mrb[0].mxu0
  %596 = vdwg.mxu0
  %v598 = vrot.slane %v594, 2
  %v600 = vadd.f32 %v100, %v598
  %v601 = vxor.u32 %v600, 2147483648
  %v602 = vmul.f32 %v601, 1.442695
  %v603 = vpow.pop %v602
  %v604 = vadd.f32 %v603, 1.0
  %v605 = vrcp.pop %v604
  %v606 = vmul.f32 1.0, %v605
  %v607 = vadd.f32 %v594, %v282
  %v609 = vrot.slane %v607, 2
  %610 = vrot.lane.b32.xlu0 %v609, 64
  %v611 = vpop.permute.xlu0 %610
  %v613 = vmul.f32 %v606, %v611
  %615 = vrot.lane.b32.xlu0 %v613, 64
  %v616 = vpop.permute.xlu0 %615
  %v618 = vadd.f32 %v100, %v616
  %v619 = vtanh.pop %v618
  %v620 = vsub.f32 1.0, %v606
  %622 = vrot.lane.b32.xlu0 %v619, 96
  %v623 = vpop.permute.xlu0 %622
  %v625 = vmul.f32 %v620, %v623
  %v626 = vrot.slane %v520, 6
  %v628 = vmul.f32 %v606, %v626
  %v629 = vadd.f32 %v625, %v628
  %v631 = vrot.slane %v629, 6
  %632 = vrot.lane.b32.xlu0 %v631, 96
  %v633 = vpop.permute.xlu0 %632
  %v634 = vsel %vm199, %v633, 0
  %636 = vmatprep.subr.mxu0 0.0
  %637 = vmatpush1.msra.mxu0 %v195
  %638 = vmatprep.subr.mxu0 0.0
  %639 = vmatpush1.msra.mxu0 %v196
  %640 = vmatprep.subr.mxu0 0.0
  %641 = vmatpush1.msra.mxu0 %v197
  %642 = vmatprep.subr.mxu0 0.0
  %643 = vmatpush1.msra.mxu0 %v198
  %644 = vmatprep.subr.mxu0 0.0
  %645 = vmatpush1.msra.mxu0 0.0
  %646 = vmatprep.subr.mxu0 0.0
  %647 = vmatpush1.msra.mxu0 0.0
  %648 = vmatprep.subr.mxu0 0.0
  %649 = vmatpush1.msra.mxu0 0.0
  %650 = vmatprep.subr.mxu0 0.0
  %651 = vmatpush1.msra.mxu0 0.0
  %652 = vmatprep.subr.mxu0 0.0
  %653 = vmatpush1.msra.mxu0 0.0
  %654 = vmatprep.subr.mxu0 0.0
  %655 = vmatpush1.msra.mxu0 0.0
  %656 = vmatprep.subr.mxu0 0.0
  %657 = vmatpush1.msra.mxu0 0.0
  %658 = vmatprep.subr.mxu0 0.0
  %659 = vmatpush1.msra.mxu0 0.0
  %660 = vmatprep.subr.mxu0 0.0
  %661 = vmatpush1.msra.mxu0 0.0
  %662 = vmatprep.subr.mxu0 0.0
  %663 = vmatpush1.msra.mxu0 0.0
  %664 = vmatprep.subr.mxu0 0.0
  %665 = vmatpush1.msra.mxu0 0.0
  %666 = vmatprep.subr.mxu0 0.0
  %667 = vmatpush1.msra.mxu0 0.0
  %668 = vmatprep.subr.mxu0 0.0
  %669 = vmatpush1.msra.mxu0 0.0
  %670 = vmatprep.subr.mxu0 0.0
  %671 = vmatpush1.msra.mxu0 0.0
  %672 = vmatprep.subr.mxu0 0.0
  %673 = vmatpush1.msra.mxu0 0.0
  %674 = vmatprep.subr.mxu0 0.0
  %675 = vmatpush1.msra.mxu0 0.0
  %676 = vmatprep.subr.mxu0 0.0
  %677 = vmatpush1.msra.mxu0 0.0
  %678 = vmatprep.subr.mxu0 0.0
  %679 = vmatpush1.msra.mxu0 0.0
  %680 = vmatprep.subr.mxu0 0.0
  %681 = vmatpush1.msra.mxu0 0.0
  %682 = vmatprep.subr.mxu0 0.0
  %683 = vmatpush1.msra.mxu0 0.0
  %684 = vmatprep.subr.mxu0 0.0
  %685 = vmatpush1.msra.mxu0 0.0
  %686 = vmatprep.subr.mxu0 0.0
  %687 = vmatpush1.msra.mxu0 0.0
  %688 = vmatprep.subr.mxu0 0.0
  %689 = vmatpush1.msra.mxu0 0.0
  %690 = vmatprep.subr.mxu0 0.0
  %691 = vmatpush1.msra.mxu0 0.0
  %692 = vmatprep.subr.mxu0 0.0
  %693 = vmatpush1.msra.mxu0 0.0
  %694 = vmatprep.subr.mxu0 0.0
  %695 = vmatpush1.msra.mxu0 0.0
  %696 = vmatprep.subr.mxu0 0.0
  %697 = vmatpush1.msra.mxu0 0.0
  %698 = vmatprep.subr.mxu0 0.0
  %699 = vmatpush1.msra.mxu0 0.0
  %700 = vmatprep.mubr.f32.mxu0 0.0
  %701 = vmatmul.mubr.f32.gmra.mrb[0].mxu0 %v634
  %v702 = vpop.f32.mrb[0].mxu0
  %v703 = vadd.f32 0.0, %v702
  %v704 = vpop.f32.mrb[0].mxu0
  %705 = vdwg.mxu0
  %v706 = vadd.f32 %v105, %v703
  %v707 = vxor.u32 %v706, 2147483648
  %v708 = vmul.f32 %v707, 1.442695
  %v709 = vpow.pop %v708
  %v710 = vadd.f32 %v709, 1.0
  %v711 = vrcp.pop %v710
  %v712 = vmul.f32 1.0, %v711
  %v713 = vadd.f32 %v703, %v282
  %715 = vrot.lane.b32.xlu0 %v713, 64
  %v716 = vpop.permute.xlu0 %715
  %v718 = vmul.f32 %v712, %v716
  %720 = vrot.lane.b32.xlu0 %v718, 64
  %v721 = vpop.permute.xlu0 %720
  %v723 = vadd.f32 %v105, %v721
  %v724 = vtanh.pop %v723
  %v725 = vsub.f32 1.0, %v712
  %727 = vrot.lane.b32.xlu0 %v724, 96
  %v728 = vpop.permute.xlu0 %727
  %v730 = vmul.f32 %v725, %v728
  %v732 = vmul.f32 %v712, %v631
  %v733 = vadd.f32 %v730, %v732
  %735 = vrot.lane.b32.xlu0 %v733, 96
  %v736 = vpop.permute.xlu0 %735
  %v737 = vsel %vm199, %v736, 0
  %739 = vmatprep.subr.mxu0 0.0
  %740 = vmatpush1.msra.mxu0 %v195
  %741 = vmatprep.subr.mxu0 0.0
  %742 = vmatpush1.msra.mxu0 %v196
  %743 = vmatprep.subr.mxu0 0.0
  %744 = vmatpush1.msra.mxu0 %v197
  %745 = vmatprep.subr.mxu0 0.0
  %746 = vmatpush1.msra.mxu0 %v198
  %747 = vmatprep.subr.mxu0 0.0
  %748 = vmatpush1.msra.mxu0 0.0
  %749 = vmatprep.subr.mxu0 0.0
  %750 = vmatpush1.msra.mxu0 0.0
  %751 = vmatprep.subr.mxu0 0.0
  %752 = vmatpush1.msra.mxu0 0.0
  %753 = vmatprep.subr.mxu0 0.0
  %754 = vmatpush1.msra.mxu0 0.0
  %755 = vmatprep.subr.mxu0 0.0
  %756 = vmatpush1.msra.mxu0 0.0
  %757 = vmatprep.subr.mxu0 0.0
  %758 = vmatpush1.msra.mxu0 0.0
  %759 = vmatprep.subr.mxu0 0.0
  %760 = vmatpush1.msra.mxu0 0.0
  %761 = vmatprep.subr.mxu0 0.0
  %762 = vmatpush1.msra.mxu0 0.0
  %763 = vmatprep.subr.mxu0 0.0
  %764 = vmatpush1.msra.mxu0 0.0
  %765 = vmatprep.subr.mxu0 0.0
  %766 = vmatpush1.msra.mxu0 0.0
  %767 = vmatprep.subr.mxu0 0.0
  %768 = vmatpush1.msra.mxu0 0.0
  %769 = vmatprep.subr.mxu0 0.0
  %770 = vmatpush1.msra.mxu0 0.0
  %771 = vmatprep.subr.mxu0 0.0
  %772 = vmatpush1.msra.mxu0 0.0
  %773 = vmatprep.subr.mxu0 0.0
  %774 = vmatpush1.msra.mxu0 0.0
  %775 = vmatprep.subr.mxu0 0.0
  %776 = vmatpush1.msra.mxu0 0.0
  %777 = vmatprep.subr.mxu0 0.0
  %778 = vmatpush1.msra.mxu0 0.0
  %779 = vmatprep.subr.mxu0 0.0
  %780 = vmatpush1.msra.mxu0 0.0
  %781 = vmatprep.subr.mxu0 0.0
  %782 = vmatpush1.msra.mxu0 0.0
  %783 = vmatprep.subr.mxu0 0.0
  %784 = vmatpush1.msra.mxu0 0.0
  %785 = vmatprep.subr.mxu0 0.0
  %786 = vmatpush1.msra.mxu0 0.0
  %787 = vmatprep.subr.mxu0 0.0
  %788 = vmatpush1.msra.mxu0 0.0
  %789 = vmatprep.subr.mxu0 0.0
  %790 = vmatpush1.msra.mxu0 0.0
  %791 = vmatprep.subr.mxu0 0.0
  %792 = vmatpush1.msra.mxu0 0.0
  %793 = vmatprep.subr.mxu0 0.0
  %794 = vmatpush1.msra.mxu0 0.0
  %795 = vmatprep.subr.mxu0 0.0
  %796 = vmatpush1.msra.mxu0 0.0
  %797 = vmatprep.subr.mxu0 0.0
  %798 = vmatpush1.msra.mxu0 0.0
  %799 = vmatprep.subr.mxu0 0.0
  %800 = vmatpush1.msra.mxu0 0.0
  %801 = vmatprep.subr.mxu0 0.0
  %802 = vmatpush1.msra.mxu0 0.0
  %803 = vmatprep.mubr.f32.mxu0 0.0
  %804 = vmatmul.mubr.f32.gmra.mrb[0].mxu0 %v737
  %v805 = vpop.f32.mrb[0].mxu0
  %v806 = vadd.f32 0.0, %v805
  %v807 = vpop.f32.mrb[0].mxu0
  %808 = vdwg.mxu0
  %v810 = vrot.slane %v806, 6
  %v812 = vadd.f32 %v105, %v810
  %v813 = vxor.u32 %v812, 2147483648
  %v814 = vmul.f32 %v813, 1.442695
  %v815 = vpow.pop %v814
  %v816 = vadd.f32 %v815, 1.0
  %v817 = vrcp.pop %v816
  %v818 = vmul.f32 1.0, %v817
  %v819 = vadd.f32 %v806, %v282
  %v821 = vrot.slane %v819, 6
  %822 = vrot.lane.b32.xlu0 %v821, 64
  %v823 = vpop.permute.xlu0 %822
  %v825 = vmul.f32 %v818, %v823
  %827 = vrot.lane.b32.xlu0 %v825, 64
  %v828 = vpop.permute.xlu0 %827
  %v830 = vadd.f32 %v105, %v828
  %v831 = vtanh.pop %v830
  %v832 = vsub.f32 1.0, %v818
  %834 = vrot.lane.b32.xlu0 %v831, 96
  %v835 = vpop.permute.xlu0 %834
  %v837 = vmul.f32 %v832, %v835
  %v838 = vrot.slane %v733, 6
  %v840 = vmul.f32 %v818, %v838
  %v841 = vadd.f32 %v837, %v840
  %v843 = vrot.slane %v841, 2
  %844 = vrot.lane.b32.xlu0 %v843, 96
  %v845 = vpop.permute.xlu0 %844
  %v846 = vsel %vm199, %v845, 0
  %848 = vmatprep.subr.mxu0 0.0
  %849 = vmatpush1.msra.mxu0 %v195
  %850 = vmatprep.subr.mxu0 0.0
  %851 = vmatpush1.msra.mxu0 %v196
  %852 = vmatprep.subr.mxu0 0.0
  %853 = vmatpush1.msra.mxu0 %v197
  %854 = vmatprep.subr.mxu0 0.0
  %855 = vmatpush1.msra.mxu0 %v198
  %856 = vmatprep.subr.mxu0 0.0
  %857 = vmatpush1.msra.mxu0 0.0
  %858 = vmatprep.subr.mxu0 0.0
  %859 = vmatpush1.msra.mxu0 0.0
  %860 = vmatprep.subr.mxu0 0.0
  %861 = vmatpush1.msra.mxu0 0.0
  %862 = vmatprep.subr.mxu0 0.0
  %863 = vmatpush1.msra.mxu0 0.0
  %864 = vmatprep.subr.mxu0 0.0
  %865 = vmatpush1.msra.mxu0 0.0
  %866 = vmatprep.subr.mxu0 0.0
  %867 = vmatpush1.msra.mxu0 0.0
  %868 = vmatprep.subr.mxu0 0.0
  %869 = vmatpush1.msra.mxu0 0.0
  %870 = vmatprep.subr.mxu0 0.0
  %871 = vmatpush1.msra.mxu0 0.0
  %872 = vmatprep.subr.mxu0 0.0
  %873 = vmatpush1.msra.mxu0 0.0
  %874 = vmatprep.subr.mxu0 0.0
  %875 = vmatpush1.msra.mxu0 0.0
  %876 = vmatprep.subr.mxu0 0.0
  %877 = vmatpush1.msra.mxu0 0.0
  %878 = vmatprep.subr.mxu0 0.0
  %879 = vmatpush1.msra.mxu0 0.0
  %880 = vmatprep.subr.mxu0 0.0
  %881 = vmatpush1.msra.mxu0 0.0
  %882 = vmatprep.subr.mxu0 0.0
  %883 = vmatpush1.msra.mxu0 0.0
  %884 = vmatprep.subr.mxu0 0.0
  %885 = vmatpush1.msra.mxu0 0.0
  %886 = vmatprep.subr.mxu0 0.0
  %887 = vmatpush1.msra.mxu0 0.0
  %888 = vmatprep.subr.mxu0 0.0
  %889 = vmatpush1.msra.mxu0 0.0
  %890 = vmatprep.subr.mxu0 0.0
  %891 = vmatpush1.msra.mxu0 0.0
  %892 = vmatprep.subr.mxu0 0.0
  %893 = vmatpush1.msra.mxu0 0.0
  %894 = vmatprep.subr.mxu0 0.0
  %895 = vmatpush1.msra.mxu0 0.0
  %896 = vmatprep.subr.mxu0 0.0
  %897 = vmatpush1.msra.mxu0 0.0
  %898 = vmatprep.subr.mxu0 0.0
  %899 = vmatpush1.msra.mxu0 0.0
  %900 = vmatprep.subr.mxu0 0.0
  %901 = vmatpush1.msra.mxu0 0.0
  %902 = vmatprep.subr.mxu0 0.0
  %903 = vmatpush1.msra.mxu0 0.0
  %904 = vmatprep.subr.mxu0 0.0
  %905 = vmatpush1.msra.mxu0 0.0
  %906 = vmatprep.subr.mxu0 0.0
  %907 = vmatpush1.msra.mxu0 0.0
  %908 = vmatprep.subr.mxu0 0.0
  %909 = vmatpush1.msra.mxu0 0.0
  %910 = vmatprep.subr.mxu0 0.0
  %911 = vmatpush1.msra.mxu0 0.0
  %912 = vmatprep.mubr.f32.mxu0 0.0
  %913 = vmatmul.mubr.f32.gmra.mrb[0].mxu0 %v846
  %v914 = vpop.f32.mrb[0].mxu0
  %v915 = vadd.f32 0.0, %v914
  %v916 = vpop.f32.mrb[0].mxu0
  %917 = vdwg.mxu0
  %v919 = vrot.slane %v915, 4
  %v921 = vadd.f32 %v105, %v919
  %v922 = vxor.u32 %v921, 2147483648
  %v923 = vmul.f32 %v922, 1.442695
  %v924 = vpow.pop %v923
  %v925 = vadd.f32 %v924, 1.0
  %v926 = vrcp.pop %v925
  %v927 = vmul.f32 1.0, %v926
  %v928 = vadd.f32 %v915, %v282
  %v930 = vrot.slane %v928, 4
  %931 = vrot.lane.b32.xlu0 %v930, 64
  %v932 = vpop.permute.xlu0 %931
  %v934 = vmul.f32 %v927, %v932
  %936 = vrot.lane.b32.xlu0 %v934, 64
  %v937 = vpop.permute.xlu0 %936
  %v939 = vadd.f32 %v105, %v937
  %v940 = vtanh.pop %v939
  %v941 = vsub.f32 1.0, %v927
  %943 = vrot.lane.b32.xlu0 %v940, 96
  %v944 = vpop.permute.xlu0 %943
  %v946 = vmul.f32 %v941, %v944
  %v947 = vrot.slane %v841, 6
  %v949 = vmul.f32 %v927, %v947
  %v950 = vadd.f32 %v946, %v949
  %v952 = vrot.slane %v950, 4
  %953 = vrot.lane.b32.xlu0 %v952, 96
  %v954 = vpop.permute.xlu0 %953
  %v955 = vsel %vm199, %v954, 0
  %957 = vmatprep.subr.mxu0 0.0
  %958 = vmatpush1.msra.mxu0 %v195
  %959 = vmatprep.subr.mxu0 0.0
  %960 = vmatpush1.msra.mxu0 %v196
  %961 = vmatprep.subr.mxu0 0.0
  %962 = vmatpush1.msra.mxu0 %v197
  %963 = vmatprep.subr.mxu0 0.0
  %964 = vmatpush1.msra.mxu0 %v198
  %965 = vmatprep.subr.mxu0 0.0
  %966 = vmatpush1.msra.mxu0 0.0
  %967 = vmatprep.subr.mxu0 0.0
  %968 = vmatpush1.msra.mxu0 0.0
  %969 = vmatprep.subr.mxu0 0.0
  %970 = vmatpush1.msra.mxu0 0.0
  %971 = vmatprep.subr.mxu0 0.0
  %972 = vmatpush1.msra.mxu0 0.0
  %973 = vmatprep.subr.mxu0 0.0
  %974 = vmatpush1.msra.mxu0 0.0
  %975 = vmatprep.subr.mxu0 0.0
  %976 = vmatpush1.msra.mxu0 0.0
  %977 = vmatprep.subr.mxu0 0.0
  %978 = vmatpush1.msra.mxu0 0.0
  %979 = vmatprep.subr.mxu0 0.0
  %980 = vmatpush1.msra.mxu0 0.0
  %981 = vmatprep.subr.mxu0 0.0
  %982 = vmatpush1.msra.mxu0 0.0
  %983 = vmatprep.subr.mxu0 0.0
  %984 = vmatpush1.msra.mxu0 0.0
  %985 = vmatprep.subr.mxu0 0.0
  %986 = vmatpush1.msra.mxu0 0.0
  %987 = vmatprep.subr.mxu0 0.0
  %988 = vmatpush1.msra.mxu0 0.0
  %989 = vmatprep.subr.mxu0 0.0
  %990 = vmatpush1.msra.mxu0 0.0
  %991 = vmatprep.subr.mxu0 0.0
  %992 = vmatpush1.msra.mxu0 0.0
  %993 = vmatprep.subr.mxu0 0.0
  %994 = vmatpush1.msra.mxu0 0.0
  %995 = vmatprep.subr.mxu0 0.0
  %996 = vmatpush1.msra.mxu0 0.0
  %997 = vmatprep.subr.mxu0 0.0
  %998 = vmatpush1.msra.mxu0 0.0
  %999 = vmatprep.subr.mxu0 0.0
  %1000 = vmatpush1.msra.mxu0 0.0
  %1001 = vmatprep.subr.mxu0 0.0
  %1002 = vmatpush1.msra.mxu0 0.0
  %1003 = vmatprep.subr.mxu0 0.0
  %1004 = vmatpush1.msra.mxu0 0.0
  %1005 = vmatprep.subr.mxu0 0.0
  %1006 = vmatpush1.msra.mxu0 0.0
  %1007 = vmatprep.subr.mxu0 0.0
  %1008 = vmatpush1.msra.mxu0 0.0
  %1009 = vmatprep.subr.mxu0 0.0
  %1010 = vmatpush1.msra.mxu0 0.0
  %1011 = vmatprep.subr.mxu0 0.0
  %1012 = vmatpush1.msra.mxu0 0.0
  %1013 = vmatprep.subr.mxu0 0.0
  %1014 = vmatpush1.msra.mxu0 0.0
  %1015 = vmatprep.subr.mxu0 0.0
  %1016 = vmatpush1.msra.mxu0 0.0
  %1017 = vmatprep.subr.mxu0 0.0
  %1018 = vmatpush1.msra.mxu0 0.0
  %1019 = vmatprep.subr.mxu0 0.0
  %1020 = vmatpush1.msra.mxu0 0.0
  %1021 = vmatprep.mubr.f32.mxu0 0.0
  %1022 = vmatmul.mubr.f32.gmra.mrb[0].mxu0 %v955
  %v1023 = vpop.f32.mrb[0].mxu0
  %v1024 = vadd.f32 0.0, %v1023
  %v1025 = vpop.f32.mrb[0].mxu0
  %1026 = vdwg.mxu0
  %v1028 = vrot.slane %v1024, 2
  %v1030 = vadd.f32 %v105, %v1028
  %v1031 = vxor.u32 %v1030, 2147483648
  %v1032 = vmul.f32 %v1031, 1.442695
  %v1033 = vpow.pop %v1032
  %v1034 = vadd.f32 %v1033, 1.0
  %v1035 = vrcp.pop %v1034
  %v1036 = vmul.f32 1.0, %v1035
  %v1037 = vadd.f32 %v1024, %v282
  %v1039 = vrot.slane %v1037, 2
  %1040 = vrot.lane.b32.xlu0 %v1039, 64
  %v1041 = vpop.permute.xlu0 %1040
  %v1043 = vmul.f32 %v1036, %v1041
  %1045 = vrot.lane.b32.xlu0 %v1043, 64
  %v1046 = vpop.permute.xlu0 %1045
  %v1048 = vadd.f32 %v105, %v1046
  %v1049 = vtanh.pop %v1048
  %v1050 = vsub.f32 1.0, %v1036
  %1052 = vrot.lane.b32.xlu0 %v1049, 96
  %v1053 = vpop.permute.xlu0 %1052
  %v1055 = vmul.f32 %v1050, %v1053
  %v1056 = vrot.slane %v950, 6
  %v1058 = vmul.f32 %v1036, %v1056
  %v1059 = vadd.f32 %v1055, %v1058
  %v1060 = vld [vmem:[%s2 + $0xa3] sm:$0x1]
  %v1061 = vrot.slane %v411, 1
  %v1063 = vrot.slane %v520, 2
  %v1065 = vrot.slane %v629, 3
  %v1067 = vrot.slane %v733, 4
  %v1069 = vrot.slane %v841, 5
  %v1072 = vrot.slane %v1059, 7
  %vm1074 = vcmask 1040384
  %v1075 = vsel %vm1074, %v303, %v1061
  %vm1076 = vcmask 1041408
  %v1077 = vsel %vm1076, %v1075, %v1063
  %vm1078 = vcmask 1042432
  %v1079 = vsel %vm1078, %v1077, %v1065
  %vm1080 = vcmask 1043456
  %v1081 = vsel %vm1080, %v1079, %v1067
  %vm1082 = vcmask 1044480
  %v1083 = vsel %vm1082, %v1081, %v1069
  %vm1084 = vcmask 1045504
  %v1085 = vsel %vm1084, %v1083, %v1056
  %vm1086 = vcmask 1046528
  %v1087 = vsel %vm1086, %v1085, %v1072
  %v1088 = vrot.slane %v303, 1
  %v1091 = vrot.slane %v520, 3
  %v1093 = vrot.slane %v629, 4
  %v1095 = vrot.slane %v733, 5
  %v1097 = vrot.slane %v950, 7
  %v1099 = vsel %vm1074, %v1088, %v413
  %v1100 = vsel %vm1076, %v1099, %v1091
  %v1101 = vsel %vm1078, %v1100, %v1093
  %v1102 = vsel %vm1080, %v1101, %v1095
  %v1103 = vsel %vm1082, %v1102, %v947
  %v1104 = vsel %vm1084, %v1103, %v1097
  %v1105 = vsel %vm1086, %v1104, %v1059
  %1107 = vrot.lane.b32.xlu0 %v1087, 96
  %v1108 = vpop.permute.xlu0 %1107
  %1113 = vrot.lane.b32.xlu0 %v195, 32
  %v1114 = vpop.permute.xlu0 %1113
  %1115 = vrot.lane.b32.xlu0 %v196, 32
  %v1116 = vpop.permute.xlu0 %1115
  %1117 = vrot.lane.b32.xlu0 %v197, 32
  %v1118 = vpop.permute.xlu0 %1117
  %1119 = vrot.lane.b32.xlu0 %v198, 32
  %v1120 = vpop.permute.xlu0 %1119
  %v1125 = vsel %vm199, %v1108, 0
  %1127 = vmatprep.subr.mxu0 0.0
  %1128 = vmatpush1.msra.mxu0 %v1114
  %1129 = vmatprep.subr.mxu0 0.0
  %1130 = vmatpush1.msra.mxu0 %v1116
  %1131 = vmatprep.subr.mxu0 0.0
  %1132 = vmatpush1.msra.mxu0 %v1118
  %1133 = vmatprep.subr.mxu0 0.0
  %1134 = vmatpush1.msra.mxu0 %v1120
  %1135 = vmatprep.subr.mxu0 0.0
  %1136 = vmatpush1.msra.mxu0 0.0
  %1137 = vmatprep.subr.mxu0 0.0
  %1138 = vmatpush1.msra.mxu0 0.0
  %1139 = vmatprep.subr.mxu0 0.0
  %1140 = vmatpush1.msra.mxu0 0.0
  %1141 = vmatprep.subr.mxu0 0.0
  %1142 = vmatpush1.msra.mxu0 0.0
  %1143 = vmatprep.subr.mxu0 0.0
  %1144 = vmatpush1.msra.mxu0 0.0
  %1145 = vmatprep.subr.mxu0 0.0
  %1146 = vmatpush1.msra.mxu0 0.0
  %1147 = vmatprep.subr.mxu0 0.0
  %1148 = vmatpush1.msra.mxu0 0.0
  %1149 = vmatprep.subr.mxu0 0.0
  %1150 = vmatpush1.msra.mxu0 0.0
  %1151 = vmatprep.subr.mxu0 0.0
  %1152 = vmatpush1.msra.mxu0 0.0
  %1153 = vmatprep.subr.mxu0 0.0
  %1154 = vmatpush1.msra.mxu0 0.0
  %1155 = vmatprep.subr.mxu0 0.0
  %1156 = vmatpush1.msra.mxu0 0.0
  %1157 = vmatprep.subr.mxu0 0.0
  %1158 = vmatpush1.msra.mxu0 0.0
  %1159 = vmatprep.subr.mxu0 0.0
  %1160 = vmatpush1.msra.mxu0 0.0
  %1161 = vmatprep.subr.mxu0 0.0
  %1162 = vmatpush1.msra.mxu0 0.0
  %1163 = vmatprep.subr.mxu0 0.0
  %1164 = vmatpush1.msra.mxu0 0.0
  %1165 = vmatprep.subr.mxu0 0.0
  %1166 = vmatpush1.msra.mxu0 0.0
  %1167 = vmatprep.subr.mxu0 0.0
  %1168 = vmatpush1.msra.mxu0 0.0
  %1169 = vmatprep.subr.mxu0 0.0
  %1170 = vmatpush1.msra.mxu0 0.0
  %1171 = vmatprep.subr.mxu0 0.0
  %1172 = vmatpush1.msra.mxu0 0.0
  %1173 = vmatprep.subr.mxu0 0.0
  %1174 = vmatpush1.msra.mxu0 0.0
  %1175 = vmatprep.subr.mxu0 0.0
  %1176 = vmatpush1.msra.mxu0 0.0
  %1177 = vmatprep.subr.mxu0 0.0
  %1178 = vmatpush1.msra.mxu0 0.0
  %1179 = vmatprep.subr.mxu0 0.0
  %1180 = vmatpush1.msra.mxu0 0.0
  %1181 = vmatprep.subr.mxu0 0.0
  %1182 = vmatpush1.msra.mxu0 0.0
  %1183 = vmatprep.subr.mxu0 0.0
  %1184 = vmatpush1.msra.mxu0 0.0
  %1185 = vmatprep.subr.mxu0 0.0
  %1186 = vmatpush1.msra.mxu0 0.0
  %1187 = vmatprep.subr.mxu0 0.0
  %1188 = vmatpush1.msra.mxu0 0.0
  %1189 = vmatprep.subr.mxu0 0.0
  %1190 = vmatpush1.msra.mxu0 0.0
  %1191 = vmatprep.mubr.f32.mxu0 0.0
  %1192 = vmatmul.mubr.f32.gmra.mrb[0].mxu0 %v1125
  %v1193 = vpop.f32.mrb[0].mxu0
  %v1194 = vadd.f32 0.0, %v1193
  %v1195 = vpop.f32.mrb[0].mxu0
  %1196 = vdwg.mxu0
  %1198 = vrot.lane.b32.xlu0 %v1105, 96
  %v1199 = vpop.permute.xlu0 %1198
  %v1200 = vsel %vm199, %v1199, 0
  %1202 = vmatprep.subr.mxu0 0.0
  %1203 = vmatpush1.msra.mxu0 %v1114
  %1204 = vmatprep.subr.mxu0 0.0
  %1205 = vmatpush1.msra.mxu0 %v1116
  %1206 = vmatprep.subr.mxu0 0.0
  %1207 = vmatpush1.msra.mxu0 %v1118
  %1208 = vmatprep.subr.mxu0 0.0
  %1209 = vmatpush1.msra.mxu0 %v1120
  %1210 = vmatprep.subr.mxu0 0.0
  %1211 = vmatpush1.msra.mxu0 0.0
  %1212 = vmatprep.subr.mxu0 0.0
  %1213 = vmatpush1.msra.mxu0 0.0
  %1214 = vmatprep.subr.mxu0 0.0
  %1215 = vmatpush1.msra.mxu0 0.0
  %1216 = vmatprep.subr.mxu0 0.0
  %1217 = vmatpush1.msra.mxu0 0.0
  %1218 = vmatprep.subr.mxu0 0.0
  %1219 = vmatpush1.msra.mxu0 0.0
  %1220 = vmatprep.subr.mxu0 0.0
  %1221 = vmatpush1.msra.mxu0 0.0
  %1222 = vmatprep.subr.mxu0 0.0
  %1223 = vmatpush1.msra.mxu0 0.0
  %1224 = vmatprep.subr.mxu0 0.0
  %1225 = vmatpush1.msra.mxu0 0.0
  %1226 = vmatprep.subr.mxu0 0.0
  %1227 = vmatpush1.msra.mxu0 0.0
  %1228 = vmatprep.subr.mxu0 0.0
  %1229 = vmatpush1.msra.mxu0 0.0
  %1230 = vmatprep.subr.mxu0 0.0
  %1231 = vmatpush1.msra.mxu0 0.0
  %1232 = vmatprep.subr.mxu0 0.0
  %1233 = vmatpush1.msra.mxu0 0.0
  %1234 = vmatprep.subr.mxu0 0.0
  %1235 = vmatpush1.msra.mxu0 0.0
  %1236 = vmatprep.subr.mxu0 0.0
  %1237 = vmatpush1.msra.mxu0 0.0
  %1238 = vmatprep.subr.mxu0 0.0
  %1239 = vmatpush1.msra.mxu0 0.0
  %1240 = vmatprep.subr.mxu0 0.0
  %1241 = vmatpush1.msra.mxu0 0.0
  %1242 = vmatprep.subr.mxu0 0.0
  %1243 = vmatpush1.msra.mxu0 0.0
  %1244 = vmatprep.subr.mxu0 0.0
  %1245 = vmatpush1.msra.mxu0 0.0
  %1246 = vmatprep.subr.mxu0 0.0
  %1247 = vmatpush1.msra.mxu0 0.0
  %1248 = vmatprep.subr.mxu0 0.0
  %1249 = vmatpush1.msra.mxu0 0.0
  %1250 = vmatprep.subr.mxu0 0.0
  %1251 = vmatpush1.msra.mxu0 0.0
  %1252 = vmatprep.subr.mxu0 0.0
  %1253 = vmatpush1.msra.mxu0 0.0
  %1254 = vmatprep.subr.mxu0 0.0
  %1255 = vmatpush1.msra.mxu0 0.0
  %1256 = vmatprep.subr.mxu0 0.0
  %1257 = vmatpush1.msra.mxu0 0.0
  %1258 = vmatprep.subr.mxu0 0.0
  %1259 = vmatpush1.msra.mxu0 0.0
  %1260 = vmatprep.subr.mxu0 0.0
  %1261 = vmatpush1.msra.mxu0 0.0
  %1262 = vmatprep.subr.mxu0 0.0
  %1263 = vmatpush1.msra.mxu0 0.0
  %1264 = vmatprep.subr.mxu0 0.0
  %1265 = vmatpush1.msra.mxu0 0.0
  %1266 = vmatprep.mubr.f32.mxu0 0.0
  %1267 = vmatmul.mubr.f32.gmra.mrb[0].mxu0 %v1200
  %v1268 = vpop.f32.mrb[0].mxu0
  %v1269 = vadd.f32 0.0, %v1268
  %v1270 = vpop.f32.mrb[0].mxu0
  %1271 = vdwg.mxu0
  %v1272 = vld [vmem:[%s1] sm:$0xff]
  %v1273 = vld [vmem:[%s2 + $0x40] sm:$0xff]
  %v1274 = vld [vmem:[%s2 + $0x48] sm:$0xff]
  %v1275 = vld [vmem:[%s2 + $0x50] sm:$0xff]
  %v1276 = vld [vmem:[%s2 + $0x58] sm:$0xff]
  %v1277 = vld [vmem:[%s2 + $0x20] sm:$0xff]
  %v1278 = vld [vmem:[%s2 + $0x28] sm:$0xff]
  %v1279 = vld [vmem:[%s2 + $0x30] sm:$0xff]
  %v1280 = vld [vmem:[%s2 + $0x38] sm:$0xff]
  %v1281 = vrot.slane %v1059, 6
  %1282 = vrot.lane.b32.xlu0 %v1281, 96
  %v1283 = vpop.permute.xlu0 %1282
  %v1284 = vsel %vm199, %v1283, 0
  %1286 = vmatprep.subr.mxu0 0.0
  %1287 = vmatpush1.msra.mxu0 %v1273
  %1288 = vmatprep.subr.mxu0 0.0
  %1289 = vmatpush1.msra.mxu0 %v1274
  %1290 = vmatprep.subr.mxu0 0.0
  %1291 = vmatpush1.msra.mxu0 %v1275
  %1292 = vmatprep.subr.mxu0 0.0
  %1293 = vmatpush1.msra.mxu0 %v1276
  %1294 = vmatprep.subr.mxu0 0.0
  %1295 = vmatpush1.msra.mxu0 0.0
  %1296 = vmatprep.subr.mxu0 0.0
  %1297 = vmatpush1.msra.mxu0 0.0
  %1298 = vmatprep.subr.mxu0 0.0
  %1299 = vmatpush1.msra.mxu0 0.0
  %1300 = vmatprep.subr.mxu0 0.0
  %1301 = vmatpush1.msra.mxu0 0.0
  %1302 = vmatprep.subr.mxu0 0.0
  %1303 = vmatpush1.msra.mxu0 0.0
  %1304 = vmatprep.subr.mxu0 0.0
  %1305 = vmatpush1.msra.mxu0 0.0
  %1306 = vmatprep.subr.mxu0 0.0
  %1307 = vmatpush1.msra.mxu0 0.0
  %1308 = vmatprep.subr.mxu0 0.0
  %1309 = vmatpush1.msra.mxu0 0.0
  %1310 = vmatprep.subr.mxu0 0.0
  %1311 = vmatpush1.msra.mxu0 0.0
  %1312 = vmatprep.subr.mxu0 0.0
  %1313 = vmatpush1.msra.mxu0 0.0
  %1314 = vmatprep.subr.mxu0 0.0
  %1315 = vmatpush1.msra.mxu0 0.0
  %1316 = vmatprep.subr.mxu0 0.0
  %1317 = vmatpush1.msra.mxu0 0.0
  %1318 = vmatprep.subr.mxu0 0.0
  %1319 = vmatpush1.msra.mxu0 0.0
  %1320 = vmatprep.subr.mxu0 0.0
  %1321 = vmatpush1.msra.mxu0 0.0
  %1322 = vmatprep.subr.mxu0 0.0
  %1323 = vmatpush1.msra.mxu0 0.0
  %1324 = vmatprep.subr.mxu0 0.0
  %1325 = vmatpush1.msra.mxu0 0.0
  %1326 = vmatprep.subr.mxu0 0.0
  %1327 = vmatpush1.msra.mxu0 0.0
  %1328 = vmatprep.subr.mxu0 0.0
  %1329 = vmatpush1.msra.mxu0 0.0
  %1330 = vmatprep.subr.mxu0 0.0
  %1331 = vmatpush1.msra.mxu0 0.0
  %1332 = vmatprep.subr.mxu0 0.0
  %1333 = vmatpush1.msra.mxu0 0.0
  %1334 = vmatprep.subr.mxu0 0.0
  %1335 = vmatpush1.msra.mxu0 0.0
  %1336 = vmatprep.subr.mxu0 0.0
  %1337 = vmatpush1.msra.mxu0 0.0
  %1338 = vmatprep.subr.mxu0 0.0
  %1339 = vmatpush1.msra.mxu0 0.0
  %1340 = vmatprep.subr.mxu0 0.0
  %1341 = vmatpush1.msra.mxu0 0.0
  %1342 = vmatprep.subr.mxu0 0.0
  %1343 = vmatpush1.msra.mxu0 0.0
  %1344 = vmatprep.subr.mxu0 0.0
  %1345 = vmatpush1.msra.mxu0 0.0
  %1346 = vmatprep.subr.mxu0 0.0
  %1347 = vmatpush1.msra.mxu0 0.0
  %1348 = vmatprep.subr.mxu0 0.0
  %1349 = vmatpush1.msra.mxu0 0.0
  %1350 = vmatprep.mubr.f32.mxu0 0.0
  %1351 = vmatmul.mubr.f32.gmra.mrb[0].mxu0 %v1284
  %v1352 = vpop.f32.mrb[0].mxu0
  %v1353 = vadd.f32 0.0, %v1352
  %v1354 = vpop.f32.mrb[0].mxu0
  %1355 = vdwg.mxu0
  %v1356 = vlaneseq
  %v1357 = vshrl.u32 %v1356, 7
  %v1358 = vsub.s32 0, %v1357
  %v1359 = vrot.slane %v1353, %v1358
  %1361 = vrot.lane.b32.xlu0 %v1359, 32
  %v1362 = vpop.permute.xlu0 %1361
  %v1364 = vadd.f32 %v1194, %v1362
  %v1365 = vtanh.pop %v1364
  %v1366 = vlaneseq
  %v1367 = vshrl.u32 %v1366, 7
  %v1368 = vsub.s32 0, %v1367
  %v1369 = vrot.slane %v1060, %v1368
  %v1370 = vmul.f32 %v1365, %v1369
  %v1371 = vsel %vm26, %v1370, 0.0
  %1372 = vadd.xlane.f32.xlu0 %v1371
  %v1373 = vpop.xlane.xlu0 %1372
  %v1374 = vadd.f32 %v1373, %v1272
  %vm1375 = vcmask 7168
  %v1376 = vsel %vm1375, %v1374, -inf
  %v1377 = vrot.slane %v1376, 4
  %v1378 = vmax.f32 %v1376, %v1377
  %v1379 = vrot.slane %v1378, 2
  %v1380 = vmax.f32 %v1378, %v1379
  %v1381 = vrot.slane %v1380, 1
  %v1382 = vmax.f32 %v1380, %v1381
  %v1383 = vsub.f32 %v1374, %v1382
  %v1384 = vmul.f32 %v1383, 1.442695
  %v1385 = vpow.pop %v1384
  %v1386 = vsel %vm1375, %v1385, 0.0
  %v1387 = vrot.slane %v1386, 4
  %v1388 = vadd.f32 %v1386, %v1387
  %v1389 = vrot.slane %v1388, 2
  %v1390 = vadd.f32 %v1388, %v1389
  %v1391 = vrot.slane %v1390, 1
  %v1392 = vadd.f32 %v1390, %v1391
  %v1393 = vrcp.pop %v1392
  %v1394 = vmul.f32 %v1385, %v1393
  %1396 = vset.pattern.permute.xlu0 0
  %1397 = vperm.xlu0 %1396, %v1394
  %v1398 = vpop.permute.xlu0 %1397
  %v1400 = vmul.f32 %v1398, %v1087
  %vm1401 = vcmask 523520
  %v1402 = vsel %vm1401, %v1400, 0.0
  %v1403 = vrot.slane %v1402, 4
  %v1404 = vadd.f32 %v1402, %v1403
  %v1405 = vrot.slane %v1404, 2
  %v1406 = vadd.f32 %v1404, %v1405
  %v1407 = vrot.slane %v1406, 1
  %v1408 = vadd.f32 %v1406, %v1407
  %v1409 = vlaneseq
  %v1410 = vshrl.u32 %v1409, 7
  %v1411 = vsub.s32 1, %v1410
  %v1412 = vrot.slane %v1353, %v1411
  %1414 = vrot.lane.b32.xlu0 %v1412, 32
  %v1415 = vpop.permute.xlu0 %1414
  %v1417 = vadd.f32 %v1269, %v1415
  %v1418 = vtanh.pop %v1417
  %v1419 = vmul.f32 %v1418, %v1369
  %v1420 = vsel %vm26, %v1419, 0.0
  %1421 = vadd.xlane.f32.xlu0 %v1420
  %v1422 = vpop.xlane.xlu0 %1421
  %v1423 = vadd.f32 %v1422, %v1272
  %vm1424 = vcmask 15368
  %v1425 = vsel %vm1424, %v1423, -inf
  %v1426 = vrot.slane %v1425, 4
  %v1427 = vmax.f32 %v1425, %v1426
  %v1428 = vrot.slane %v1427, 2
  %v1429 = vmax.f32 %v1427, %v1428
  %v1430 = vrot.slane %v1429, 1
  %v1431 = vmax.f32 %v1429, %v1430
  %v1432 = vsub.f32 %v1423, %v1431
  %v1433 = vmul.f32 %v1432, 1.442695
  %v1434 = vpow.pop %v1433
  %v1435 = vsel %vm1424, %v1434, 0.0
  %v1436 = vrot.slane %v1435, 4
  %v1437 = vadd.f32 %v1435, %v1436
  %v1438 = vrot.slane %v1437, 2
  %v1439 = vadd.f32 %v1437, %v1438
  %v1440 = vrot.slane %v1439, 1
  %v1441 = vadd.f32 %v1439, %v1440
  %v1442 = vrcp.pop %v1441
  %v1443 = vmul.f32 %v1434, %v1442
  %1445 = vset.pattern.permute.xlu0 1
  %1446 = vperm.xlu0 %1445, %v1443
  %v1447 = vpop.permute.xlu0 %1446
  %v1449 = vmul.f32 %v1447, %v1105
  %v1450 = vsel %vm1401, %v1449, 0.0
  %v1451 = vrot.slane %v1450, 4
  %v1452 = vadd.f32 %v1450, %v1451
  %v1453 = vrot.slane %v1452, 2
  %v1454 = vadd.f32 %v1452, %v1453
  %v1455 = vrot.slane %v1454, 1
  %v1456 = vadd.f32 %v1454, %v1455
  %v1457 = vsel %vm1074, %v1408, %v1456
  %1459 = vrot.lane.b32.xlu0 %v1457, 96
  %v1460 = vpop.permute.xlu0 %1459
  %v1461 = vsel %vm199, %v1460, 0
  %1463 = vmatprep.subr.mxu0 0.0
  %1464 = vmatpush1.msra.mxu0 %v1277
  %1465 = vmatprep.subr.mxu0 0.0
  %1466 = vmatpush1.msra.mxu0 %v1278
  %1467 = vmatprep.subr.mxu0 0.0
  %1468 = vmatpush1.msra.mxu0 %v1279
  %1469 = vmatprep.subr.mxu0 0.0
  %1470 = vmatpush1.msra.mxu0 %v1280
  %1471 = vmatprep.subr.mxu0 0.0
  %1472 = vmatpush1.msra.mxu0 0.0
  %1473 = vmatprep.subr.mxu0 0.0
  %1474 = vmatpush1.msra.mxu0 0.0
  %1475 = vmatprep.subr.mxu0 0.0
  %1476 = vmatpush1.msra.mxu0 0.0
  %1477 = vmatprep.subr.mxu0 0.0
  %1478 = vmatpush1.msra.mxu0 0.0
  %1479 = vmatprep.subr.mxu0 0.0
  %1480 = vmatpush1.msra.mxu0 0.0
  %1481 = vmatprep.subr.mxu0 0.0
  %1482 = vmatpush1.msra.mxu0 0.0
  %1483 = vmatprep.subr.mxu0 0.0
  %1484 = vmatpush1.msra.mxu0 0.0
  %1485 = vmatprep.subr.mxu0 0.0
  %1486 = vmatpush1.msra.mxu0 0.0
  %1487 = vmatprep.subr.mxu0 0.0
  %1488 = vmatpush1.msra.mxu0 0.0
  %1489 = vmatprep.subr.mxu0 0.0
  %1490 = vmatpush1.msra.mxu0 0.0
  %1491 = vmatprep.subr.mxu0 0.0
  %1492 = vmatpush1.msra.mxu0 0.0
  %1493 = vmatprep.subr.mxu0 0.0
  %1494 = vmatpush1.msra.mxu0 0.0
  %1495 = vmatprep.subr.mxu0 0.0
  %1496 = vmatpush1.msra.mxu0 0.0
  %1497 = vmatprep.subr.mxu0 0.0
  %1498 = vmatpush1.msra.mxu0 0.0
  %1499 = vmatprep.subr.mxu0 0.0
  %1500 = vmatpush1.msra.mxu0 0.0
  %1501 = vmatprep.subr.mxu0 0.0
  %1502 = vmatpush1.msra.mxu0 0.0
  %1503 = vmatprep.subr.mxu0 0.0
  %1504 = vmatpush1.msra.mxu0 0.0
  %1505 = vmatprep.subr.mxu0 0.0
  %1506 = vmatpush1.msra.mxu0 0.0
  %1507 = vmatprep.subr.mxu0 0.0
  %1508 = vmatpush1.msra.mxu0 0.0
  %1509 = vmatprep.subr.mxu0 0.0
  %1510 = vmatpush1.msra.mxu0 0.0
  %1511 = vmatprep.subr.mxu0 0.0
  %1512 = vmatpush1.msra.mxu0 0.0
  %1513 = vmatprep.subr.mxu0 0.0
  %1514 = vmatpush1.msra.mxu0 0.0
  %1515 = vmatprep.subr.mxu0 0.0
  %1516 = vmatpush1.msra.mxu0 0.0
  %1517 = vmatprep.subr.mxu0 0.0
  %1518 = vmatpush1.msra.mxu0 0.0
  %1519 = vmatprep.subr.mxu0 0.0
  %1520 = vmatpush1.msra.mxu0 0.0
  %1521 = vmatprep.subr.mxu0 0.0
  %1522 = vmatpush1.msra.mxu0 0.0
  %1523 = vmatprep.subr.mxu0 0.0
  %1524 = vmatpush1.msra.mxu0 0.0
  %1525 = vmatprep.subr.mxu0 0.0
  %1526 = vmatpush1.msra.mxu0 0.0
  %1527 = vmatprep.mubr.f32.mxu0 0.0
  %1528 = vmatmul.mubr.f32.gmra.mrb[0].mxu0 %v1461
  %v1529 = vpop.f32.mrb[0].mxu0
  %v1530 = vadd.f32 0.0, %v1529
  %v1531 = vpop.f32.mrb[0].mxu0
  %1532 = vdwg.mxu0
  %v1533 = vadd.f32 %v187, %v1530
  %v1534 = vadd.f32 %v1533, %v1353
  %v1535 = vxor.u32 %v1534, 2147483648
  %v1536 = vmul.f32 %v1535, 1.442695
  %v1537 = vpow.pop %v1536
  %v1538 = vadd.f32 %v1537, 1.0
  %v1539 = vrcp.pop %v1538
  %v1540 = vmul.f32 1.0, %v1539
  %1542 = vrot.lane.b32.xlu0 %v111, 96
  %v1543 = vpop.permute.xlu0 %1542
  %v1545 = vadd.f32 %v1353, %v1543
  %1547 = vrot.lane.b32.xlu0 %v1545, 64
  %v1548 = vpop.permute.xlu0 %1547
  %v1550 = vmul.f32 %v1540, %v1548
  %1552 = vrot.lane.b32.xlu0 %v1550, 64
  %v1553 = vpop.permute.xlu0 %1552
  %v1555 = vadd.f32 %v1533, %v1553
  %v1556 = vtanh.pop %v1555
  %v1557 = vsub.f32 1.0, %v1540
  %1559 = vrot.lane.b32.xlu0 %v1556, 96
  %v1560 = vpop.permute.xlu0 %1559
  %v1562 = vmul.f32 %v1557, %v1560
  %v1564 = vmul.f32 %v1540, %v1281
  %v1565 = vadd.f32 %v1562, %v1564
  %1567 = vrot.lane.b32.xlu0 %v1565, 96
  %v1568 = vpop.permute.xlu0 %1567
  %v1569 = vsel %vm199, %v1568, 0
  %1571 = vmatprep.subr.mxu0 0.0
  %1572 = vmatpush1.msra.mxu0 %v1273
  %1573 = vmatprep.subr.mxu0 0.0
  %1574 = vmatpush1.msra.mxu0 %v1274
  %1575 = vmatprep.subr.mxu0 0.0
  %1576 = vmatpush1.msra.mxu0 %v1275
  %1577 = vmatprep.subr.mxu0 0.0
  %1578 = vmatpush1.msra.mxu0 %v1276
  %1579 = vmatprep.subr.mxu0 0.0
  %1580 = vmatpush1.msra.mxu0 0.0
  %1581 = vmatprep.subr.mxu0 0.0
  %1582 = vmatpush1.msra.mxu0 0.0
  %1583 = vmatprep.subr.mxu0 0.0
  %1584 = vmatpush1.msra.mxu0 0.0
  %1585 = vmatprep.subr.mxu0 0.0
  %1586 = vmatpush1.msra.mxu0 0.0
  %1587 = vmatprep.subr.mxu0 0.0
  %1588 = vmatpush1.msra.mxu0 0.0
  %1589 = vmatprep.subr.mxu0 0.0
  %1590 = vmatpush1.msra.mxu0 0.0
  %1591 = vmatprep.subr.mxu0 0.0
  %1592 = vmatpush1.msra.mxu0 0.0
  %1593 = vmatprep.subr.mxu0 0.0
  %1594 = vmatpush1.msra.mxu0 0.0
  %1595 = vmatprep.subr.mxu0 0.0
  %1596 = vmatpush1.msra.mxu0 0.0
  %1597 = vmatprep.subr.mxu0 0.0
  %1598 = vmatpush1.msra.mxu0 0.0
  %1599 = vmatprep.subr.mxu0 0.0
  %1600 = vmatpush1.msra.mxu0 0.0
  %1601 = vmatprep.subr.mxu0 0.0
  %1602 = vmatpush1.msra.mxu0 0.0
  %1603 = vmatprep.subr.mxu0 0.0
  %1604 = vmatpush1.msra.mxu0 0.0
  %1605 = vmatprep.subr.mxu0 0.0
  %1606 = vmatpush1.msra.mxu0 0.0
  %1607 = vmatprep.subr.mxu0 0.0
  %1608 = vmatpush1.msra.mxu0 0.0
  %1609 = vmatprep.subr.mxu0 0.0
  %1610 = vmatpush1.msra.mxu0 0.0
  %1611 = vmatprep.subr.mxu0 0.0
  %1612 = vmatpush1.msra.mxu0 0.0
  %1613 = vmatprep.subr.mxu0 0.0
  %1614 = vmatpush1.msra.mxu0 0.0
  %1615 = vmatprep.subr.mxu0 0.0
  %1616 = vmatpush1.msra.mxu0 0.0
  %1617 = vmatprep.subr.mxu0 0.0
  %1618 = vmatpush1.msra.mxu0 0.0
  %1619 = vmatprep.subr.mxu0 0.0
  %1620 = vmatpush1.msra.mxu0 0.0
  %1621 = vmatprep.subr.mxu0 0.0
  %1622 = vmatpush1.msra.mxu0 0.0
  %1623 = vmatprep.subr.mxu0 0.0
  %1624 = vmatpush1.msra.mxu0 0.0
  %1625 = vmatprep.subr.mxu0 0.0
  %1626 = vmatpush1.msra.mxu0 0.0
  %1627 = vmatprep.subr.mxu0 0.0
  %1628 = vmatpush1.msra.mxu0 0.0
  %1629 = vmatprep.subr.mxu0 0.0
  %1630 = vmatpush1.msra.mxu0 0.0
  %1631 = vmatprep.subr.mxu0 0.0
  %1632 = vmatpush1.msra.mxu0 0.0
  %1633 = vmatprep.subr.mxu0 0.0
  %1634 = vmatpush1.msra.mxu0 0.0
  %1635 = vmatprep.mubr.f32.mxu0 0.0
  %1636 = vmatmul.mubr.f32.gmra.mrb[0].mxu0 %v1569
  %v1637 = vpop.f32.mrb[0].mxu0
  %v1638 = vadd.f32 0.0, %v1637
  %v1639 = vpop.f32.mrb[0].mxu0
  %1640 = vdwg.mxu0
  %v1641 = vlaneseq
  %v1642 = vshrl.u32 %v1641, 7
  %v1643 = vsub.s32 0, %v1642
  %v1644 = vrot.slane %v1638, %v1643
  %1646 = vrot.lane.b32.xlu0 %v1644, 32
  %v1647 = vpop.permute.xlu0 %1646
  %v1649 = vadd.f32 %v1194, %v1647
  %v1650 = vtanh.pop %v1649
  %v1651 = vmul.f32 %v1650, %v1369
  %v1652 = vsel %vm26, %v1651, 0.0
  %1653 = vadd.xlane.f32.xlu0 %v1652
  %v1654 = vpop.xlane.xlu0 %1653
  %v1655 = vadd.f32 %v1654, %v1272
  %v1656 = vsel %vm1375, %v1655, -inf
  %v1657 = vrot.slane %v1656, 4
  %v1658 = vmax.f32 %v1656, %v1657
  %v1659 = vrot.slane %v1658, 2
  %v1660 = vmax.f32 %v1658, %v1659
  %v1661 = vrot.slane %v1660, 1
  %v1662 = vmax.f32 %v1660, %v1661
  %v1663 = vsub.f32 %v1655, %v1662
  %v1664 = vmul.f32 %v1663, 1.442695
  %v1665 = vpow.pop %v1664
  %v1666 = vsel %vm1375, %v1665, 0.0
  %v1667 = vrot.slane %v1666, 4
  %v1668 = vadd.f32 %v1666, %v1667
  %v1669 = vrot.slane %v1668, 2
  %v1670 = vadd.f32 %v1668, %v1669
  %v1671 = vrot.slane %v1670, 1
  %v1672 = vadd.f32 %v1670, %v1671
  %v1673 = vrcp.pop %v1672
  %v1674 = vmul.f32 %v1665, %v1673
  %1676 = vset.pattern.permute.xlu0 0
  %1677 = vperm.xlu0 %1676, %v1674
  %v1678 = vpop.permute.xlu0 %1677
  %v1680 = vmul.f32 %v1678, %v1087
  %v1681 = vsel %vm1401, %v1680, 0.0
  %v1682 = vrot.slane %v1681, 4
  %v1683 = vadd.f32 %v1681, %v1682
  %v1684 = vrot.slane %v1683, 2
  %v1685 = vadd.f32 %v1683, %v1684
  %v1686 = vrot.slane %v1685, 1
  %v1687 = vadd.f32 %v1685, %v1686
  %v1688 = vlaneseq
  %v1689 = vshrl.u32 %v1688, 7
  %v1690 = vsub.s32 1, %v1689
  %v1691 = vrot.slane %v1638, %v1690
  %1693 = vrot.lane.b32.xlu0 %v1691, 32
  %v1694 = vpop.permute.xlu0 %1693
  %v1696 = vadd.f32 %v1269, %v1694
  %v1697 = vtanh.pop %v1696
  %v1698 = vmul.f32 %v1697, %v1369
  %v1699 = vsel %vm26, %v1698, 0.0
  %1700 = vadd.xlane.f32.xlu0 %v1699
  %v1701 = vpop.xlane.xlu0 %1700
  %v1702 = vadd.f32 %v1701, %v1272
  %v1703 = vsel %vm1424, %v1702, -inf
  %v1704 = vrot.slane %v1703, 4
  %v1705 = vmax.f32 %v1703, %v1704
  %v1706 = vrot.slane %v1705, 2
  %v1707 = vmax.f32 %v1705, %v1706
  %v1708 = vrot.slane %v1707, 1
  %v1709 = vmax.f32 %v1707, %v1708
  %v1710 = vsub.f32 %v1702, %v1709
  %v1711 = vmul.f32 %v1710, 1.442695
  %v1712 = vpow.pop %v1711
  %v1713 = vsel %vm1424, %v1712, 0.0
  %v1714 = vrot.slane %v1713, 4
  %v1715 = vadd.f32 %v1713, %v1714
  %v1716 = vrot.slane %v1715, 2
  %v1717 = vadd.f32 %v1715, %v1716
  %v1718 = vrot.slane %v1717, 1
  %v1719 = vadd.f32 %v1717, %v1718
  %v1720 = vrcp.pop %v1719
  %v1721 = vmul.f32 %v1712, %v1720
  %1723 = vset.pattern.permute.xlu0 1
  %1724 = vperm.xlu0 %1723, %v1721
  %v1725 = vpop.permute.xlu0 %1724
  %v1727 = vmul.f32 %v1725, %v1105
  %v1728 = vsel %vm1401, %v1727, 0.0
  %v1729 = vrot.slane %v1728, 4
  %v1730 = vadd.f32 %v1728, %v1729
  %v1731 = vrot.slane %v1730, 2
  %v1732 = vadd.f32 %v1730, %v1731
  %v1733 = vrot.slane %v1732, 1
  %v1734 = vadd.f32 %v1732, %v1733
  %v1735 = vsel %vm1074, %v1687, %v1734
  %1737 = vrot.lane.b32.xlu0 %v1735, 96
  %v1738 = vpop.permute.xlu0 %1737
  %v1739 = vsel %vm199, %v1738, 0
  %1741 = vmatprep.subr.mxu0 0.0
  %1742 = vmatpush1.msra.mxu0 %v1277
  %1743 = vmatprep.subr.mxu0 0.0
  %1744 = vmatpush1.msra.mxu0 %v1278
  %1745 = vmatprep.subr.mxu0 0.0
  %1746 = vmatpush1.msra.mxu0 %v1279
  %1747 = vmatprep.subr.mxu0 0.0
  %1748 = vmatpush1.msra.mxu0 %v1280
  %1749 = vmatprep.subr.mxu0 0.0
  %1750 = vmatpush1.msra.mxu0 0.0
  %1751 = vmatprep.subr.mxu0 0.0
  %1752 = vmatpush1.msra.mxu0 0.0
  %1753 = vmatprep.subr.mxu0 0.0
  %1754 = vmatpush1.msra.mxu0 0.0
  %1755 = vmatprep.subr.mxu0 0.0
  %1756 = vmatpush1.msra.mxu0 0.0
  %1757 = vmatprep.subr.mxu0 0.0
  %1758 = vmatpush1.msra.mxu0 0.0
  %1759 = vmatprep.subr.mxu0 0.0
  %1760 = vmatpush1.msra.mxu0 0.0
  %1761 = vmatprep.subr.mxu0 0.0
  %1762 = vmatpush1.msra.mxu0 0.0
  %1763 = vmatprep.subr.mxu0 0.0
  %1764 = vmatpush1.msra.mxu0 0.0
  %1765 = vmatprep.subr.mxu0 0.0
  %1766 = vmatpush1.msra.mxu0 0.0
  %1767 = vmatprep.subr.mxu0 0.0
  %1768 = vmatpush1.msra.mxu0 0.0
  %1769 = vmatprep.subr.mxu0 0.0
  %1770 = vmatpush1.msra.mxu0 0.0
  %1771 = vmatprep.subr.mxu0 0.0
  %1772 = vmatpush1.msra.mxu0 0.0
  %1773 = vmatprep.subr.mxu0 0.0
  %1774 = vmatpush1.msra.mxu0 0.0
  %1775 = vmatprep.subr.mxu0 0.0
  %1776 = vmatpush1.msra.mxu0 0.0
  %1777 = vmatprep.subr.mxu0 0.0
  %1778 = vmatpush1.msra.mxu0 0.0
  %1779 = vmatprep.subr.mxu0 0.0
  %1780 = vmatpush1.msra.mxu0 0.0
  %1781 = vmatprep.subr.mxu0 0.0
  %1782 = vmatpush1.msra.mxu0 0.0
  %1783 = vmatprep.subr.mxu0 0.0
  %1784 = vmatpush1.msra.mxu0 0.0
  %1785 = vmatprep.subr.mxu0 0.0
  %1786 = vmatpush1.msra.mxu0 0.0
  %1787 = vmatprep.subr.mxu0 0.0
  %1788 = vmatpush1.msra.mxu0 0.0
  %1789 = vmatprep.subr.mxu0 0.0
  %1790 = vmatpush1.msra.mxu0 0.0
  %1791 = vmatprep.subr.mxu0 0.0
  %1792 = vmatpush1.msra.mxu0 0.0
  %1793 = vmatprep.subr.mxu0 0.0
  %1794 = vmatpush1.msra.mxu0 0.0
  %1795 = vmatprep.subr.mxu0 0.0
  %1796 = vmatpush1.msra.mxu0 0.0
  %1797 = vmatprep.subr.mxu0 0.0
  %1798 = vmatpush1.msra.mxu0 0.0
  %1799 = vmatprep.subr.mxu0 0.0
  %1800 = vmatpush1.msra.mxu0 0.0
  %1801 = vmatprep.subr.mxu0 0.0
  %1802 = vmatpush1.msra.mxu0 0.0
  %1803 = vmatprep.subr.mxu0 0.0
  %1804 = vmatpush1.msra.mxu0 0.0
  %1805 = vmatprep.mubr.f32.mxu0 0.0
  %1806 = vmatmul.mubr.f32.gmra.mrb[0].mxu0 %v1739
  %v1807 = vpop.f32.mrb[0].mxu0
  %v1808 = vadd.f32 0.0, %v1807
  %v1809 = vpop.f32.mrb[0].mxu0
  %1810 = vdwg.mxu0
  %v1812 = vrot.slane %v1808, 6
  %v1814 = vadd.f32 %v187, %v1812
  %v1816 = vrot.slane %v1638, 6
  %v1818 = vadd.f32 %v1814, %v1816
  %v1819 = vxor.u32 %v1818, 2147483648
  %v1820 = vmul.f32 %v1819, 1.442695
  %v1821 = vpow.pop %v1820
  %v1822 = vadd.f32 %v1821, 1.0
  %v1823 = vrcp.pop %v1822
  %v1824 = vmul.f32 1.0, %v1823
  %v1825 = vadd.f32 %v1638, %v1543
  %v1827 = vrot.slane %v1825, 6
  %1828 = vrot.lane.b32.xlu0 %v1827, 64
  %v1829 = vpop.permute.xlu0 %1828
  %v1831 = vmul.f32 %v1824, %v1829
  %1833 = vrot.lane.b32.xlu0 %v1831, 64
  %v1834 = vpop.permute.xlu0 %1833
  %v1836 = vadd.f32 %v1814, %v1834
  %v1837 = vtanh.pop %v1836
  %v1838 = vsub.f32 1.0, %v1824
  %1840 = vrot.lane.b32.xlu0 %v1837, 96
  %v1841 = vpop.permute.xlu0 %1840
  %v1843 = vmul.f32 %v1838, %v1841
  %v1844 = vrot.slane %v1565, 6
  %v1846 = vmul.f32 %v1824, %v1844
  %v1847 = vadd.f32 %v1843, %v1846
  %v1849 = vrot.slane %v1847, 2
  %1850 = vrot.lane.b32.xlu0 %v1849, 96
  %v1851 = vpop.permute.xlu0 %1850
  %v1852 = vsel %vm199, %v1851, 0
  %1854 = vmatprep.subr.mxu0 0.0
  %1855 = vmatpush1.msra.mxu0 %v1273
  %1856 = vmatprep.subr.mxu0 0.0
  %1857 = vmatpush1.msra.mxu0 %v1274
  %1858 = vmatprep.subr.mxu0 0.0
  %1859 = vmatpush1.msra.mxu0 %v1275
  %1860 = vmatprep.subr.mxu0 0.0
  %1861 = vmatpush1.msra.mxu0 %v1276
  %1862 = vmatprep.subr.mxu0 0.0
  %1863 = vmatpush1.msra.mxu0 0.0
  %1864 = vmatprep.subr.mxu0 0.0
  %1865 = vmatpush1.msra.mxu0 0.0
  %1866 = vmatprep.subr.mxu0 0.0
  %1867 = vmatpush1.msra.mxu0 0.0
  %1868 = vmatprep.subr.mxu0 0.0
  %1869 = vmatpush1.msra.mxu0 0.0
  %1870 = vmatprep.subr.mxu0 0.0
  %1871 = vmatpush1.msra.mxu0 0.0
  %1872 = vmatprep.subr.mxu0 0.0
  %1873 = vmatpush1.msra.mxu0 0.0
  %1874 = vmatprep.subr.mxu0 0.0
  %1875 = vmatpush1.msra.mxu0 0.0
  %1876 = vmatprep.subr.mxu0 0.0
  %1877 = vmatpush1.msra.mxu0 0.0
  %1878 = vmatprep.subr.mxu0 0.0
  %1879 = vmatpush1.msra.mxu0 0.0
  %1880 = vmatprep.subr.mxu0 0.0
  %1881 = vmatpush1.msra.mxu0 0.0
  %1882 = vmatprep.subr.mxu0 0.0
  %1883 = vmatpush1.msra.mxu0 0.0
  %1884 = vmatprep.subr.mxu0 0.0
  %1885 = vmatpush1.msra.mxu0 0.0
  %1886 = vmatprep.subr.mxu0 0.0
  %1887 = vmatpush1.msra.mxu0 0.0
  %1888 = vmatprep.subr.mxu0 0.0
  %1889 = vmatpush1.msra.mxu0 0.0
  %1890 = vmatprep.subr.mxu0 0.0
  %1891 = vmatpush1.msra.mxu0 0.0
  %1892 = vmatprep.subr.mxu0 0.0
  %1893 = vmatpush1.msra.mxu0 0.0
  %1894 = vmatprep.subr.mxu0 0.0
  %1895 = vmatpush1.msra.mxu0 0.0
  %1896 = vmatprep.subr.mxu0 0.0
  %1897 = vmatpush1.msra.mxu0 0.0
  %1898 = vmatprep.subr.mxu0 0.0
  %1899 = vmatpush1.msra.mxu0 0.0
  %1900 = vmatprep.subr.mxu0 0.0
  %1901 = vmatpush1.msra.mxu0 0.0
  %1902 = vmatprep.subr.mxu0 0.0
  %1903 = vmatpush1.msra.mxu0 0.0
  %1904 = vmatprep.subr.mxu0 0.0
  %1905 = vmatpush1.msra.mxu0 0.0
  %1906 = vmatprep.subr.mxu0 0.0
  %1907 = vmatpush1.msra.mxu0 0.0
  %1908 = vmatprep.subr.mxu0 0.0
  %1909 = vmatpush1.msra.mxu0 0.0
  %1910 = vmatprep.subr.mxu0 0.0
  %1911 = vmatpush1.msra.mxu0 0.0
  %1912 = vmatprep.subr.mxu0 0.0
  %1913 = vmatpush1.msra.mxu0 0.0
  %1914 = vmatprep.subr.mxu0 0.0
  %1915 = vmatpush1.msra.mxu0 0.0
  %1916 = vmatprep.subr.mxu0 0.0
  %1917 = vmatpush1.msra.mxu0 0.0
  %1918 = vmatprep.mubr.f32.mxu0 0.0
  %1919 = vmatmul.mubr.f32.gmra.mrb[0].mxu0 %v1852
  %v1920 = vpop.f32.mrb[0].mxu0
  %v1921 = vadd.f32 0.0, %v1920
  %v1922 = vpop.f32.mrb[0].mxu0
  %1923 = vdwg.mxu0
  %v1924 = vlaneseq
  %v1925 = vshrl.u32 %v1924, 7
  %v1926 = vsub.s32 0, %v1925
  %v1927 = vrot.slane %v1921, %v1926
  %1929 = vrot.lane.b32.xlu0 %v1927, 32
  %v1930 = vpop.permute.xlu0 %1929
  %v1932 = vadd.f32 %v1194, %v1930
  %v1933 = vtanh.pop %v1932
  %v1934 = vmul.f32 %v1933, %v1369
  %v1935 = vsel %vm26, %v1934, 0.0
  %1936 = vadd.xlane.f32.xlu0 %v1935
  %v1937 = vpop.xlane.xlu0 %1936
  %v1938 = vadd.f32 %v1937, %v1272
  %v1939 = vsel %vm1375, %v1938, -inf
  %v1940 = vrot.slane %v1939, 4
  %v1941 = vmax.f32 %v1939, %v1940
  %v1942 = vrot.slane %v1941, 2
  %v1943 = vmax.f32 %v1941, %v1942
  %v1944 = vrot.slane %v1943, 1
  %v1945 = vmax.f32 %v1943, %v1944
  %v1946 = vsub.f32 %v1938, %v1945
  %v1947 = vmul.f32 %v1946, 1.442695
  %v1948 = vpow.pop %v1947
  %v1949 = vsel %vm1375, %v1948, 0.0
  %v1950 = vrot.slane %v1949, 4
  %v1951 = vadd.f32 %v1949, %v1950
  %v1952 = vrot.slane %v1951, 2
  %v1953 = vadd.f32 %v1951, %v1952
  %v1954 = vrot.slane %v1953, 1
  %v1955 = vadd.f32 %v1953, %v1954
  %v1956 = vrcp.pop %v1955
  %v1957 = vmul.f32 %v1948, %v1956
  %1959 = vset.pattern.permute.xlu0 0
  %1960 = vperm.xlu0 %1959, %v1957
  %v1961 = vpop.permute.xlu0 %1960
  %v1963 = vmul.f32 %v1961, %v1087
  %v1964 = vsel %vm1401, %v1963, 0.0
  %v1965 = vrot.slane %v1964, 4
  %v1966 = vadd.f32 %v1964, %v1965
  %v1967 = vrot.slane %v1966, 2
  %v1968 = vadd.f32 %v1966, %v1967
  %v1969 = vrot.slane %v1968, 1
  %v1970 = vadd.f32 %v1968, %v1969
  %v1971 = vlaneseq
  %v1972 = vshrl.u32 %v1971, 7
  %v1973 = vsub.s32 1, %v1972
  %v1974 = vrot.slane %v1921, %v1973
  %1976 = vrot.lane.b32.xlu0 %v1974, 32
  %v1977 = vpop.permute.xlu0 %1976
  %v1979 = vadd.f32 %v1269, %v1977
  %v1980 = vtanh.pop %v1979
  %v1981 = vmul.f32 %v1980, %v1369
  %v1982 = vsel %vm26, %v1981, 0.0
  %1983 = vadd.xlane.f32.xlu0 %v1982
  %v1984 = vpop.xlane.xlu0 %1983
  %v1985 = vadd.f32 %v1984, %v1272
  %v1986 = vsel %vm1424, %v1985, -inf
  %v1987 = vrot.slane %v1986, 4
  %v1988 = vmax.f32 %v1986, %v1987
  %v1989 = vrot.slane %v1988, 2
  %v1990 = vmax.f32 %v1988, %v1989
  %v1991 = vrot.slane %v1990, 1
  %v1992 = vmax.f32 %v1990, %v1991
  %v1993 = vsub.f32 %v1985, %v1992
  %v1994 = vmul.f32 %v1993, 1.442695
  %v1995 = vpow.pop %v1994
  %v1996 = vsel %vm1424, %v1995, 0.0
  %v1997 = vrot.slane %v1996, 4
  %v1998 = vadd.f32 %v1996, %v1997
  %v1999 = vrot.slane %v1998, 2
  %v2000 = vadd.f32 %v1998, %v1999
  %v2001 = vrot.slane %v2000, 1
  %v2002 = vadd.f32 %v2000, %v2001
  %v2003 = vrcp.pop %v2002
  %v2004 = vmul.f32 %v1995, %v2003
  %2006 = vset.pattern.permute.xlu0 1
  %2007 = vperm.xlu0 %2006, %v2004
  %v2008 = vpop.permute.xlu0 %2007
  %v2010 = vmul.f32 %v2008, %v1105
  %v2011 = vsel %vm1401, %v2010, 0.0
  %v2012 = vrot.slane %v2011, 4
  %v2013 = vadd.f32 %v2011, %v2012
  %v2014 = vrot.slane %v2013, 2
  %v2015 = vadd.f32 %v2013, %v2014
  %v2016 = vrot.slane %v2015, 1
  %v2017 = vadd.f32 %v2015, %v2016
  %v2018 = vsel %vm1074, %v1970, %v2017
  %2020 = vrot.lane.b32.xlu0 %v2018, 96
  %v2021 = vpop.permute.xlu0 %2020
  %v2022 = vsel %vm199, %v2021, 0
  %2024 = vmatprep.subr.mxu0 0.0
  %2025 = vmatpush1.msra.mxu0 %v1277
  %2026 = vmatprep.subr.mxu0 0.0
  %2027 = vmatpush1.msra.mxu0 %v1278
  %2028 = vmatprep.subr.mxu0 0.0
  %2029 = vmatpush1.msra.mxu0 %v1279
  %2030 = vmatprep.subr.mxu0 0.0
  %2031 = vmatpush1.msra.mxu0 %v1280
  %2032 = vmatprep.subr.mxu0 0.0
  %2033 = vmatpush1.msra.mxu0 0.0
  %2034 = vmatprep.subr.mxu0 0.0
  %2035 = vmatpush1.msra.mxu0 0.0
  %2036 = vmatprep.subr.mxu0 0.0
  %2037 = vmatpush1.msra.mxu0 0.0
  %2038 = vmatprep.subr.mxu0 0.0
  %2039 = vmatpush1.msra.mxu0 0.0
  %2040 = vmatprep.subr.mxu0 0.0
  %2041 = vmatpush1.msra.mxu0 0.0
  %2042 = vmatprep.subr.mxu0 0.0
  %2043 = vmatpush1.msra.mxu0 0.0
  %2044 = vmatprep.subr.mxu0 0.0
  %2045 = vmatpush1.msra.mxu0 0.0
  %2046 = vmatprep.subr.mxu0 0.0
  %2047 = vmatpush1.msra.mxu0 0.0
  %2048 = vmatprep.subr.mxu0 0.0
  %2049 = vmatpush1.msra.mxu0 0.0
  %2050 = vmatprep.subr.mxu0 0.0
  %2051 = vmatpush1.msra.mxu0 0.0
  %2052 = vmatprep.subr.mxu0 0.0
  %2053 = vmatpush1.msra.mxu0 0.0
  %2054 = vmatprep.subr.mxu0 0.0
  %2055 = vmatpush1.msra.mxu0 0.0
  %2056 = vmatprep.subr.mxu0 0.0
  %2057 = vmatpush1.msra.mxu0 0.0
  %2058 = vmatprep.subr.mxu0 0.0
  %2059 = vmatpush1.msra.mxu0 0.0
  %2060 = vmatprep.subr.mxu0 0.0
  %2061 = vmatpush1.msra.mxu0 0.0
  %2062 = vmatprep.subr.mxu0 0.0
  %2063 = vmatpush1.msra.mxu0 0.0
  %2064 = vmatprep.subr.mxu0 0.0
  %2065 = vmatpush1.msra.mxu0 0.0
  %2066 = vmatprep.subr.mxu0 0.0
  %2067 = vmatpush1.msra.mxu0 0.0
  %2068 = vmatprep.subr.mxu0 0.0
  %2069 = vmatpush1.msra.mxu0 0.0
  %2070 = vmatprep.subr.mxu0 0.0
  %2071 = vmatpush1.msra.mxu0 0.0
  %2072 = vmatprep.subr.mxu0 0.0
  %2073 = vmatpush1.msra.mxu0 0.0
  %2074 = vmatprep.subr.mxu0 0.0
  %2075 = vmatpush1.msra.mxu0 0.0
  %2076 = vmatprep.subr.mxu0 0.0
  %2077 = vmatpush1.msra.mxu0 0.0
  %2078 = vmatprep.subr.mxu0 0.0
  %2079 = vmatpush1.msra.mxu0 0.0
  %2080 = vmatprep.subr.mxu0 0.0
  %2081 = vmatpush1.msra.mxu0 0.0
  %2082 = vmatprep.subr.mxu0 0.0
  %2083 = vmatpush1.msra.mxu0 0.0
  %2084 = vmatprep.subr.mxu0 0.0
  %2085 = vmatpush1.msra.mxu0 0.0
  %2086 = vmatprep.subr.mxu0 0.0
  %2087 = vmatpush1.msra.mxu0 0.0
  %2088 = vmatprep.mubr.f32.mxu0 0.0
  %2089 = vmatmul.mubr.f32.gmra.mrb[0].mxu0 %v2022
  %v2090 = vpop.f32.mrb[0].mxu0
  %v2091 = vadd.f32 0.0, %v2090
  %v2092 = vpop.f32.mrb[0].mxu0
  %2093 = vdwg.mxu0
  %v2095 = vrot.slane %v2091, 4
  %v2097 = vadd.f32 %v187, %v2095
  %v2099 = vrot.slane %v1921, 4
  %v2101 = vadd.f32 %v2097, %v2099
  %v2102 = vxor.u32 %v2101, 2147483648
  %v2103 = vmul.f32 %v2102, 1.442695
  %v2104 = vpow.pop %v2103
  %v2105 = vadd.f32 %v2104, 1.0
  %v2106 = vrcp.pop %v2105
  %v2107 = vmul.f32 1.0, %v2106
  %v2108 = vadd.f32 %v1921, %v1543
  %v2110 = vrot.slane %v2108, 4
  %2111 = vrot.lane.b32.xlu0 %v2110, 64
  %v2112 = vpop.permute.xlu0 %2111
  %v2114 = vmul.f32 %v2107, %v2112
  %2116 = vrot.lane.b32.xlu0 %v2114, 64
  %v2117 = vpop.permute.xlu0 %2116
  %v2119 = vadd.f32 %v2097, %v2117
  %v2120 = vtanh.pop %v2119
  %v2121 = vsub.f32 1.0, %v2107
  %2123 = vrot.lane.b32.xlu0 %v2120, 96
  %v2124 = vpop.permute.xlu0 %2123
  %v2126 = vmul.f32 %v2121, %v2124
  %v2127 = vrot.slane %v1847, 6
  %v2129 = vmul.f32 %v2107, %v2127
  %v2130 = vadd.f32 %v2126, %v2129
  %v2132 = vrot.slane %v2130, 4
  %2133 = vrot.lane.b32.xlu0 %v2132, 96
  %v2134 = vpop.permute.xlu0 %2133
  %v2135 = vsel %vm199, %v2134, 0
  %2137 = vmatprep.subr.mxu0 0.0
  %2138 = vmatpush1.msra.mxu0 %v1273
  %2139 = vmatprep.subr.mxu0 0.0
  %2140 = vmatpush1.msra.mxu0 %v1274
  %2141 = vmatprep.subr.mxu0 0.0
  %2142 = vmatpush1.msra.mxu0 %v1275
  %2143 = vmatprep.subr.mxu0 0.0
  %2144 = vmatpush1.msra.mxu0 %v1276
  %2145 = vmatprep.subr.mxu0 0.0
  %2146 = vmatpush1.msra.mxu0 0.0
  %2147 = vmatprep.subr.mxu0 0.0
  %2148 = vmatpush1.msra.mxu0 0.0
  %2149 = vmatprep.subr.mxu0 0.0
  %2150 = vmatpush1.msra.mxu0 0.0
  %2151 = vmatprep.subr.mxu0 0.0
  %2152 = vmatpush1.msra.mxu0 0.0
  %2153 = vmatprep.subr.mxu0 0.0
  %2154 = vmatpush1.msra.mxu0 0.0
  %2155 = vmatprep.subr.mxu0 0.0
  %2156 = vmatpush1.msra.mxu0 0.0
  %2157 = vmatprep.subr.mxu0 0.0
  %2158 = vmatpush1.msra.mxu0 0.0
  %2159 = vmatprep.subr.mxu0 0.0
  %2160 = vmatpush1.msra.mxu0 0.0
  %2161 = vmatprep.subr.mxu0 0.0
  %2162 = vmatpush1.msra.mxu0 0.0
  %2163 = vmatprep.subr.mxu0 0.0
  %2164 = vmatpush1.msra.mxu0 0.0
  %2165 = vmatprep.subr.mxu0 0.0
  %2166 = vmatpush1.msra.mxu0 0.0
  %2167 = vmatprep.subr.mxu0 0.0
  %2168 = vmatpush1.msra.mxu0 0.0
  %2169 = vmatprep.subr.mxu0 0.0
  %2170 = vmatpush1.msra.mxu0 0.0
  %2171 = vmatprep.subr.mxu0 0.0
  %2172 = vmatpush1.msra.mxu0 0.0
  %2173 = vmatprep.subr.mxu0 0.0
  %2174 = vmatpush1.msra.mxu0 0.0
  %2175 = vmatprep.subr.mxu0 0.0
  %2176 = vmatpush1.msra.mxu0 0.0
  %2177 = vmatprep.subr.mxu0 0.0
  %2178 = vmatpush1.msra.mxu0 0.0
  %2179 = vmatprep.subr.mxu0 0.0
  %2180 = vmatpush1.msra.mxu0 0.0
  %2181 = vmatprep.subr.mxu0 0.0
  %2182 = vmatpush1.msra.mxu0 0.0
  %2183 = vmatprep.subr.mxu0 0.0
  %2184 = vmatpush1.msra.mxu0 0.0
  %2185 = vmatprep.subr.mxu0 0.0
  %2186 = vmatpush1.msra.mxu0 0.0
  %2187 = vmatprep.subr.mxu0 0.0
  %2188 = vmatpush1.msra.mxu0 0.0
  %2189 = vmatprep.subr.mxu0 0.0
  %2190 = vmatpush1.msra.mxu0 0.0
  %2191 = vmatprep.subr.mxu0 0.0
  %2192 = vmatpush1.msra.mxu0 0.0
  %2193 = vmatprep.subr.mxu0 0.0
  %2194 = vmatpush1.msra.mxu0 0.0
  %2195 = vmatprep.subr.mxu0 0.0
  %2196 = vmatpush1.msra.mxu0 0.0
  %2197 = vmatprep.subr.mxu0 0.0
  %2198 = vmatpush1.msra.mxu0 0.0
  %2199 = vmatprep.subr.mxu0 0.0
  %2200 = vmatpush1.msra.mxu0 0.0
  %2201 = vmatprep.mubr.f32.mxu0 0.0
  %2202 = vmatmul.mubr.f32.gmra.mrb[0].mxu0 %v2135
  %v2203 = vpop.f32.mrb[0].mxu0
  %v2204 = vadd.f32 0.0, %v2203
  %v2205 = vpop.f32.mrb[0].mxu0
  %2206 = vdwg.mxu0
  %v2207 = vlaneseq
  %v2208 = vshrl.u32 %v2207, 7
  %v2209 = vsub.s32 0, %v2208
  %v2210 = vrot.slane %v2204, %v2209
  %2212 = vrot.lane.b32.xlu0 %v2210, 32
  %v2213 = vpop.permute.xlu0 %2212
  %v2215 = vadd.f32 %v1194, %v2213
  %v2216 = vtanh.pop %v2215
  %v2217 = vmul.f32 %v2216, %v1369
  %v2218 = vsel %vm26, %v2217, 0.0
  %2219 = vadd.xlane.f32.xlu0 %v2218
  %v2220 = vpop.xlane.xlu0 %2219
  %v2221 = vadd.f32 %v2220, %v1272
  %v2222 = vsel %vm1375, %v2221, -inf
  %v2223 = vrot.slane %v2222, 4
  %v2224 = vmax.f32 %v2222, %v2223
  %v2225 = vrot.slane %v2224, 2
  %v2226 = vmax.f32 %v2224, %v2225
  %v2227 = vrot.slane %v2226, 1
  %v2228 = vmax.f32 %v2226, %v2227
  %v2229 = vsub.f32 %v2221, %v2228
  %v2230 = vmul.f32 %v2229, 1.442695
  %v2231 = vpow.pop %v2230
  %v2232 = vsel %vm1375, %v2231, 0.0
  %v2233 = vrot.slane %v2232, 4
  %v2234 = vadd.f32 %v2232, %v2233
  %v2235 = vrot.slane %v2234, 2
  %v2236 = vadd.f32 %v2234, %v2235
  %v2237 = vrot.slane %v2236, 1
  %v2238 = vadd.f32 %v2236, %v2237
  %v2239 = vrcp.pop %v2238
  %v2240 = vmul.f32 %v2231, %v2239
  %2242 = vset.pattern.permute.xlu0 0
  %2243 = vperm.xlu0 %2242, %v2240
  %v2244 = vpop.permute.xlu0 %2243
  %v2246 = vmul.f32 %v2244, %v1087
  %v2247 = vsel %vm1401, %v2246, 0.0
  %v2248 = vrot.slane %v2247, 4
  %v2249 = vadd.f32 %v2247, %v2248
  %v2250 = vrot.slane %v2249, 2
  %v2251 = vadd.f32 %v2249, %v2250
  %v2252 = vrot.slane %v2251, 1
  %v2253 = vadd.f32 %v2251, %v2252
  %v2254 = vlaneseq
  %v2255 = vshrl.u32 %v2254, 7
  %v2256 = vsub.s32 1, %v2255
  %v2257 = vrot.slane %v2204, %v2256
  %2259 = vrot.lane.b32.xlu0 %v2257, 32
  %v2260 = vpop.permute.xlu0 %2259
  %v2262 = vadd.f32 %v1269, %v2260
  %v2263 = vtanh.pop %v2262
  %v2264 = vmul.f32 %v2263, %v1369
  %v2265 = vsel %vm26, %v2264, 0.0
  %2266 = vadd.xlane.f32.xlu0 %v2265
  %v2267 = vpop.xlane.xlu0 %2266
  %v2268 = vadd.f32 %v2267, %v1272
  %v2269 = vsel %vm1424, %v2268, -inf
  %v2270 = vrot.slane %v2269, 4
  %v2271 = vmax.f32 %v2269, %v2270
  %v2272 = vrot.slane %v2271, 2
  %v2273 = vmax.f32 %v2271, %v2272
  %v2274 = vrot.slane %v2273, 1
  %v2275 = vmax.f32 %v2273, %v2274
  %v2276 = vsub.f32 %v2268, %v2275
  %v2277 = vmul.f32 %v2276, 1.442695
  %v2278 = vpow.pop %v2277
  %v2279 = vsel %vm1424, %v2278, 0.0
  %v2280 = vrot.slane %v2279, 4
  %v2281 = vadd.f32 %v2279, %v2280
  %v2282 = vrot.slane %v2281, 2
  %v2283 = vadd.f32 %v2281, %v2282
  %v2284 = vrot.slane %v2283, 1
  %v2285 = vadd.f32 %v2283, %v2284
  %v2286 = vrcp.pop %v2285
  %v2287 = vmul.f32 %v2278, %v2286
  %2289 = vset.pattern.permute.xlu0 1
  %2290 = vperm.xlu0 %2289, %v2287
  %v2291 = vpop.permute.xlu0 %2290
  %v2293 = vmul.f32 %v2291, %v1105
  %v2294 = vsel %vm1401, %v2293, 0.0
  %v2295 = vrot.slane %v2294, 4
  %v2296 = vadd.f32 %v2294, %v2295
  %v2297 = vrot.slane %v2296, 2
  %v2298 = vadd.f32 %v2296, %v2297
  %v2299 = vrot.slane %v2298, 1
  %v2300 = vadd.f32 %v2298, %v2299
  %v2301 = vsel %vm1074, %v2253, %v2300
  %2303 = vrot.lane.b32.xlu0 %v2301, 96
  %v2304 = vpop.permute.xlu0 %2303
  %v2305 = vsel %vm199, %v2304, 0
  %2307 = vmatprep.subr.mxu0 0.0
  %2308 = vmatpush1.msra.mxu0 %v1277
  %2309 = vmatprep.subr.mxu0 0.0
  %2310 = vmatpush1.msra.mxu0 %v1278
  %2311 = vmatprep.subr.mxu0 0.0
  %2312 = vmatpush1.msra.mxu0 %v1279
  %2313 = vmatprep.subr.mxu0 0.0
  %2314 = vmatpush1.msra.mxu0 %v1280
  %2315 = vmatprep.subr.mxu0 0.0
  %2316 = vmatpush1.msra.mxu0 0.0
  %2317 = vmatprep.subr.mxu0 0.0
  %2318 = vmatpush1.msra.mxu0 0.0
  %2319 = vmatprep.subr.mxu0 0.0
  %2320 = vmatpush1.msra.mxu0 0.0
  %2321 = vmatprep.subr.mxu0 0.0
  %2322 = vmatpush1.msra.mxu0 0.0
  %2323 = vmatprep.subr.mxu0 0.0
  %2324 = vmatpush1.msra.mxu0 0.0
  %2325 = vmatprep.subr.mxu0 0.0
  %2326 = vmatpush1.msra.mxu0 0.0
  %2327 = vmatprep.subr.mxu0 0.0
  %2328 = vmatpush1.msra.mxu0 0.0
  %2329 = vmatprep.subr.mxu0 0.0
  %2330 = vmatpush1.msra.mxu0 0.0
  %2331 = vmatprep.subr.mxu0 0.0
  %2332 = vmatpush1.msra.mxu0 0.0
  %2333 = vmatprep.subr.mxu0 0.0
  %2334 = vmatpush1.msra.mxu0 0.0
  %2335 = vmatprep.subr.mxu0 0.0
  %2336 = vmatpush1.msra.mxu0 0.0
  %2337 = vmatprep.subr.mxu0 0.0
  %2338 = vmatpush1.msra.mxu0 0.0
  %2339 = vmatprep.subr.mxu0 0.0
  %2340 = vmatpush1.msra.mxu0 0.0
  %2341 = vmatprep.subr.mxu0 0.0
  %2342 = vmatpush1.msra.mxu0 0.0
  %2343 = vmatprep.subr.mxu0 0.0
  %2344 = vmatpush1.msra.mxu0 0.0
  %2345 = vmatprep.subr.mxu0 0.0
  %2346 = vmatpush1.msra.mxu0 0.0
  %2347 = vmatprep.subr.mxu0 0.0
  %2348 = vmatpush1.msra.mxu0 0.0
  %2349 = vmatprep.subr.mxu0 0.0
  %2350 = vmatpush1.msra.mxu0 0.0
  %2351 = vmatprep.subr.mxu0 0.0
  %2352 = vmatpush1.msra.mxu0 0.0
  %2353 = vmatprep.subr.mxu0 0.0
  %2354 = vmatpush1.msra.mxu0 0.0
  %2355 = vmatprep.subr.mxu0 0.0
  %2356 = vmatpush1.msra.mxu0 0.0
  %2357 = vmatprep.subr.mxu0 0.0
  %2358 = vmatpush1.msra.mxu0 0.0
  %2359 = vmatprep.subr.mxu0 0.0
  %2360 = vmatpush1.msra.mxu0 0.0
  %2361 = vmatprep.subr.mxu0 0.0
  %2362 = vmatpush1.msra.mxu0 0.0
  %2363 = vmatprep.subr.mxu0 0.0
  %2364 = vmatpush1.msra.mxu0 0.0
  %2365 = vmatprep.subr.mxu0 0.0
  %2366 = vmatpush1.msra.mxu0 0.0
  %2367 = vmatprep.subr.mxu0 0.0
  %2368 = vmatpush1.msra.mxu0 0.0
  %2369 = vmatprep.subr.mxu0 0.0
  %2370 = vmatpush1.msra.mxu0 0.0
  %2371 = vmatprep.mubr.f32.mxu0 0.0
  %2372 = vmatmul.mubr.f32.gmra.mrb[0].mxu0 %v2305
  %v2373 = vpop.f32.mrb[0].mxu0
  %v2374 = vadd.f32 0.0, %v2373
  %v2375 = vpop.f32.mrb[0].mxu0
  %2376 = vdwg.mxu0
  %v2378 = vrot.slane %v2374, 2
  %v2380 = vadd.f32 %v187, %v2378
  %v2382 = vrot.slane %v2204, 2
  %v2384 = vadd.f32 %v2380, %v2382
  %v2385 = vxor.u32 %v2384, 2147483648
  %v2386 = vmul.f32 %v2385, 1.442695
  %v2387 = vpow.pop %v2386
  %v2388 = vadd.f32 %v2387, 1.0
  %v2389 = vrcp.pop %v2388
  %v2390 = vmul.f32 1.0, %v2389
  %v2391 = vadd.f32 %v2204, %v1543
  %v2393 = vrot.slane %v2391, 2
  %2394 = vrot.lane.b32.xlu0 %v2393, 64
  %v2395 = vpop.permute.xlu0 %2394
  %v2397 = vmul.f32 %v2390, %v2395
  %2399 = vrot.lane.b32.xlu0 %v2397, 64
  %v2400 = vpop.permute.xlu0 %2399
  %v2402 = vadd.f32 %v2380, %v2400
  %v2403 = vtanh.pop %v2402
  %v2404 = vsub.f32 1.0, %v2390
  %2406 = vrot.lane.b32.xlu0 %v2403, 96
  %v2407 = vpop.permute.xlu0 %2406
  %v2409 = vmul.f32 %v2404, %v2407
  %v2410 = vrot.slane %v2130, 6
  %v2412 = vmul.f32 %v2390, %v2410
  %v2413 = vadd.f32 %v2409, %v2412
  %v2415 = vrot.slane %v2413, 6
  %2416 = vrot.lane.b32.xlu0 %v2415, 96
  %v2417 = vpop.permute.xlu0 %2416
  %v2418 = vsel %vm199, %v2417, 0
  %2420 = vmatprep.subr.mxu0 0.0
  %2421 = vmatpush1.msra.mxu0 %v1273
  %2422 = vmatprep.subr.mxu0 0.0
  %2423 = vmatpush1.msra.mxu0 %v1274
  %2424 = vmatprep.subr.mxu0 0.0
  %2425 = vmatpush1.msra.mxu0 %v1275
  %2426 = vmatprep.subr.mxu0 0.0
  %2427 = vmatpush1.msra.mxu0 %v1276
  %2428 = vmatprep.subr.mxu0 0.0
  %2429 = vmatpush1.msra.mxu0 0.0
  %2430 = vmatprep.subr.mxu0 0.0
  %2431 = vmatpush1.msra.mxu0 0.0
  %2432 = vmatprep.subr.mxu0 0.0
  %2433 = vmatpush1.msra.mxu0 0.0
  %2434 = vmatprep.subr.mxu0 0.0
  %2435 = vmatpush1.msra.mxu0 0.0
  %2436 = vmatprep.subr.mxu0 0.0
  %2437 = vmatpush1.msra.mxu0 0.0
  %2438 = vmatprep.subr.mxu0 0.0
  %2439 = vmatpush1.msra.mxu0 0.0
  %2440 = vmatprep.subr.mxu0 0.0
  %2441 = vmatpush1.msra.mxu0 0.0
  %2442 = vmatprep.subr.mxu0 0.0
  %2443 = vmatpush1.msra.mxu0 0.0
  %2444 = vmatprep.subr.mxu0 0.0
  %2445 = vmatpush1.msra.mxu0 0.0
  %2446 = vmatprep.subr.mxu0 0.0
  %2447 = vmatpush1.msra.mxu0 0.0
  %2448 = vmatprep.subr.mxu0 0.0
  %2449 = vmatpush1.msra.mxu0 0.0
  %2450 = vmatprep.subr.mxu0 0.0
  %2451 = vmatpush1.msra.mxu0 0.0
  %2452 = vmatprep.subr.mxu0 0.0
  %2453 = vmatpush1.msra.mxu0 0.0
  %2454 = vmatprep.subr.mxu0 0.0
  %2455 = vmatpush1.msra.mxu0 0.0
  %2456 = vmatprep.subr.mxu0 0.0
  %2457 = vmatpush1.msra.mxu0 0.0
  %2458 = vmatprep.subr.mxu0 0.0
  %2459 = vmatpush1.msra.mxu0 0.0
  %2460 = vmatprep.subr.mxu0 0.0
  %2461 = vmatpush1.msra.mxu0 0.0
  %2462 = vmatprep.subr.mxu0 0.0
  %2463 = vmatpush1.msra.mxu0 0.0
  %2464 = vmatprep.subr.mxu0 0.0
  %2465 = vmatpush1.msra.mxu0 0.0
  %2466 = vmatprep.subr.mxu0 0.0
  %2467 = vmatpush1.msra.mxu0 0.0
  %2468 = vmatprep.subr.mxu0 0.0
  %2469 = vmatpush1.msra.mxu0 0.0
  %2470 = vmatprep.subr.mxu0 0.0
  %2471 = vmatpush1.msra.mxu0 0.0
  %2472 = vmatprep.subr.mxu0 0.0
  %2473 = vmatpush1.msra.mxu0 0.0
  %2474 = vmatprep.subr.mxu0 0.0
  %2475 = vmatpush1.msra.mxu0 0.0
  %2476 = vmatprep.subr.mxu0 0.0
  %2477 = vmatpush1.msra.mxu0 0.0
  %2478 = vmatprep.subr.mxu0 0.0
  %2479 = vmatpush1.msra.mxu0 0.0
  %2480 = vmatprep.subr.mxu0 0.0
  %2481 = vmatpush1.msra.mxu0 0.0
  %2482 = vmatprep.subr.mxu0 0.0
  %2483 = vmatpush1.msra.mxu0 0.0
  %2484 = vmatprep.mubr.f32.mxu0 0.0
  %2485 = vmatmul.mubr.f32.gmra.mrb[0].mxu0 %v2418
  %v2486 = vpop.f32.mrb[0].mxu0
  %v2487 = vadd.f32 0.0, %v2486
  %v2488 = vpop.f32.mrb[0].mxu0
  %2489 = vdwg.mxu0
  %v2490 = vlaneseq
  %v2491 = vshrl.u32 %v2490, 7
  %v2492 = vsub.s32 0, %v2491
  %v2493 = vrot.slane %v2487, %v2492
  %2495 = vrot.lane.b32.xlu0 %v2493, 32
  %v2496 = vpop.permute.xlu0 %2495
  %v2498 = vadd.f32 %v1194, %v2496
  %v2499 = vtanh.pop %v2498
  %v2500 = vmul.f32 %v2499, %v1369
  %v2501 = vsel %vm26, %v2500, 0.0
  %2502 = vadd.xlane.f32.xlu0 %v2501
  %v2503 = vpop.xlane.xlu0 %2502
  %v2504 = vadd.f32 %v2503, %v1272
  %v2505 = vsel %vm1375, %v2504, -inf
  %v2506 = vrot.slane %v2505, 4
  %v2507 = vmax.f32 %v2505, %v2506
  %v2508 = vrot.slane %v2507, 2
  %v2509 = vmax.f32 %v2507, %v2508
  %v2510 = vrot.slane %v2509, 1
  %v2511 = vmax.f32 %v2509, %v2510
  %v2512 = vsub.f32 %v2504, %v2511
  %v2513 = vmul.f32 %v2512, 1.442695
  %v2514 = vpow.pop %v2513
  %v2515 = vsel %vm1375, %v2514, 0.0
  %v2516 = vrot.slane %v2515, 4
  %v2517 = vadd.f32 %v2515, %v2516
  %v2518 = vrot.slane %v2517, 2
  %v2519 = vadd.f32 %v2517, %v2518
  %v2520 = vrot.slane %v2519, 1
  %v2521 = vadd.f32 %v2519, %v2520
  %v2522 = vrcp.pop %v2521
  %v2523 = vmul.f32 %v2514, %v2522
  %2525 = vset.pattern.permute.xlu0 0
  %2526 = vperm.xlu0 %2525, %v2523
  %v2527 = vpop.permute.xlu0 %2526
  %v2529 = vmul.f32 %v2527, %v1087
  %v2530 = vsel %vm1401, %v2529, 0.0
  %v2531 = vrot.slane %v2530, 4
  %v2532 = vadd.f32 %v2530, %v2531
  %v2533 = vrot.slane %v2532, 2
  %v2534 = vadd.f32 %v2532, %v2533
  %v2535 = vrot.slane %v2534, 1
  %v2536 = vadd.f32 %v2534, %v2535
  %v2537 = vlaneseq
  %v2538 = vshrl.u32 %v2537, 7
  %v2539 = vsub.s32 1, %v2538
  %v2540 = vrot.slane %v2487, %v2539
  %2542 = vrot.lane.b32.xlu0 %v2540, 32
  %v2543 = vpop.permute.xlu0 %2542
  %v2545 = vadd.f32 %v1269, %v2543
  %v2546 = vtanh.pop %v2545
  %v2547 = vmul.f32 %v2546, %v1369
  %v2548 = vsel %vm26, %v2547, 0.0
  %2549 = vadd.xlane.f32.xlu0 %v2548
  %v2550 = vpop.xlane.xlu0 %2549
  %v2551 = vadd.f32 %v2550, %v1272
  %v2552 = vsel %vm1424, %v2551, -inf
  %v2553 = vrot.slane %v2552, 4
  %v2554 = vmax.f32 %v2552, %v2553
  %v2555 = vrot.slane %v2554, 2
  %v2556 = vmax.f32 %v2554, %v2555
  %v2557 = vrot.slane %v2556, 1
  %v2558 = vmax.f32 %v2556, %v2557
  %v2559 = vsub.f32 %v2551, %v2558
  %v2560 = vmul.f32 %v2559, 1.442695
  %v2561 = vpow.pop %v2560
  %v2562 = vsel %vm1424, %v2561, 0.0
  %v2563 = vrot.slane %v2562, 4
  %v2564 = vadd.f32 %v2562, %v2563
  %v2565 = vrot.slane %v2564, 2
  %v2566 = vadd.f32 %v2564, %v2565
  %v2567 = vrot.slane %v2566, 1
  %v2568 = vadd.f32 %v2566, %v2567
  %v2569 = vrcp.pop %v2568
  %v2570 = vmul.f32 %v2561, %v2569
  %2572 = vset.pattern.permute.xlu0 1
  %2573 = vperm.xlu0 %2572, %v2570
  %v2574 = vpop.permute.xlu0 %2573
  %v2576 = vmul.f32 %v2574, %v1105
  %v2577 = vsel %vm1401, %v2576, 0.0
  %v2578 = vrot.slane %v2577, 4
  %v2579 = vadd.f32 %v2577, %v2578
  %v2580 = vrot.slane %v2579, 2
  %v2581 = vadd.f32 %v2579, %v2580
  %v2582 = vrot.slane %v2581, 1
  %v2583 = vadd.f32 %v2581, %v2582
  %v2584 = vsel %vm1074, %v2536, %v2583
  %2586 = vrot.lane.b32.xlu0 %v2584, 96
  %v2587 = vpop.permute.xlu0 %2586
  %v2588 = vsel %vm199, %v2587, 0
  %2590 = vmatprep.subr.mxu0 0.0
  %2591 = vmatpush1.msra.mxu0 %v1277
  %2592 = vmatprep.subr.mxu0 0.0
  %2593 = vmatpush1.msra.mxu0 %v1278
  %2594 = vmatprep.subr.mxu0 0.0
  %2595 = vmatpush1.msra.mxu0 %v1279
  %2596 = vmatprep.subr.mxu0 0.0
  %2597 = vmatpush1.msra.mxu0 %v1280
  %2598 = vmatprep.subr.mxu0 0.0
  %2599 = vmatpush1.msra.mxu0 0.0
  %2600 = vmatprep.subr.mxu0 0.0
  %2601 = vmatpush1.msra.mxu0 0.0
  %2602 = vmatprep.subr.mxu0 0.0
  %2603 = vmatpush1.msra.mxu0 0.0
  %2604 = vmatprep.subr.mxu0 0.0
  %2605 = vmatpush1.msra.mxu0 0.0
  %2606 = vmatprep.subr.mxu0 0.0
  %2607 = vmatpush1.msra.mxu0 0.0
  %2608 = vmatprep.subr.mxu0 0.0
  %2609 = vmatpush1.msra.mxu0 0.0
  %2610 = vmatprep.subr.mxu0 0.0
  %2611 = vmatpush1.msra.mxu0 0.0
  %2612 = vmatprep.subr.mxu0 0.0
  %2613 = vmatpush1.msra.mxu0 0.0
  %2614 = vmatprep.subr.mxu0 0.0
  %2615 = vmatpush1.msra.mxu0 0.0
  %2616 = vmatprep.subr.mxu0 0.0
  %2617 = vmatpush1.msra.mxu0 0.0
  %2618 = vmatprep.subr.mxu0 0.0
  %2619 = vmatpush1.msra.mxu0 0.0
  %2620 = vmatprep.subr.mxu0 0.0
  %2621 = vmatpush1.msra.mxu0 0.0
  %2622 = vmatprep.subr.mxu0 0.0
  %2623 = vmatpush1.msra.mxu0 0.0
  %2624 = vmatprep.subr.mxu0 0.0
  %2625 = vmatpush1.msra.mxu0 0.0
  %2626 = vmatprep.subr.mxu0 0.0
  %2627 = vmatpush1.msra.mxu0 0.0
  %2628 = vmatprep.subr.mxu0 0.0
  %2629 = vmatpush1.msra.mxu0 0.0
  %2630 = vmatprep.subr.mxu0 0.0
  %2631 = vmatpush1.msra.mxu0 0.0
  %2632 = vmatprep.subr.mxu0 0.0
  %2633 = vmatpush1.msra.mxu0 0.0
  %2634 = vmatprep.subr.mxu0 0.0
  %2635 = vmatpush1.msra.mxu0 0.0
  %2636 = vmatprep.subr.mxu0 0.0
  %2637 = vmatpush1.msra.mxu0 0.0
  %2638 = vmatprep.subr.mxu0 0.0
  %2639 = vmatpush1.msra.mxu0 0.0
  %2640 = vmatprep.subr.mxu0 0.0
  %2641 = vmatpush1.msra.mxu0 0.0
  %2642 = vmatprep.subr.mxu0 0.0
  %2643 = vmatpush1.msra.mxu0 0.0
  %2644 = vmatprep.subr.mxu0 0.0
  %2645 = vmatpush1.msra.mxu0 0.0
  %2646 = vmatprep.subr.mxu0 0.0
  %2647 = vmatpush1.msra.mxu0 0.0
  %2648 = vmatprep.subr.mxu0 0.0
  %2649 = vmatpush1.msra.mxu0 0.0
  %2650 = vmatprep.subr.mxu0 0.0
  %2651 = vmatpush1.msra.mxu0 0.0
  %2652 = vmatprep.subr.mxu0 0.0
  %2653 = vmatpush1.msra.mxu0 0.0
  %2654 = vmatprep.mubr.f32.mxu0 0.0
  %2655 = vmatmul.mubr.f32.gmra.mrb[0].mxu0 %v2588
  %v2656 = vpop.f32.mrb[0].mxu0
  %v2657 = vadd.f32 0.0, %v2656
  %v2658 = vpop.f32.mrb[0].mxu0
  %2659 = vdwg.mxu0
  %v2660 = vadd.f32 %v192, %v2657
  %v2661 = vadd.f32 %v2660, %v2487
  %v2662 = vxor.u32 %v2661, 2147483648
  %v2663 = vmul.f32 %v2662, 1.442695
  %v2664 = vpow.pop %v2663
  %v2665 = vadd.f32 %v2664, 1.0
  %v2666 = vrcp.pop %v2665
  %v2667 = vmul.f32 1.0, %v2666
  %v2668 = vadd.f32 %v2487, %v1543
  %2670 = vrot.lane.b32.xlu0 %v2668, 64
  %v2671 = vpop.permute.xlu0 %2670
  %v2673 = vmul.f32 %v2667, %v2671
  %2675 = vrot.lane.b32.xlu0 %v2673, 64
  %v2676 = vpop.permute.xlu0 %2675
  %v2678 = vadd.f32 %v2660, %v2676
  %v2679 = vtanh.pop %v2678
  %v2680 = vsub.f32 1.0, %v2667
  %2682 = vrot.lane.b32.xlu0 %v2679, 96
  %v2683 = vpop.permute.xlu0 %2682
  %v2685 = vmul.f32 %v2680, %v2683
  %v2687 = vmul.f32 %v2667, %v2415
  %v2688 = vadd.f32 %v2685, %v2687
  %2690 = vrot.lane.b32.xlu0 %v2688, 96
  %v2691 = vpop.permute.xlu0 %2690
  %v2692 = vsel %vm199, %v2691, 0
  %2694 = vmatprep.subr.mxu0 0.0
  %2695 = vmatpush1.msra.mxu0 %v1273
  %2696 = vmatprep.subr.mxu0 0.0
  %2697 = vmatpush1.msra.mxu0 %v1274
  %2698 = vmatprep.subr.mxu0 0.0
  %2699 = vmatpush1.msra.mxu0 %v1275
  %2700 = vmatprep.subr.mxu0 0.0
  %2701 = vmatpush1.msra.mxu0 %v1276
  %2702 = vmatprep.subr.mxu0 0.0
  %2703 = vmatpush1.msra.mxu0 0.0
  %2704 = vmatprep.subr.mxu0 0.0
  %2705 = vmatpush1.msra.mxu0 0.0
  %2706 = vmatprep.subr.mxu0 0.0
  %2707 = vmatpush1.msra.mxu0 0.0
  %2708 = vmatprep.subr.mxu0 0.0
  %2709 = vmatpush1.msra.mxu0 0.0
  %2710 = vmatprep.subr.mxu0 0.0
  %2711 = vmatpush1.msra.mxu0 0.0
  %2712 = vmatprep.subr.mxu0 0.0
  %2713 = vmatpush1.msra.mxu0 0.0
  %2714 = vmatprep.subr.mxu0 0.0
  %2715 = vmatpush1.msra.mxu0 0.0
  %2716 = vmatprep.subr.mxu0 0.0
  %2717 = vmatpush1.msra.mxu0 0.0
  %2718 = vmatprep.subr.mxu0 0.0
  %2719 = vmatpush1.msra.mxu0 0.0
  %2720 = vmatprep.subr.mxu0 0.0
  %2721 = vmatpush1.msra.mxu0 0.0
  %2722 = vmatprep.subr.mxu0 0.0
  %2723 = vmatpush1.msra.mxu0 0.0
  %2724 = vmatprep.subr.mxu0 0.0
  %2725 = vmatpush1.msra.mxu0 0.0
  %2726 = vmatprep.subr.mxu0 0.0
  %2727 = vmatpush1.msra.mxu0 0.0
  %2728 = vmatprep.subr.mxu0 0.0
  %2729 = vmatpush1.msra.mxu0 0.0
  %2730 = vmatprep.subr.mxu0 0.0
  %2731 = vmatpush1.msra.mxu0 0.0
  %2732 = vmatprep.subr.mxu0 0.0
  %2733 = vmatpush1.msra.mxu0 0.0
  %2734 = vmatprep.subr.mxu0 0.0
  %2735 = vmatpush1.msra.mxu0 0.0
  %2736 = vmatprep.subr.mxu0 0.0
  %2737 = vmatpush1.msra.mxu0 0.0
  %2738 = vmatprep.subr.mxu0 0.0
  %2739 = vmatpush1.msra.mxu0 0.0
  %2740 = vmatprep.subr.mxu0 0.0
  %2741 = vmatpush1.msra.mxu0 0.0
  %2742 = vmatprep.subr.mxu0 0.0
  %2743 = vmatpush1.msra.mxu0 0.0
  %2744 = vmatprep.subr.mxu0 0.0
  %2745 = vmatpush1.msra.mxu0 0.0
  %2746 = vmatprep.subr.mxu0 0.0
  %2747 = vmatpush1.msra.mxu0 0.0
  %2748 = vmatprep.subr.mxu0 0.0
  %2749 = vmatpush1.msra.mxu0 0.0
  %2750 = vmatprep.subr.mxu0 0.0
  %2751 = vmatpush1.msra.mxu0 0.0
  %2752 = vmatprep.subr.mxu0 0.0
  %2753 = vmatpush1.msra.mxu0 0.0
  %2754 = vmatprep.subr.mxu0 0.0
  %2755 = vmatpush1.msra.mxu0 0.0
  %2756 = vmatprep.subr.mxu0 0.0
  %2757 = vmatpush1.msra.mxu0 0.0
  %2758 = vmatprep.mubr.f32.mxu0 0.0
  %2759 = vmatmul.mubr.f32.gmra.mrb[0].mxu0 %v2692
  %v2760 = vpop.f32.mrb[0].mxu0
  %v2761 = vadd.f32 0.0, %v2760
  %v2762 = vpop.f32.mrb[0].mxu0
  %2763 = vdwg.mxu0
  %v2764 = vlaneseq
  %v2765 = vshrl.u32 %v2764, 7
  %v2766 = vsub.s32 0, %v2765
  %v2767 = vrot.slane %v2761, %v2766
  %2769 = vrot.lane.b32.xlu0 %v2767, 32
  %v2770 = vpop.permute.xlu0 %2769
  %v2772 = vadd.f32 %v1194, %v2770
  %v2773 = vtanh.pop %v2772
  %v2774 = vmul.f32 %v2773, %v1369
  %v2775 = vsel %vm26, %v2774, 0.0
  %2776 = vadd.xlane.f32.xlu0 %v2775
  %v2777 = vpop.xlane.xlu0 %2776
  %v2778 = vadd.f32 %v2777, %v1272
  %v2779 = vsel %vm1375, %v2778, -inf
  %v2780 = vrot.slane %v2779, 4
  %v2781 = vmax.f32 %v2779, %v2780
  %v2782 = vrot.slane %v2781, 2
  %v2783 = vmax.f32 %v2781, %v2782
  %v2784 = vrot.slane %v2783, 1
  %v2785 = vmax.f32 %v2783, %v2784
  %v2786 = vsub.f32 %v2778, %v2785
  %v2787 = vmul.f32 %v2786, 1.442695
  %v2788 = vpow.pop %v2787
  %v2789 = vsel %vm1375, %v2788, 0.0
  %v2790 = vrot.slane %v2789, 4
  %v2791 = vadd.f32 %v2789, %v2790
  %v2792 = vrot.slane %v2791, 2
  %v2793 = vadd.f32 %v2791, %v2792
  %v2794 = vrot.slane %v2793, 1
  %v2795 = vadd.f32 %v2793, %v2794
  %v2796 = vrcp.pop %v2795
  %v2797 = vmul.f32 %v2788, %v2796
  %2799 = vset.pattern.permute.xlu0 0
  %2800 = vperm.xlu0 %2799, %v2797
  %v2801 = vpop.permute.xlu0 %2800
  %v2803 = vmul.f32 %v2801, %v1087
  %v2804 = vsel %vm1401, %v2803, 0.0
  %v2805 = vrot.slane %v2804, 4
  %v2806 = vadd.f32 %v2804, %v2805
  %v2807 = vrot.slane %v2806, 2
  %v2808 = vadd.f32 %v2806, %v2807
  %v2809 = vrot.slane %v2808, 1
  %v2810 = vadd.f32 %v2808, %v2809
  %v2811 = vlaneseq
  %v2812 = vshrl.u32 %v2811, 7
  %v2813 = vsub.s32 1, %v2812
  %v2814 = vrot.slane %v2761, %v2813
  %2816 = vrot.lane.b32.xlu0 %v2814, 32
  %v2817 = vpop.permute.xlu0 %2816
  %v2819 = vadd.f32 %v1269, %v2817
  %v2820 = vtanh.pop %v2819
  %v2821 = vmul.f32 %v2820, %v1369
  %v2822 = vsel %vm26, %v2821, 0.0
  %2823 = vadd.xlane.f32.xlu0 %v2822
  %v2824 = vpop.xlane.xlu0 %2823
  %v2825 = vadd.f32 %v2824, %v1272
  %v2826 = vsel %vm1424, %v2825, -inf
  %v2827 = vrot.slane %v2826, 4
  %v2828 = vmax.f32 %v2826, %v2827
  %v2829 = vrot.slane %v2828, 2
  %v2830 = vmax.f32 %v2828, %v2829
  %v2831 = vrot.slane %v2830, 1
  %v2832 = vmax.f32 %v2830, %v2831
  %v2833 = vsub.f32 %v2825, %v2832
  %v2834 = vmul.f32 %v2833, 1.442695
  %v2835 = vpow.pop %v2834
  %v2836 = vsel %vm1424, %v2835, 0.0
  %v2837 = vrot.slane %v2836, 4
  %v2838 = vadd.f32 %v2836, %v2837
  %v2839 = vrot.slane %v2838, 2
  %v2840 = vadd.f32 %v2838, %v2839
  %v2841 = vrot.slane %v2840, 1
  %v2842 = vadd.f32 %v2840, %v2841
  %v2843 = vrcp.pop %v2842
  %v2844 = vmul.f32 %v2835, %v2843
  %2846 = vset.pattern.permute.xlu0 1
  %2847 = vperm.xlu0 %2846, %v2844
  %v2848 = vpop.permute.xlu0 %2847
  %v2850 = vmul.f32 %v2848, %v1105
  %v2851 = vsel %vm1401, %v2850, 0.0
  %v2852 = vrot.slane %v2851, 4
  %v2853 = vadd.f32 %v2851, %v2852
  %v2854 = vrot.slane %v2853, 2
  %v2855 = vadd.f32 %v2853, %v2854
  %v2856 = vrot.slane %v2855, 1
  %v2857 = vadd.f32 %v2855, %v2856
  %v2858 = vsel %vm1074, %v2810, %v2857
  %2860 = vrot.lane.b32.xlu0 %v2858, 96
  %v2861 = vpop.permute.xlu0 %2860
  %v2862 = vsel %vm199, %v2861, 0
  %2864 = vmatprep.subr.mxu0 0.0
  %2865 = vmatpush1.msra.mxu0 %v1277
  %2866 = vmatprep.subr.mxu0 0.0
  %2867 = vmatpush1.msra.mxu0 %v1278
  %2868 = vmatprep.subr.mxu0 0.0
  %2869 = vmatpush1.msra.mxu0 %v1279
  %2870 = vmatprep.subr.mxu0 0.0
  %2871 = vmatpush1.msra.mxu0 %v1280
  %2872 = vmatprep.subr.mxu0 0.0
  %2873 = vmatpush1.msra.mxu0 0.0
  %2874 = vmatprep.subr.mxu0 0.0
  %2875 = vmatpush1.msra.mxu0 0.0
  %2876 = vmatprep.subr.mxu0 0.0
  %2877 = vmatpush1.msra.mxu0 0.0
  %2878 = vmatprep.subr.mxu0 0.0
  %2879 = vmatpush1.msra.mxu0 0.0
  %2880 = vmatprep.subr.mxu0 0.0
  %2881 = vmatpush1.msra.mxu0 0.0
  %2882 = vmatprep.subr.mxu0 0.0
  %2883 = vmatpush1.msra.mxu0 0.0
  %2884 = vmatprep.subr.mxu0 0.0
  %2885 = vmatpush1.msra.mxu0 0.0
  %2886 = vmatprep.subr.mxu0 0.0
  %2887 = vmatpush1.msra.mxu0 0.0
  %2888 = vmatprep.subr.mxu0 0.0
  %2889 = vmatpush1.msra.mxu0 0.0
  %2890 = vmatprep.subr.mxu0 0.0
  %2891 = vmatpush1.msra.mxu0 0.0
  %2892 = vmatprep.subr.mxu0 0.0
  %2893 = vmatpush1.msra.mxu0 0.0
  %2894 = vmatprep.subr.mxu0 0.0
  %2895 = vmatpush1.msra.mxu0 0.0
  %2896 = vmatprep.subr.mxu0 0.0
  %2897 = vmatpush1.msra.mxu0 0.0
  %2898 = vmatprep.subr.mxu0 0.0
  %2899 = vmatpush1.msra.mxu0 0.0
  %2900 = vmatprep.subr.mxu0 0.0
  %2901 = vmatpush1.msra.mxu0 0.0
  %2902 = vmatprep.subr.mxu0 0.0
  %2903 = vmatpush1.msra.mxu0 0.0
  %2904 = vmatprep.subr.mxu0 0.0
  %2905 = vmatpush1.msra.mxu0 0.0
  %2906 = vmatprep.subr.mxu0 0.0
  %2907 = vmatpush1.msra.mxu0 0.0
  %2908 = vmatprep.subr.mxu0 0.0
  %2909 = vmatpush1.msra.mxu0 0.0
  %2910 = vmatprep.subr.mxu0 0.0
  %2911 = vmatpush1.msra.mxu0 0.0
  %2912 = vmatprep.subr.mxu0 0.0
  %2913 = vmatpush1.msra.mxu0 0.0
  %2914 = vmatprep.subr.mxu0 0.0
  %2915 = vmatpush1.msra.mxu0 0.0
  %2916 = vmatprep.subr.mxu0 0.0
  %2917 = vmatpush1.msra.mxu0 0.0
  %2918 = vmatprep.subr.mxu0 0.0
  %2919 = vmatpush1.msra.mxu0 0.0
  %2920 = vmatprep.subr.mxu0 0.0
  %2921 = vmatpush1.msra.mxu0 0.0
  %2922 = vmatprep.subr.mxu0 0.0
  %2923 = vmatpush1.msra.mxu0 0.0
  %2924 = vmatprep.subr.mxu0 0.0
  %2925 = vmatpush1.msra.mxu0 0.0
  %2926 = vmatprep.subr.mxu0 0.0
  %2927 = vmatpush1.msra.mxu0 0.0
  %2928 = vmatprep.mubr.f32.mxu0 0.0
  %2929 = vmatmul.mubr.f32.gmra.mrb[0].mxu0 %v2862
  %v2930 = vpop.f32.mrb[0].mxu0
  %v2931 = vadd.f32 0.0, %v2930
  %v2932 = vpop.f32.mrb[0].mxu0
  %2933 = vdwg.mxu0
  %v2935 = vrot.slane %v2931, 6
  %v2937 = vadd.f32 %v192, %v2935
  %v2939 = vrot.slane %v2761, 6
  %v2941 = vadd.f32 %v2937, %v2939
  %v2942 = vxor.u32 %v2941, 2147483648
  %v2943 = vmul.f32 %v2942, 1.442695
  %v2944 = vpow.pop %v2943
  %v2945 = vadd.f32 %v2944, 1.0
  %v2946 = vrcp.pop %v2945
  %v2947 = vmul.f32 1.0, %v2946
  %v2948 = vadd.f32 %v2761, %v1543
  %v2950 = vrot.slane %v2948, 6
  %2951 = vrot.lane.b32.xlu0 %v2950, 64
  %v2952 = vpop.permute.xlu0 %2951
  %v2954 = vmul.f32 %v2947, %v2952
  %2956 = vrot.lane.b32.xlu0 %v2954, 64
  %v2957 = vpop.permute.xlu0 %2956
  %v2959 = vadd.f32 %v2937, %v2957
  %v2960 = vtanh.pop %v2959
  %v2961 = vsub.f32 1.0, %v2947
  %2963 = vrot.lane.b32.xlu0 %v2960, 96
  %v2964 = vpop.permute.xlu0 %2963
  %v2966 = vmul.f32 %v2961, %v2964
  %v2967 = vrot.slane %v2688, 6
  %v2969 = vmul.f32 %v2947, %v2967
  %v2970 = vadd.f32 %v2966, %v2969
  %v2972 = vrot.slane %v2970, 2
  %2973 = vrot.lane.b32.xlu0 %v2972, 96
  %v2974 = vpop.permute.xlu0 %2973
  %v2975 = vsel %vm199, %v2974, 0
  %2977 = vmatprep.subr.mxu0 0.0
  %2978 = vmatpush1.msra.mxu0 %v1273
  %2979 = vmatprep.subr.mxu0 0.0
  %2980 = vmatpush1.msra.mxu0 %v1274
  %2981 = vmatprep.subr.mxu0 0.0
  %2982 = vmatpush1.msra.mxu0 %v1275
  %2983 = vmatprep.subr.mxu0 0.0
  %2984 = vmatpush1.msra.mxu0 %v1276
  %2985 = vmatprep.subr.mxu0 0.0
  %2986 = vmatpush1.msra.mxu0 0.0
  %2987 = vmatprep.subr.mxu0 0.0
  %2988 = vmatpush1.msra.mxu0 0.0
  %2989 = vmatprep.subr.mxu0 0.0
  %2990 = vmatpush1.msra.mxu0 0.0
  %2991 = vmatprep.subr.mxu0 0.0
  %2992 = vmatpush1.msra.mxu0 0.0
  %2993 = vmatprep.subr.mxu0 0.0
  %2994 = vmatpush1.msra.mxu0 0.0
  %2995 = vmatprep.subr.mxu0 0.0
  %2996 = vmatpush1.msra.mxu0 0.0
  %2997 = vmatprep.subr.mxu0 0.0
  %2998 = vmatpush1.msra.mxu0 0.0
  %2999 = vmatprep.subr.mxu0 0.0
  %3000 = vmatpush1.msra.mxu0 0.0
  %3001 = vmatprep.subr.mxu0 0.0
  %3002 = vmatpush1.msra.mxu0 0.0
  %3003 = vmatprep.subr.mxu0 0.0
  %3004 = vmatpush1.msra.mxu0 0.0
  %3005 = vmatprep.subr.mxu0 0.0
  %3006 = vmatpush1.msra.mxu0 0.0
  %3007 = vmatprep.subr.mxu0 0.0
  %3008 = vmatpush1.msra.mxu0 0.0
  %3009 = vmatprep.subr.mxu0 0.0
  %3010 = vmatpush1.msra.mxu0 0.0
  %3011 = vmatprep.subr.mxu0 0.0
  %3012 = vmatpush1.msra.mxu0 0.0
  %3013 = vmatprep.subr.mxu0 0.0
  %3014 = vmatpush1.msra.mxu0 0.0
  %3015 = vmatprep.subr.mxu0 0.0
  %3016 = vmatpush1.msra.mxu0 0.0
  %3017 = vmatprep.subr.mxu0 0.0
  %3018 = vmatpush1.msra.mxu0 0.0
  %3019 = vmatprep.subr.mxu0 0.0
  %3020 = vmatpush1.msra.mxu0 0.0
  %3021 = vmatprep.subr.mxu0 0.0
  %3022 = vmatpush1.msra.mxu0 0.0
  %3023 = vmatprep.subr.mxu0 0.0
  %3024 = vmatpush1.msra.mxu0 0.0
  %3025 = vmatprep.subr.mxu0 0.0
  %3026 = vmatpush1.msra.mxu0 0.0
  %3027 = vmatprep.subr.mxu0 0.0
  %3028 = vmatpush1.msra.mxu0 0.0
  %3029 = vmatprep.subr.mxu0 0.0
  %3030 = vmatpush1.msra.mxu0 0.0
  %3031 = vmatprep.subr.mxu0 0.0
  %3032 = vmatpush1.msra.mxu0 0.0
  %3033 = vmatprep.subr.mxu0 0.0
  %3034 = vmatpush1.msra.mxu0 0.0
  %3035 = vmatprep.subr.mxu0 0.0
  %3036 = vmatpush1.msra.mxu0 0.0
  %3037 = vmatprep.subr.mxu0 0.0
  %3038 = vmatpush1.msra.mxu0 0.0
  %3039 = vmatprep.subr.mxu0 0.0
  %3040 = vmatpush1.msra.mxu0 0.0
  %3041 = vmatprep.mubr.f32.mxu0 0.0
  %3042 = vmatmul.mubr.f32.gmra.mrb[0].mxu0 %v2975
  %v3043 = vpop.f32.mrb[0].mxu0
  %v3044 = vadd.f32 0.0, %v3043
  %v3045 = vpop.f32.mrb[0].mxu0
  %3046 = vdwg.mxu0
  %v3047 = vlaneseq
  %v3048 = vshrl.u32 %v3047, 7
  %v3049 = vsub.s32 0, %v3048
  %v3050 = vrot.slane %v3044, %v3049
  %3052 = vrot.lane.b32.xlu0 %v3050, 32
  %v3053 = vpop.permute.xlu0 %3052
  %v3055 = vadd.f32 %v1194, %v3053
  %v3056 = vtanh.pop %v3055
  %v3057 = vmul.f32 %v3056, %v1369
  %v3058 = vsel %vm26, %v3057, 0.0
  %3059 = vadd.xlane.f32.xlu0 %v3058
  %v3060 = vpop.xlane.xlu0 %3059
  %v3061 = vadd.f32 %v3060, %v1272
  %v3062 = vsel %vm1375, %v3061, -inf
  %v3063 = vrot.slane %v3062, 4
  %v3064 = vmax.f32 %v3062, %v3063
  %v3065 = vrot.slane %v3064, 2
  %v3066 = vmax.f32 %v3064, %v3065
  %v3067 = vrot.slane %v3066, 1
  %v3068 = vmax.f32 %v3066, %v3067
  %v3069 = vsub.f32 %v3061, %v3068
  %v3070 = vmul.f32 %v3069, 1.442695
  %v3071 = vpow.pop %v3070
  %v3072 = vsel %vm1375, %v3071, 0.0
  %v3073 = vrot.slane %v3072, 4
  %v3074 = vadd.f32 %v3072, %v3073
  %v3075 = vrot.slane %v3074, 2
  %v3076 = vadd.f32 %v3074, %v3075
  %v3077 = vrot.slane %v3076, 1
  %v3078 = vadd.f32 %v3076, %v3077
  %v3079 = vrcp.pop %v3078
  %v3080 = vmul.f32 %v3071, %v3079
  %3082 = vset.pattern.permute.xlu0 0
  %3083 = vperm.xlu0 %3082, %v3080
  %v3084 = vpop.permute.xlu0 %3083
  %v3086 = vmul.f32 %v3084, %v1087
  %v3087 = vsel %vm1401, %v3086, 0.0
  %v3088 = vrot.slane %v3087, 4
  %v3089 = vadd.f32 %v3087, %v3088
  %v3090 = vrot.slane %v3089, 2
  %v3091 = vadd.f32 %v3089, %v3090
  %v3092 = vrot.slane %v3091, 1
  %v3093 = vadd.f32 %v3091, %v3092
  %v3094 = vlaneseq
  %v3095 = vshrl.u32 %v3094, 7
  %v3096 = vsub.s32 1, %v3095
  %v3097 = vrot.slane %v3044, %v3096
  %3099 = vrot.lane.b32.xlu0 %v3097, 32
  %v3100 = vpop.permute.xlu0 %3099
  %v3102 = vadd.f32 %v1269, %v3100
  %v3103 = vtanh.pop %v3102
  %v3104 = vmul.f32 %v3103, %v1369
  %v3105 = vsel %vm26, %v3104, 0.0
  %3106 = vadd.xlane.f32.xlu0 %v3105
  %v3107 = vpop.xlane.xlu0 %3106
  %v3108 = vadd.f32 %v3107, %v1272
  %v3109 = vsel %vm1424, %v3108, -inf
  %v3110 = vrot.slane %v3109, 4
  %v3111 = vmax.f32 %v3109, %v3110
  %v3112 = vrot.slane %v3111, 2
  %v3113 = vmax.f32 %v3111, %v3112
  %v3114 = vrot.slane %v3113, 1
  %v3115 = vmax.f32 %v3113, %v3114
  %v3116 = vsub.f32 %v3108, %v3115
  %v3117 = vmul.f32 %v3116, 1.442695
  %v3118 = vpow.pop %v3117
  %v3119 = vsel %vm1424, %v3118, 0.0
  %v3120 = vrot.slane %v3119, 4
  %v3121 = vadd.f32 %v3119, %v3120
  %v3122 = vrot.slane %v3121, 2
  %v3123 = vadd.f32 %v3121, %v3122
  %v3124 = vrot.slane %v3123, 1
  %v3125 = vadd.f32 %v3123, %v3124
  %v3126 = vrcp.pop %v3125
  %v3127 = vmul.f32 %v3118, %v3126
  %3129 = vset.pattern.permute.xlu0 1
  %3130 = vperm.xlu0 %3129, %v3127
  %v3131 = vpop.permute.xlu0 %3130
  %v3133 = vmul.f32 %v3131, %v1105
  %v3134 = vsel %vm1401, %v3133, 0.0
  %v3135 = vrot.slane %v3134, 4
  %v3136 = vadd.f32 %v3134, %v3135
  %v3137 = vrot.slane %v3136, 2
  %v3138 = vadd.f32 %v3136, %v3137
  %v3139 = vrot.slane %v3138, 1
  %v3140 = vadd.f32 %v3138, %v3139
  %v3141 = vsel %vm1074, %v3093, %v3140
  %3143 = vrot.lane.b32.xlu0 %v3141, 96
  %v3144 = vpop.permute.xlu0 %3143
  %v3145 = vsel %vm199, %v3144, 0
  %3147 = vmatprep.subr.mxu0 0.0
  %3148 = vmatpush1.msra.mxu0 %v1277
  %3149 = vmatprep.subr.mxu0 0.0
  %3150 = vmatpush1.msra.mxu0 %v1278
  %3151 = vmatprep.subr.mxu0 0.0
  %3152 = vmatpush1.msra.mxu0 %v1279
  %3153 = vmatprep.subr.mxu0 0.0
  %3154 = vmatpush1.msra.mxu0 %v1280
  %3155 = vmatprep.subr.mxu0 0.0
  %3156 = vmatpush1.msra.mxu0 0.0
  %3157 = vmatprep.subr.mxu0 0.0
  %3158 = vmatpush1.msra.mxu0 0.0
  %3159 = vmatprep.subr.mxu0 0.0
  %3160 = vmatpush1.msra.mxu0 0.0
  %3161 = vmatprep.subr.mxu0 0.0
  %3162 = vmatpush1.msra.mxu0 0.0
  %3163 = vmatprep.subr.mxu0 0.0
  %3164 = vmatpush1.msra.mxu0 0.0
  %3165 = vmatprep.subr.mxu0 0.0
  %3166 = vmatpush1.msra.mxu0 0.0
  %3167 = vmatprep.subr.mxu0 0.0
  %3168 = vmatpush1.msra.mxu0 0.0
  %3169 = vmatprep.subr.mxu0 0.0
  %3170 = vmatpush1.msra.mxu0 0.0
  %3171 = vmatprep.subr.mxu0 0.0
  %3172 = vmatpush1.msra.mxu0 0.0
  %3173 = vmatprep.subr.mxu0 0.0
  %3174 = vmatpush1.msra.mxu0 0.0
  %3175 = vmatprep.subr.mxu0 0.0
  %3176 = vmatpush1.msra.mxu0 0.0
  %3177 = vmatprep.subr.mxu0 0.0
  %3178 = vmatpush1.msra.mxu0 0.0
  %3179 = vmatprep.subr.mxu0 0.0
  %3180 = vmatpush1.msra.mxu0 0.0
  %3181 = vmatprep.subr.mxu0 0.0
  %3182 = vmatpush1.msra.mxu0 0.0
  %3183 = vmatprep.subr.mxu0 0.0
  %3184 = vmatpush1.msra.mxu0 0.0
  %3185 = vmatprep.subr.mxu0 0.0
  %3186 = vmatpush1.msra.mxu0 0.0
  %3187 = vmatprep.subr.mxu0 0.0
  %3188 = vmatpush1.msra.mxu0 0.0
  %3189 = vmatprep.subr.mxu0 0.0
  %3190 = vmatpush1.msra.mxu0 0.0
  %3191 = vmatprep.subr.mxu0 0.0
  %3192 = vmatpush1.msra.mxu0 0.0
  %3193 = vmatprep.subr.mxu0 0.0
  %3194 = vmatpush1.msra.mxu0 0.0
  %3195 = vmatprep.subr.mxu0 0.0
  %3196 = vmatpush1.msra.mxu0 0.0
  %3197 = vmatprep.subr.mxu0 0.0
  %3198 = vmatpush1.msra.mxu0 0.0
  %3199 = vmatprep.subr.mxu0 0.0
  %3200 = vmatpush1.msra.mxu0 0.0
  %3201 = vmatprep.subr.mxu0 0.0
  %3202 = vmatpush1.msra.mxu0 0.0
  %3203 = vmatprep.subr.mxu0 0.0
  %3204 = vmatpush1.msra.mxu0 0.0
  %3205 = vmatprep.subr.mxu0 0.0
  %3206 = vmatpush1.msra.mxu0 0.0
  %3207 = vmatprep.subr.mxu0 0.0
  %3208 = vmatpush1.msra.mxu0 0.0
  %3209 = vmatprep.subr.mxu0 0.0
  %3210 = vmatpush1.msra.mxu0 0.0
  %3211 = vmatprep.mubr.f32.mxu0 0.0
  %3212 = vmatmul.mubr.f32.gmra.mrb[0].mxu0 %v3145
  %v3213 = vpop.f32.mrb[0].mxu0
  %v3214 = vadd.f32 0.0, %v3213
  %v3215 = vpop.f32.mrb[0].mxu0
  %3216 = vdwg.mxu0
  %v3218 = vrot.slane %v3214, 4
  %v3220 = vadd.f32 %v192, %v3218
  %v3222 = vrot.slane %v3044, 4
  %v3224 = vadd.f32 %v3220, %v3222
  %v3225 = vxor.u32 %v3224, 2147483648
  %v3226 = vmul.f32 %v3225, 1.442695
  %v3227 = vpow.pop %v3226
  %v3228 = vadd.f32 %v3227, 1.0
  %v3229 = vrcp.pop %v3228
  %v3230 = vmul.f32 1.0, %v3229
  %v3231 = vadd.f32 %v3044, %v1543
  %v3233 = vrot.slane %v3231, 4
  %3234 = vrot.lane.b32.xlu0 %v3233, 64
  %v3235 = vpop.permute.xlu0 %3234
  %v3237 = vmul.f32 %v3230, %v3235
  %3239 = vrot.lane.b32.xlu0 %v3237, 64
  %v3240 = vpop.permute.xlu0 %3239
  %v3242 = vadd.f32 %v3220, %v3240
  %v3243 = vtanh.pop %v3242
  %v3244 = vsub.f32 1.0, %v3230
  %3246 = vrot.lane.b32.xlu0 %v3243, 96
  %v3247 = vpop.permute.xlu0 %3246
  %v3249 = vmul.f32 %v3244, %v3247
  %v3250 = vrot.slane %v2970, 6
  %v3252 = vmul.f32 %v3230, %v3250
  %v3253 = vadd.f32 %v3249, %v3252
  %v3255 = vrot.slane %v3253, 4
  %3256 = vrot.lane.b32.xlu0 %v3255, 96
  %v3257 = vpop.permute.xlu0 %3256
  %v3258 = vsel %vm199, %v3257, 0
  %3260 = vmatprep.subr.mxu0 0.0
  %3261 = vmatpush1.msra.mxu0 %v1273
  %3262 = vmatprep.subr.mxu0 0.0
  %3263 = vmatpush1.msra.mxu0 %v1274
  %3264 = vmatprep.subr.mxu0 0.0
  %3265 = vmatpush1.msra.mxu0 %v1275
  %3266 = vmatprep.subr.mxu0 0.0
  %3267 = vmatpush1.msra.mxu0 %v1276
  %3268 = vmatprep.subr.mxu0 0.0
  %3269 = vmatpush1.msra.mxu0 0.0
  %3270 = vmatprep.subr.mxu0 0.0
  %3271 = vmatpush1.msra.mxu0 0.0
  %3272 = vmatprep.subr.mxu0 0.0
  %3273 = vmatpush1.msra.mxu0 0.0
  %3274 = vmatprep.subr.mxu0 0.0
  %3275 = vmatpush1.msra.mxu0 0.0
  %3276 = vmatprep.subr.mxu0 0.0
  %3277 = vmatpush1.msra.mxu0 0.0
  %3278 = vmatprep.subr.mxu0 0.0
  %3279 = vmatpush1.msra.mxu0 0.0
  %3280 = vmatprep.subr.mxu0 0.0
  %3281 = vmatpush1.msra.mxu0 0.0
  %3282 = vmatprep.subr.mxu0 0.0
  %3283 = vmatpush1.msra.mxu0 0.0
  %3284 = vmatprep.subr.mxu0 0.0
  %3285 = vmatpush1.msra.mxu0 0.0
  %3286 = vmatprep.subr.mxu0 0.0
  %3287 = vmatpush1.msra.mxu0 0.0
  %3288 = vmatprep.subr.mxu0 0.0
  %3289 = vmatpush1.msra.mxu0 0.0
  %3290 = vmatprep.subr.mxu0 0.0
  %3291 = vmatpush1.msra.mxu0 0.0
  %3292 = vmatprep.subr.mxu0 0.0
  %3293 = vmatpush1.msra.mxu0 0.0
  %3294 = vmatprep.subr.mxu0 0.0
  %3295 = vmatpush1.msra.mxu0 0.0
  %3296 = vmatprep.subr.mxu0 0.0
  %3297 = vmatpush1.msra.mxu0 0.0
  %3298 = vmatprep.subr.mxu0 0.0
  %3299 = vmatpush1.msra.mxu0 0.0
  %3300 = vmatprep.subr.mxu0 0.0
  %3301 = vmatpush1.msra.mxu0 0.0
  %3302 = vmatprep.subr.mxu0 0.0
  %3303 = vmatpush1.msra.mxu0 0.0
  %3304 = vmatprep.subr.mxu0 0.0
  %3305 = vmatpush1.msra.mxu0 0.0
  %3306 = vmatprep.subr.mxu0 0.0
  %3307 = vmatpush1.msra.mxu0 0.0
  %3308 = vmatprep.subr.mxu0 0.0
  %3309 = vmatpush1.msra.mxu0 0.0
  %3310 = vmatprep.subr.mxu0 0.0
  %3311 = vmatpush1.msra.mxu0 0.0
  %3312 = vmatprep.subr.mxu0 0.0
  %3313 = vmatpush1.msra.mxu0 0.0
  %3314 = vmatprep.subr.mxu0 0.0
  %3315 = vmatpush1.msra.mxu0 0.0
  %3316 = vmatprep.subr.mxu0 0.0
  %3317 = vmatpush1.msra.mxu0 0.0
  %3318 = vmatprep.subr.mxu0 0.0
  %3319 = vmatpush1.msra.mxu0 0.0
  %3320 = vmatprep.subr.mxu0 0.0
  %3321 = vmatpush1.msra.mxu0 0.0
  %3322 = vmatprep.subr.mxu0 0.0
  %3323 = vmatpush1.msra.mxu0 0.0
  %3324 = vmatprep.mubr.f32.mxu0 0.0
  %3325 = vmatmul.mubr.f32.gmra.mrb[0].mxu0 %v3258
  %v3326 = vpop.f32.mrb[0].mxu0
  %v3327 = vadd.f32 0.0, %v3326
  %v3328 = vpop.f32.mrb[0].mxu0
  %3329 = vdwg.mxu0
  %v3330 = vlaneseq
  %v3331 = vshrl.u32 %v3330, 7
  %v3332 = vsub.s32 0, %v3331
  %v3333 = vrot.slane %v3327, %v3332
  %3335 = vrot.lane.b32.xlu0 %v3333, 32
  %v3336 = vpop.permute.xlu0 %3335
  %v3338 = vadd.f32 %v1194, %v3336
  %v3339 = vtanh.pop %v3338
  %v3340 = vmul.f32 %v3339, %v1369
  %v3341 = vsel %vm26, %v3340, 0.0
  %3342 = vadd.xlane.f32.xlu0 %v3341
  %v3343 = vpop.xlane.xlu0 %3342
  %v3344 = vadd.f32 %v3343, %v1272
  %v3345 = vsel %vm1375, %v3344, -inf
  %v3346 = vrot.slane %v3345, 4
  %v3347 = vmax.f32 %v3345, %v3346
  %v3348 = vrot.slane %v3347, 2
  %v3349 = vmax.f32 %v3347, %v3348
  %v3350 = vrot.slane %v3349, 1
  %v3351 = vmax.f32 %v3349, %v3350
  %v3352 = vsub.f32 %v3344, %v3351
  %v3353 = vmul.f32 %v3352, 1.442695
  %v3354 = vpow.pop %v3353
  %v3355 = vsel %vm1375, %v3354, 0.0
  %v3356 = vrot.slane %v3355, 4
  %v3357 = vadd.f32 %v3355, %v3356
  %v3358 = vrot.slane %v3357, 2
  %v3359 = vadd.f32 %v3357, %v3358
  %v3360 = vrot.slane %v3359, 1
  %v3361 = vadd.f32 %v3359, %v3360
  %v3362 = vrcp.pop %v3361
  %v3363 = vmul.f32 %v3354, %v3362
  %3365 = vset.pattern.permute.xlu0 0
  %3366 = vperm.xlu0 %3365, %v3363
  %v3367 = vpop.permute.xlu0 %3366
  %v3369 = vmul.f32 %v3367, %v1087
  %v3370 = vsel %vm1401, %v3369, 0.0
  %v3371 = vrot.slane %v3370, 4
  %v3372 = vadd.f32 %v3370, %v3371
  %v3373 = vrot.slane %v3372, 2
  %v3374 = vadd.f32 %v3372, %v3373
  %v3375 = vrot.slane %v3374, 1
  %v3376 = vadd.f32 %v3374, %v3375
  %v3377 = vlaneseq
  %v3378 = vshrl.u32 %v3377, 7
  %v3379 = vsub.s32 1, %v3378
  %v3380 = vrot.slane %v3327, %v3379
  %3382 = vrot.lane.b32.xlu0 %v3380, 32
  %v3383 = vpop.permute.xlu0 %3382
  %v3385 = vadd.f32 %v1269, %v3383
  %v3386 = vtanh.pop %v3385
  %v3387 = vmul.f32 %v3386, %v1369
  %v3388 = vsel %vm26, %v3387, 0.0
  %3389 = vadd.xlane.f32.xlu0 %v3388
  %v3390 = vpop.xlane.xlu0 %3389
  %v3391 = vadd.f32 %v3390, %v1272
  %v3392 = vsel %vm1424, %v3391, -inf
  %v3393 = vrot.slane %v3392, 4
  %v3394 = vmax.f32 %v3392, %v3393
  %v3395 = vrot.slane %v3394, 2
  %v3396 = vmax.f32 %v3394, %v3395
  %v3397 = vrot.slane %v3396, 1
  %v3398 = vmax.f32 %v3396, %v3397
  %v3399 = vsub.f32 %v3391, %v3398
  %v3400 = vmul.f32 %v3399, 1.442695
  %v3401 = vpow.pop %v3400
  %v3402 = vsel %vm1424, %v3401, 0.0
  %v3403 = vrot.slane %v3402, 4
  %v3404 = vadd.f32 %v3402, %v3403
  %v3405 = vrot.slane %v3404, 2
  %v3406 = vadd.f32 %v3404, %v3405
  %v3407 = vrot.slane %v3406, 1
  %v3408 = vadd.f32 %v3406, %v3407
  %v3409 = vrcp.pop %v3408
  %v3410 = vmul.f32 %v3401, %v3409
  %3412 = vset.pattern.permute.xlu0 1
  %3413 = vperm.xlu0 %3412, %v3410
  %v3414 = vpop.permute.xlu0 %3413
  %v3416 = vmul.f32 %v3414, %v1105
  %v3417 = vsel %vm1401, %v3416, 0.0
  %v3418 = vrot.slane %v3417, 4
  %v3419 = vadd.f32 %v3417, %v3418
  %v3420 = vrot.slane %v3419, 2
  %v3421 = vadd.f32 %v3419, %v3420
  %v3422 = vrot.slane %v3421, 1
  %v3423 = vadd.f32 %v3421, %v3422
  %v3424 = vsel %vm1074, %v3376, %v3423
  %3426 = vrot.lane.b32.xlu0 %v3424, 96
  %v3427 = vpop.permute.xlu0 %3426
  %v3428 = vsel %vm199, %v3427, 0
  %3430 = vmatprep.subr.mxu0 0.0
  %3431 = vmatpush1.msra.mxu0 %v1277
  %3432 = vmatprep.subr.mxu0 0.0
  %3433 = vmatpush1.msra.mxu0 %v1278
  %3434 = vmatprep.subr.mxu0 0.0
  %3435 = vmatpush1.msra.mxu0 %v1279
  %3436 = vmatprep.subr.mxu0 0.0
  %3437 = vmatpush1.msra.mxu0 %v1280
  %3438 = vmatprep.subr.mxu0 0.0
  %3439 = vmatpush1.msra.mxu0 0.0
  %3440 = vmatprep.subr.mxu0 0.0
  %3441 = vmatpush1.msra.mxu0 0.0
  %3442 = vmatprep.subr.mxu0 0.0
  %3443 = vmatpush1.msra.mxu0 0.0
  %3444 = vmatprep.subr.mxu0 0.0
  %3445 = vmatpush1.msra.mxu0 0.0
  %3446 = vmatprep.subr.mxu0 0.0
  %3447 = vmatpush1.msra.mxu0 0.0
  %3448 = vmatprep.subr.mxu0 0.0
  %3449 = vmatpush1.msra.mxu0 0.0
  %3450 = vmatprep.subr.mxu0 0.0
  %3451 = vmatpush1.msra.mxu0 0.0
  %3452 = vmatprep.subr.mxu0 0.0
  %3453 = vmatpush1.msra.mxu0 0.0
  %3454 = vmatprep.subr.mxu0 0.0
  %3455 = vmatpush1.msra.mxu0 0.0
  %3456 = vmatprep.subr.mxu0 0.0
  %3457 = vmatpush1.msra.mxu0 0.0
  %3458 = vmatprep.subr.mxu0 0.0
  %3459 = vmatpush1.msra.mxu0 0.0
  %3460 = vmatprep.subr.mxu0 0.0
  %3461 = vmatpush1.msra.mxu0 0.0
  %3462 = vmatprep.subr.mxu0 0.0
  %3463 = vmatpush1.msra.mxu0 0.0
  %3464 = vmatprep.subr.mxu0 0.0
  %3465 = vmatpush1.msra.mxu0 0.0
  %3466 = vmatprep.subr.mxu0 0.0
  %3467 = vmatpush1.msra.mxu0 0.0
  %3468 = vmatprep.subr.mxu0 0.0
  %3469 = vmatpush1.msra.mxu0 0.0
  %3470 = vmatprep.subr.mxu0 0.0
  %3471 = vmatpush1.msra.mxu0 0.0
  %3472 = vmatprep.subr.mxu0 0.0
  %3473 = vmatpush1.msra.mxu0 0.0
  %3474 = vmatprep.subr.mxu0 0.0
  %3475 = vmatpush1.msra.mxu0 0.0
  %3476 = vmatprep.subr.mxu0 0.0
  %3477 = vmatpush1.msra.mxu0 0.0
  %3478 = vmatprep.subr.mxu0 0.0
  %3479 = vmatpush1.msra.mxu0 0.0
  %3480 = vmatprep.subr.mxu0 0.0
  %3481 = vmatpush1.msra.mxu0 0.0
  %3482 = vmatprep.subr.mxu0 0.0
  %3483 = vmatpush1.msra.mxu0 0.0
  %3484 = vmatprep.subr.mxu0 0.0
  %3485 = vmatpush1.msra.mxu0 0.0
  %3486 = vmatprep.subr.mxu0 0.0
  %3487 = vmatpush1.msra.mxu0 0.0
  %3488 = vmatprep.subr.mxu0 0.0
  %3489 = vmatpush1.msra.mxu0 0.0
  %3490 = vmatprep.subr.mxu0 0.0
  %3491 = vmatpush1.msra.mxu0 0.0
  %3492 = vmatprep.subr.mxu0 0.0
  %3493 = vmatpush1.msra.mxu0 0.0
  %3494 = vmatprep.mubr.f32.mxu0 0.0
  %3495 = vmatmul.mubr.f32.gmra.mrb[0].mxu0 %v3428
  %v3496 = vpop.f32.mrb[0].mxu0
  %v3497 = vadd.f32 0.0, %v3496
  %v3498 = vpop.f32.mrb[0].mxu0
  %3499 = vdwg.mxu0
  %v3501 = vrot.slane %v3497, 2
  %v3503 = vadd.f32 %v192, %v3501
  %v3505 = vrot.slane %v3327, 2
  %v3507 = vadd.f32 %v3503, %v3505
  %v3508 = vxor.u32 %v3507, 2147483648
  %v3509 = vmul.f32 %v3508, 1.442695
  %v3510 = vpow.pop %v3509
  %v3511 = vadd.f32 %v3510, 1.0
  %v3512 = vrcp.pop %v3511
  %v3513 = vmul.f32 1.0, %v3512
  %v3514 = vadd.f32 %v3327, %v1543
  %v3516 = vrot.slane %v3514, 2
  %3517 = vrot.lane.b32.xlu0 %v3516, 64
  %v3518 = vpop.permute.xlu0 %3517
  %v3520 = vmul.f32 %v3513, %v3518
  %3522 = vrot.lane.b32.xlu0 %v3520, 64
  %v3523 = vpop.permute.xlu0 %3522
  %v3525 = vadd.f32 %v3503, %v3523
  %v3526 = vtanh.pop %v3525
  %v3527 = vsub.f32 1.0, %v3513
  %3529 = vrot.lane.b32.xlu0 %v3526, 96
  %v3530 = vpop.permute.xlu0 %3529
  %v3532 = vmul.f32 %v3527, %v3530
  %v3533 = vrot.slane %v3253, 6
  %v3535 = vmul.f32 %v3513, %v3533
  %v3536 = vadd.f32 %v3532, %v3535
  %v3537 = vld [vmem:[%s2 + $0x60] sm:$0xff]
  %v3538 = vld [vmem:[%s2 + $0x68] sm:$0xff]
  %v3539 = vld [vmem:[%s2 + $0x70] sm:$0xff]
  %v3540 = vld [vmem:[%s2 + $0x78] sm:$0xff]
  %v3541 = vld [vmem:[%s2 + $0xa2] sm:$0x1]
  %v3542 = vsel %vm1076, %v1565, %v1847
  %v3543 = vsel %vm1080, %v3542, %v2130
  %v3544 = vsel %vm1084, %v3543, %v2413
  %v3545 = vsel %vm1076, %v2688, %v2970
  %v3546 = vsel %vm1080, %v3545, %v3253
  %v3547 = vsel %vm1084, %v3546, %v3536
  %v3548 = vlaneseq
  %v3549 = vshrl.u32 %v3548, 7
  %v3550 = vsub.s32 0, %v3549
  %v3551 = vrot.slane %v3541, %v3550
  %3554 = vrot.lane.b32.xlu0 %v3544, 96
  %v3555 = vpop.permute.xlu0 %3554
  %3556 = vrot.lane.b32.xlu0 %v3547, 96
  %v3557 = vpop.permute.xlu0 %3556
  %v3558 = vsel %vm199, %v3555, 0
  %v3560 = vsel %vm199, %v3557, 0
  %3562 = vmatprep.subr.mxu0 0.0
  %3563 = vmatpush1.msra.mxu0 %v3537
  %3564 = vmatprep.subr.mxu0 0.0
  %3565 = vmatpush1.msra.mxu0 %v3538
  %3566 = vmatprep.subr.mxu0 0.0
  %3567 = vmatpush1.msra.mxu0 %v3539
  %3568 = vmatprep.subr.mxu0 0.0
  %3569 = vmatpush1.msra.mxu0 %v3540
  %3570 = vmatprep.subr.mxu0 0.0
  %3571 = vmatpush1.msra.mxu0 0.0
  %3572 = vmatprep.subr.mxu0 0.0
  %3573 = vmatpush1.msra.mxu0 0.0
  %3574 = vmatprep.subr.mxu0 0.0
  %3575 = vmatpush1.msra.mxu0 0.0
  %3576 = vmatprep.subr.mxu0 0.0
  %3577 = vmatpush1.msra.mxu0 0.0
  %3578 = vmatprep.subr.mxu0 0.0
  %3579 = vmatpush1.msra.mxu0 0.0
  %3580 = vmatprep.subr.mxu0 0.0
  %3581 = vmatpush1.msra.mxu0 0.0
  %3582 = vmatprep.subr.mxu0 0.0
  %3583 = vmatpush1.msra.mxu0 0.0
  %3584 = vmatprep.subr.mxu0 0.0
  %3585 = vmatpush1.msra.mxu0 0.0
  %3586 = vmatprep.subr.mxu0 0.0
  %3587 = vmatpush1.msra.mxu0 0.0
  %3588 = vmatprep.subr.mxu0 0.0
  %3589 = vmatpush1.msra.mxu0 0.0
  %3590 = vmatprep.subr.mxu0 0.0
  %3591 = vmatpush1.msra.mxu0 0.0
  %3592 = vmatprep.subr.mxu0 0.0
  %3593 = vmatpush1.msra.mxu0 0.0
  %3594 = vmatprep.subr.mxu0 0.0
  %3595 = vmatpush1.msra.mxu0 0.0
  %3596 = vmatprep.subr.mxu0 0.0
  %3597 = vmatpush1.msra.mxu0 0.0
  %3598 = vmatprep.subr.mxu0 0.0
  %3599 = vmatpush1.msra.mxu0 0.0
  %3600 = vmatprep.subr.mxu0 0.0
  %3601 = vmatpush1.msra.mxu0 0.0
  %3602 = vmatprep.subr.mxu0 0.0
  %3603 = vmatpush1.msra.mxu0 0.0
  %3604 = vmatprep.subr.mxu0 0.0
  %3605 = vmatpush1.msra.mxu0 0.0
  %3606 = vmatprep.subr.mxu0 0.0
  %3607 = vmatpush1.msra.mxu0 0.0
  %3608 = vmatprep.subr.mxu0 0.0
  %3609 = vmatpush1.msra.mxu0 0.0
  %3610 = vmatprep.subr.mxu0 0.0
  %3611 = vmatpush1.msra.mxu0 0.0
  %3612 = vmatprep.subr.mxu0 0.0
  %3613 = vmatpush1.msra.mxu0 0.0
  %3614 = vmatprep.subr.mxu0 0.0
  %3615 = vmatpush1.msra.mxu0 0.0
  %3616 = vmatprep.subr.mxu0 0.0
  %3617 = vmatpush1.msra.mxu0 0.0
  %3618 = vmatprep.subr.mxu0 0.0
  %3619 = vmatpush1.msra.mxu0 0.0
  %3620 = vmatprep.subr.mxu0 0.0
  %3621 = vmatpush1.msra.mxu0 0.0
  %3622 = vmatprep.subr.mxu0 0.0
  %3623 = vmatpush1.msra.mxu0 0.0
  %3624 = vmatprep.subr.mxu0 0.0
  %3625 = vmatpush1.msra.mxu0 0.0
  %3626 = vmatprep.mubr.f32.mxu0 0.0
  %3627 = vmatmul.mubr.f32.gmra.mrb[0].mxu0 %v3558
  %v3628 = vpop.f32.mrb[0].mxu0
  %v3629 = vadd.f32 %v3551, %v3628
  %v3630 = vpop.f32.mrb[0].mxu0
  %3631 = vmatprep.mubr.f32.mxu0 0.0
  %3632 = vmatmul.mubr.f32.gmra.mrb[0].mxu0 %v3560
  %v3633 = vpop.f32.mrb[0].mxu0
  %v3634 = vadd.f32 %v3551, %v3633
  %v3635 = vpop.f32.mrb[0].mxu0
  %3636 = vdwg.mxu0
  %3637 = vst [vmem:[%s3] sm:$0xff] %v3629
  %3638 = vst [vmem:[%s3 + $0x8] sm:$0xff] %v3634
  // Predicated region
  $region14: #{seq2seq_forward.1} parent=0 // pred_check
    _
  $region15: #{seq2seq_forward.1} parent=0 // pred_check_branch
    %3640 = sbr.rel (0) target = $region17
  $region16: #{seq2seq_forward.1} parent=0 // pred_region
    _
  $region17: #{seq2seq_forward.1} parent=0 // pred_fallthru
    _
  // Predicated region
  $region18: #{seq2seq_forward.1} parent=0 // pred_check
    _
  $region19: #{seq2seq_forward.1} parent=0 // pred_check_branch
    %3642 = sbr.rel (0) target = $region21
  $region20: #{seq2seq_forward.1} parent=0 // pred_region
    _
  $region21: #{seq2seq_forward.1} parent=0 // pred_fallthru
    _

</llo_original>
